<compile_context>
chip_gen: v6e
topology: v6e:2x2x1
jax: 0.10.0
libtpu: 0.0.40
codegen_flags: <defaults>
</compile_context>

<pallas_src>
import functools

import jax
import jax.numpy as jnp
from jax.experimental import pallas as pl
from jax.experimental.pallas import tpu as pltpu


def _round_up(x, m):
    return (x + m - 1) // m * m


def _vmem_budget_bytes():
    """Generation-aware VMEM budget (v7x: 64 MiB/core, v5e/v6e: 128 MiB)."""
    try:
        cap = int(pltpu.get_tpu_info().vmem_capacity_bytes)
    except Exception:          # query unavailable -> assume the smallest (v7x)
        cap = 64 * 1024 * 1024
    return min(cap * 3 // 4, 112 * 1024 * 1024)


def _pick_row_block(H, Wp, max_rows):
    """Largest th dividing H with th*Wp <= max_rows (prefer >= 2 row tiles)."""
    best = 1
    for th in range(1, H + 1):
        if H % th == 0 and th * Wp <= max_rows and (th < H or H == 1):
            best = th
    return best


def _pick_chunk_rows(th, Wp, target=512):
    """Largest chunk (in image rows) dividing th with chunk*Wp <= ~target."""
    best = 1
    for c in range(1, th + 1):
        if th % c == 0 and c * Wp <= max(target, Wp):
            best = c
    return best


def _pick_bn_tile(total, cap):
    """Largest multiple-of-8 divisor of `total` not exceeding cap."""
    cap = min(cap, total)
    if total >= 16:
        cap = min(cap, total // 2)          # prefer >= 2 tiles
    cap = max(8, cap - cap % 8)
    for t in range(cap, 7, -8):
        if total % t == 0:
            return t
    return 8                                # total is always a multiple of 8


# ----------------------------------------------------------------------------
# Kernel 1: 3x3 conv (implicit im2col, 9 shifted-slab bf16 MXU matmuls) + bias
#           + partial BatchNorm statistics (sum, sum of squares).
# Grid: (N, R).  The input stays in HBM; a halo'd row-tile slab is fetched per
# grid step with manual double-buffered DMA.
# ----------------------------------------------------------------------------
def conv_bias_stats_kernel(xp_hbm, w_ref, b_ref, mask_ref,
                           o_ref, sum_ref, sq_ref,
                           xbuf, sem,
                           *, wp, rows, crows, nchunks, halo_rows):
    n = pl.program_id(0)
    r = pl.program_id(1)
    num_r = pl.num_programs(1)
    slot = r % 2

    def start_fetch(tile_idx, s):
        pltpu.make_async_copy(
            xp_hbm.at[n, pl.ds(tile_idx * rows, halo_rows), :],
            xbuf.at[s],
            sem.at[s],
        ).start()

    # Prime the pipeline with this image's first halo'd row tile.
    @pl.when(r == 0)
    def _prime():
        start_fetch(0, 0)

    # Wait for the DMA carrying this step's halo'd input slab.
    pltpu.make_async_copy(
        xp_hbm.at[n, pl.ds(r * rows, halo_rows), :],
        xbuf.at[slot],
        sem.at[slot],
    ).wait()

    # Prefetch the next row tile of the same image; overlaps with the matmuls.
    @pl.when(r + 1 < num_r)
    def _prefetch():
        start_fetch(r + 1, 1 - slot)

    cout_p = o_ref.shape[-1]

    @pl.when(r == 0)
    def _init_stats():
        sum_ref[...] = jnp.zeros_like(sum_ref)
        sq_ref[...] = jnp.zeros_like(sq_ref)

    bias = b_ref[...]                      # (1, Cout_p) f32
    mask = mask_ref[...]                   # (crows, 1) f32, valid-column mask
    s_tot = jnp.zeros((1, cout_p), jnp.float32)
    q_tot = jnp.zeros((1, cout_p), jnp.float32)

    # Row-chunked implicit im2col: 9 shifted-slab MXU matmuls per chunk; the
    # chunk's f32 accumulator stays hot across all taps.  All tap offsets are
    # static (kw=1,2 remain sublane-unaligned but are compile-time constant).
    for c in range(nchunks):
        row0 = c * crows                                       # static
        acc = jnp.zeros((crows, cout_p), jnp.float32)
        for kh in range(3):
            for kw in range(3):
                off = row0 + kh * wp + kw                      # static offset
                x_t = xbuf[slot, pl.ds(off, crows), :]         # (crows, Cin_p) bf16
                acc = acc + jnp.dot(x_t, w_ref[kh * 3 + kw],
                                    preferred_element_type=jnp.float32)
        y = acc + bias                                         # f32
        o_ref[pl.ds(row0, crows), :] = y.astype(o_ref.dtype)   # bf16 writeback
        ym = y * mask                                          # drop pad cols
        s_tot = s_tot + jnp.sum(ym, axis=0, keepdims=True)
        q_tot = q_tot + jnp.sum(y * ym, axis=0, keepdims=True)

    sum_ref[...] += s_tot
    sq_ref[...] += q_tot


# ----------------------------------------------------------------------------
# Kernel 2: BatchNorm apply (precomputed scale/shift) + ReLU, lane-dense tiles.
# ----------------------------------------------------------------------------
def bn_relu_kernel(y_ref, scale_ref, shift_ref, o_ref):
    y = y_ref[...].astype(jnp.float32)
    o_ref[...] = jnp.maximum(y * scale_ref[...] + shift_ref[...],
                             0.0).astype(o_ref.dtype)


# ----------------------------------------------------------------------------
# Wrapper: layout glue (transpose / zero-pad / flatten) + the two pallas_calls.
# ----------------------------------------------------------------------------
def vgg_conv_forward(x_nchw, w_oihw, conv_bias, bn_gamma, bn_beta,
                     eps=1e-5, out_dtype=jnp.float32):
    N, Cin, H, W = x_nchw.shape
    Cout = w_oihw.shape[0]
    K = 3

    # TODO(synk): special-case the VGG first layer (Cin=3) by packing the 27
    # (kh,kw,cin) products into one small contraction dim instead of padding
    # channels to 128.
    Cin_p = _round_up(Cin, 128)              # lane-dense contraction dim
    Cout_p = _round_up(Cout, 128)            # lane-dense output dim
    Wp = _round_up(W + 2, 8)                 # conv width pad + sublane align
    Hp_ext = H + 3                           # top pad 1, bottom pad 1, +1 slack

    budget = _vmem_budget_bytes()
    # Channel-aware cap on the flattened row-tile size (halo'd bf16 input
    # double-buffer + bf16 output block + f32 accumulator must fit the budget).
    per_row = 8 * (Cin_p + Cout_p)
    fixed = 36 * Cin_p * Cout_p + (4 << 20)
    max_rows = int(min(2048, max(256, (budget - fixed) // per_row)))

    th = _pick_row_block(H, Wp, max_rows)    # output image rows per tile
    R = H // th
    rows = th * Wp                           # flat output rows per grid step
    cr = _pick_chunk_rows(th, Wp)            # in-kernel accumulation chunk
    crows = cr * Wp
    nchunks = th // cr
    halo_rows = rows + 2 * Wp + 8            # +2 image-row halo, 8-aligned

    # --- layout glue (XLA): NCHW -> NHWC, zero pad, flatten, cast bf16 -------
    x_nhwc = jnp.transpose(x_nchw, (0, 2, 3, 1)).astype(jnp.bfloat16)
    xp = jnp.pad(x_nhwc, ((0, 0), (1, 2), (1, Wp - W - 1), (0, Cin_p - Cin)))
    xp_flat = xp.reshape(N, Hp_ext * Wp, Cin_p)

    w_t = jnp.transpose(w_oihw, (2, 3, 1, 0)).astype(jnp.bfloat16)  # (3,3,Ci,Co)
    w_taps = jnp.pad(w_t, ((0, 0), (0, 0), (0, Cin_p - Cin),
                           (0, Cout_p - Cout))).reshape(K * K, Cin_p, Cout_p)
    b_row = jnp.pad(conv_bias.astype(jnp.float32),
                    (0, Cout_p - Cout)).reshape(1, Cout_p)

    col = jnp.arange(crows, dtype=jnp.int32) % Wp
    col_mask = (col < W).astype(jnp.float32).reshape(crows, 1)

    flops = 2 * N * (H * Wp) * (K * K) * Cin_p * Cout_p
    bytes_accessed = (2 * N * Hp_ext * Wp * Cin_p      # bf16 input
                      + 2 * K * K * Cin_p * Cout_p     # bf16 weights
                      + 2 * N * H * Wp * Cout_p        # bf16 conv output
                      + 8 * N * Cout_p)                # f32 partial stats

    kernel1 = functools.partial(conv_bias_stats_kernel, wp=Wp, rows=rows,
                                crows=crows, nchunks=nchunks,
                                halo_rows=halo_rows)

    # --- Pallas call 1: conv + bias + partial BN stats ------------------------
    conv_wide, part_sum, part_sq = pl.pallas_call(
        kernel1,
        out_shape=(
            jax.ShapeDtypeStruct((N, H * Wp, Cout_p), jnp.bfloat16),
            jax.ShapeDtypeStruct((N, 1, Cout_p), jnp.float32),
            jax.ShapeDtypeStruct((N, 1, Cout_p), jnp.float32),
        ),
        grid_spec=pltpu.PrefetchScalarGridSpec(
            num_scalar_prefetch=0,
            grid=(N, R),
            in_specs=[
                # raw HBM ref; halo'd row tiles fetched via manual DMA
                pl.BlockSpec(memory_space=pl.ANY),
                # TODO(synk): pipeline_mode=pl.Buffered(1) on these invariant
                # operands would reclaim their second buffer on v7x.
                pl.BlockSpec((K * K, Cin_p, Cout_p), lambda n, r: (0, 0, 0)),
                pl.BlockSpec((1, Cout_p), lambda n, r: (0, 0)),
                pl.BlockSpec((crows, 1), lambda n, r: (0, 0)),
            ],
            out_specs=[
                pl.BlockSpec((None, rows, Cout_p), lambda n, r: (n, r, 0)),
                pl.BlockSpec((None, 1, Cout_p), lambda n, r: (n, 0, 0)),
                pl.BlockSpec((None, 1, Cout_p), lambda n, r: (n, 0, 0)),
            ],
            scratch_shapes=[
                pltpu.VMEM((2, halo_rows, Cin_p), jnp.bfloat16),
                pltpu.SemaphoreType.DMA((2,)),
            ],
        ),
        compiler_params=pltpu.CompilerParams(
            dimension_semantics=("parallel", "arbitrary"),
            vmem_limit_bytes=budget),
        cost_estimate=pl.CostEstimate(flops=flops, transcendentals=0,
                                      bytes_accessed=bytes_accessed),
    )(xp_flat, w_taps, b_row, col_mask)
    # TODO(synk): when N == 1 on v7x, also split the row axis as a second
    # "parallel" dim (with per-core partial stats) so both TensorCores work.

    # --- combine per-image partial stats, fold BN into scale/shift (XLA) -----
    count = float(N * H * W)
    mean = jnp.sum(part_sum, axis=0) / count                  # (1, Cout_p)
    ex2 = jnp.sum(part_sq, axis=0) / count
    # TODO(synk): E[x^2]-E[x]^2 in f32 can lose precision for activations with
    # large means; switch to a centered/Welford combine if needed.
    var = jnp.maximum(ex2 - mean * mean, 0.0)                 # biased variance

    gamma_p = jnp.pad(bn_gamma.astype(jnp.float32), (0, Cout_p - Cout),
                      constant_values=1.0).reshape(1, Cout_p)
    beta_p = jnp.pad(bn_beta.astype(jnp.float32),
                     (0, Cout_p - Cout)).reshape(1, Cout_p)
    scale = gamma_p * jax.lax.rsqrt(var + eps)
    shift = beta_p - mean * scale

    # --- Pallas call 2: lane-dense scale + shift + ReLU -----------------------
    total = N * H * Wp
    bn_cap = 2048 if budget >= 80 * 1024 * 1024 else 1024
    tm = _pick_bn_tile(total, bn_cap)
    y_flat = conv_wide.reshape(total, Cout_p)

    bn_out = pl.pallas_call(
        bn_relu_kernel,
        out_shape=jax.ShapeDtypeStruct((total, Cout_p), out_dtype),
        grid_spec=pltpu.PrefetchScalarGridSpec(
            num_scalar_prefetch=0,
            grid=(total // tm,),
            in_specs=[
                pl.BlockSpec((tm, Cout_p), lambda i: (i, 0)),
                pl.BlockSpec((1, Cout_p), lambda i: (0, 0)),
                pl.BlockSpec((1, Cout_p), lambda i: (0, 0)),
            ],
            out_specs=pl.BlockSpec((tm, Cout_p), lambda i: (i, 0)),
        ),
        compiler_params=pltpu.CompilerParams(
            dimension_semantics=("parallel",),
            vmem_limit_bytes=budget),
    )(y_flat, scale, shift)

    # --- strip width/channel padding, back to PyTorch NCHW --------------------
    # TODO(synk): when chaining VGG layers, keep the padded NHWC layout between
    # layers (and bf16 out_dtype) and convert to NCHW only at network edges.
    out = bn_out.reshape(N, H, Wp, Cout_p)[:, :, :W, :Cout]
    return jnp.transpose(out, (0, 3, 1, 2))


# ----------------------------------------------------------------------------
# Pure-JAX reference (matches PyTorch VGG_conv forward in train mode).
# ----------------------------------------------------------------------------
def vgg_conv_reference(x_nchw, w_oihw, conv_bias, bn_gamma, bn_beta, eps=1e-5):
    y = jax.lax.conv_general_dilated(
        x_nchw, w_oihw, window_strides=(1, 1), padding=((1, 1), (1, 1)),
        dimension_numbers=("NCHW", "OIHW", "NCHW"))
    y = y + conv_bias.reshape(1, -1, 1, 1)
    mean = jnp.mean(y, axis=(0, 2, 3), keepdims=True)
    var = jnp.mean((y - mean) ** 2, axis=(0, 2, 3), keepdims=True)
    yn = (y - mean) / jnp.sqrt(var + eps)
    yn = yn * bn_gamma.reshape(1, -1, 1, 1) + bn_beta.reshape(1, -1, 1, 1)
    return jnp.maximum(yn, 0.0)


if __name__ == "__main__":
    N, Cin, H, W = 2, 4, 16, 16
    Cout = 8

    key = jax.random.PRNGKey(0)
    kx, kw_, kb, kg, kbeta = jax.random.split(key, 5)

    x = jax.random.normal(kx, (N, Cin, H, W), dtype=jnp.float32)
    conv_w = jax.random.normal(kw_, (Cout, Cin, 3, 3), dtype=jnp.float32) * 0.1
    conv_b = jax.random.normal(kb, (Cout,), dtype=jnp.float32) * 0.1
    bn_gamma = 1.0 + 0.1 * jax.random.normal(kg, (Cout,), dtype=jnp.float32)
    bn_beta = 0.1 * jax.random.normal(kbeta, (Cout,), dtype=jnp.float32)

    out = vgg_conv_forward(x, conv_w, conv_b, bn_gamma, bn_beta)
    out = jax.block_until_ready(out)

    ref = vgg_conv_reference(x, conv_w, conv_b, bn_gamma, bn_beta)
    assert out.shape == (N, Cout, H, W), out.shape
    # bf16 MXU operands / bf16 conv intermediate set the achievable tolerance.
    assert jnp.allclose(out, ref, atol=5e-2, rtol=5e-2), \
        float(jnp.max(jnp.abs(out - ref)))

    print("KERNEL_OK")
</pallas_src>

<mosaic_0001>
module attributes {stable_mosaic.version = 11 : i64} {
  func.func @conv_bias_stats_kernel(%arg0: i32, %arg1: i32, %arg2: memref<2x456x128xbf16, #tpu.memory_space<any>>, %arg3: memref<9x128x128xbf16, #tpu.memory_space<vmem>>, %arg4: memref<1x128xf32, #tpu.memory_space<vmem>>, %arg5: memref<192x1xf32, #tpu.memory_space<vmem>>, %arg6: memref<1x192x128xbf16, #tpu.memory_space<vmem>>, %arg7: memref<1x1x128xf32, #tpu.memory_space<vmem>>, %arg8: memref<1x1x128xf32, #tpu.memory_space<vmem>>, %arg9: memref<2x248x128xbf16, #tpu.memory_space<vmem>>, %arg10: memref<2x!tpu.dma_semaphore, #tpu.memory_space<semaphore_mem>>) attributes {dimension_semantics = [#tpu.dimension_semantics<parallel>, #tpu.dimension_semantics<arbitrary>], iteration_bounds = array<i64: 2, 2>, scalar_prefetch = 0 : i64, scratch_operands = 2 : i64, tpu.core_type = #tpu.core_type<tc>, window_params = [{}, {pipeline_mode = #tpu.pipeline_mode<synchronous>, transform_indices = @transform_1, window_bounds = array<i64: 9, 128, 128>}, {pipeline_mode = #tpu.pipeline_mode<synchronous>, transform_indices = @transform_2, window_bounds = array<i64: 1, 128>}, {pipeline_mode = #tpu.pipeline_mode<synchronous>, transform_indices = @transform_3, window_bounds = array<i64: 192, 1>}, {transform_indices = @transform_4, window_bounds = array<i64: 1, 192, 128>}, {transform_indices = @transform_5, window_bounds = array<i64: 1, 1, 128>}, {transform_indices = @transform_6, window_bounds = array<i64: 1, 1, 128>}]} {
    %c2_i32 = arith.constant 2 : i32
    %c0_i32 = arith.constant 0 : i32
    %0 = arith.cmpi eq, %c2_i32, %c0_i32 : i32
    %c1_i32 = arith.constant 1 : i32
    %1 = arith.select %0, %c1_i32, %c2_i32 : i32
    %2 = arith.remsi %arg1, %1 : i32
    %c0_i32_0 = arith.constant 0 : i32
    %3 = arith.cmpi ne, %2, %c0_i32_0 : i32
    %c0_i32_1 = arith.constant 0 : i32
    %4 = arith.cmpi slt, %2, %c0_i32_1 : i32
    %c0_i32_2 = arith.constant 0 : i32
    %5 = arith.cmpi slt, %1, %c0_i32_2 : i32
    %6 = arith.xori %4, %5 : i1
    %7 = arith.andi %6, %3 : i1
    %8 = arith.addi %2, %1 : i32
    %9 = arith.select %7, %8, %2 : i32
    %c0_i32_3 = arith.constant 0 : i32
    %10 = arith.cmpi eq, %arg1, %c0_i32_3 : i32
    %11 = arith.extui %10 : i1 to i32
    %c0_i32_4 = arith.constant 0 : i32
    %12 = arith.cmpi ne, %11, %c0_i32_4 : i32
    scf.if %12 {
      %c0_i32_75 = arith.constant 0 : i32
      %c0_i32_76 = arith.constant 0 : i32
      %c0_i32_77 = arith.constant 0 : i32
      %c0_i32_78 = arith.constant 0 : i32
      %122 = tpu.memref_slice %arg2[%arg0, %c0_i32_77, %c0_i32_78] : memref<2x456x128xbf16, #tpu.memory_space<any>> -> memref<1x248x128xbf16, #tpu.memory_space<any>>
      %123 = tpu.memref_squeeze %122 : memref<1x248x128xbf16, #tpu.memory_space<any>> -> memref<248x128xbf16, #tpu.memory_space<any>>
      %c0_i32_79 = arith.constant 0 : i32
      %c0_i32_80 = arith.constant 0 : i32
      %124 = tpu.memref_slice %arg9[%c0_i32_75, %c0_i32_79, %c0_i32_80] : memref<2x248x128xbf16, #tpu.memory_space<vmem>> -> memref<1x248x128xbf16, #tpu.memory_space<vmem>>
      %125 = tpu.memref_squeeze %124 : memref<1x248x128xbf16, #tpu.memory_space<vmem>> -> memref<248x128xbf16, #tpu.memory_space<vmem>>
      %126 = tpu.memref_slice %arg10[%c0_i32_76] : memref<2x!tpu.dma_semaphore, #tpu.memory_space<semaphore_mem>> -> memref<1x!tpu.dma_semaphore, #tpu.memory_space<semaphore_mem>>
      %127 = tpu.memref_squeeze %126 : memref<1x!tpu.dma_semaphore, #tpu.memory_space<semaphore_mem>> -> memref<!tpu.dma_semaphore, #tpu.memory_space<semaphore_mem>>
      tpu.enqueue_dma source(%123 : memref<248x128xbf16, #tpu.memory_space<any>>) target(%125 : memref<248x128xbf16, #tpu.memory_space<vmem>>) target_semaphore(%127 : memref<!tpu.dma_semaphore, #tpu.memory_space<semaphore_mem>>)
    } else {
    }
    %c192_i32 = arith.constant 192 : i32
    %13 = arith.muli %arg1, %c192_i32 : i32
    %c0_i32_5 = arith.constant 0 : i32
    %14 = tpu.memref_slice %arg2[%arg0, %13, %c0_i32_5] : memref<2x456x128xbf16, #tpu.memory_space<any>> -> memref<1x248x128xbf16, #tpu.memory_space<any>>
    %15 = tpu.memref_squeeze %14 : memref<1x248x128xbf16, #tpu.memory_space<any>> -> memref<248x128xbf16, #tpu.memory_space<any>>
    %c0_i32_6 = arith.constant 0 : i32
    %c0_i32_7 = arith.constant 0 : i32
    %16 = tpu.memref_slice %arg9[%9, %c0_i32_6, %c0_i32_7] : memref<2x248x128xbf16, #tpu.memory_space<vmem>> -> memref<1x248x128xbf16, #tpu.memory_space<vmem>>
    %17 = tpu.memref_squeeze %16 : memref<1x248x128xbf16, #tpu.memory_space<vmem>> -> memref<248x128xbf16, #tpu.memory_space<vmem>>
    %18 = tpu.memref_slice %arg10[%9] : memref<2x!tpu.dma_semaphore, #tpu.memory_space<semaphore_mem>> -> memref<1x!tpu.dma_semaphore, #tpu.memory_space<semaphore_mem>>
    %19 = tpu.memref_squeeze %18 : memref<1x!tpu.dma_semaphore, #tpu.memory_space<semaphore_mem>> -> memref<!tpu.dma_semaphore, #tpu.memory_space<semaphore_mem>>
    tpu.wait_dma2 semaphore(%19 : memref<!tpu.dma_semaphore, #tpu.memory_space<semaphore_mem>>) src(%15 : memref<248x128xbf16, #tpu.memory_space<any>>) dst(%17 : memref<248x128xbf16, #tpu.memory_space<vmem>>)
    %c1_i32_8 = arith.constant 1 : i32
    %20 = arith.addi %arg1, %c1_i32_8 : i32
    %c2_i32_9 = arith.constant 2 : i32
    %21 = arith.cmpi slt, %20, %c2_i32_9 : i32
    %22 = arith.extui %21 : i1 to i32
    %c0_i32_10 = arith.constant 0 : i32
    %23 = arith.cmpi ne, %22, %c0_i32_10 : i32
    scf.if %23 {
      %c1_i32_75 = arith.constant 1 : i32
      %122 = arith.addi %arg1, %c1_i32_75 : i32
      %c1_i32_76 = arith.constant 1 : i32
      %123 = arith.subi %c1_i32_76, %9 : i32
      %c192_i32_77 = arith.constant 192 : i32
      %124 = arith.muli %122, %c192_i32_77 : i32
      %c0_i32_78 = arith.constant 0 : i32
      %125 = tpu.memref_slice %arg2[%arg0, %124, %c0_i32_78] : memref<2x456x128xbf16, #tpu.memory_space<any>> -> memref<1x248x128xbf16, #tpu.memory_space<any>>
      %126 = tpu.memref_squeeze %125 : memref<1x248x128xbf16, #tpu.memory_space<any>> -> memref<248x128xbf16, #tpu.memory_space<any>>
      %c0_i32_79 = arith.constant 0 : i32
      %c0_i32_80 = arith.constant 0 : i32
      %127 = tpu.memref_slice %arg9[%123, %c0_i32_79, %c0_i32_80] : memref<2x248x128xbf16, #tpu.memory_space<vmem>> -> memref<1x248x128xbf16, #tpu.memory_space<vmem>>
      %128 = tpu.memref_squeeze %127 : memref<1x248x128xbf16, #tpu.memory_space<vmem>> -> memref<248x128xbf16, #tpu.memory_space<vmem>>
      %129 = tpu.memref_slice %arg10[%123] : memref<2x!tpu.dma_semaphore, #tpu.memory_space<semaphore_mem>> -> memref<1x!tpu.dma_semaphore, #tpu.memory_space<semaphore_mem>>
      %130 = tpu.memref_squeeze %129 : memref<1x!tpu.dma_semaphore, #tpu.memory_space<semaphore_mem>> -> memref<!tpu.dma_semaphore, #tpu.memory_space<semaphore_mem>>
      tpu.enqueue_dma source(%126 : memref<248x128xbf16, #tpu.memory_space<any>>) target(%128 : memref<248x128xbf16, #tpu.memory_space<vmem>>) target_semaphore(%130 : memref<!tpu.dma_semaphore, #tpu.memory_space<semaphore_mem>>)
    } else {
    }
    %c0_i32_11 = arith.constant 0 : i32
    %24 = arith.cmpi eq, %arg1, %c0_i32_11 : i32
    %25 = arith.extui %24 : i1 to i32
    %c0_i32_12 = arith.constant 0 : i32
    %26 = arith.cmpi ne, %25, %c0_i32_12 : i32
    scf.if %26 {
      %cst_75 = arith.constant 0.000000e+00 : f32
      %122 = vector.broadcast %cst_75 : f32 to vector<1x128xf32>
      %c0_76 = arith.constant 0 : index
      %c0_77 = arith.constant 0 : index
      %c0_78 = arith.constant 0 : index
      %123 = vector.load %arg7[%c0_76, %c0_77, %c0_78] : memref<1x1x128xf32, #tpu.memory_space<vmem>>, vector<1x1x128xf32>
      %124 = vector.shape_cast %123 : vector<1x1x128xf32> to vector<1x128xf32>
      %125 = vector.shape_cast %122 : vector<1x128xf32> to vector<1x1x128xf32>
      tpu.vector_store %arg7[%c0_76, %c0_77, %c0_78], %125 {strides = array<i32>} : memref<1x1x128xf32, #tpu.memory_space<vmem>>, vector<1x1x128xf32>,
      %cst_79 = arith.constant 0.000000e+00 : f32
      %126 = vector.broadcast %cst_79 : f32 to vector<1x128xf32>
      %c0_80 = arith.constant 0 : index
      %c0_81 = arith.constant 0 : index
      %c0_82 = arith.constant 0 : index
      %127 = vector.load %arg8[%c0_80, %c0_81, %c0_82] : memref<1x1x128xf32, #tpu.memory_space<vmem>>, vector<1x1x128xf32>
      %128 = vector.shape_cast %127 : vector<1x1x128xf32> to vector<1x128xf32>
      %129 = vector.shape_cast %126 : vector<1x128xf32> to vector<1x1x128xf32>
      tpu.vector_store %arg8[%c0_80, %c0_81, %c0_82], %129 {strides = array<i32>} : memref<1x1x128xf32, #tpu.memory_space<vmem>>, vector<1x1x128xf32>,
    } else {
    }
    %c0 = arith.constant 0 : index
    %c0_13 = arith.constant 0 : index
    %27 = vector.load %arg4[%c0, %c0_13] : memref<1x128xf32, #tpu.memory_space<vmem>>, vector<1x128xf32>
    %c0_14 = arith.constant 0 : index
    %c0_15 = arith.constant 0 : index
    %28 = vector.load %arg5[%c0_14, %c0_15] : memref<192x1xf32, #tpu.memory_space<vmem>>, vector<192x1xf32>
    %cst = arith.constant 0.000000e+00 : f32
    %29 = vector.broadcast %cst : f32 to vector<1x128xf32>
    %cst_16 = arith.constant 0.000000e+00 : f32
    %30 = vector.broadcast %cst_16 : f32 to vector<1x128xf32>
    %cst_17 = arith.constant 0.000000e+00 : f32
    %31 = vector.broadcast %cst_17 : f32 to vector<192x128xf32>
    %32 = arith.index_cast %9 : i32 to index
    %c0_18 = arith.constant 0 : index
    %c0_19 = arith.constant 0 : index
    %33 = vector.load %arg9[%32, %c0_18, %c0_19] : memref<2x248x128xbf16, #tpu.memory_space<vmem>>, vector<1x192x128xbf16>
    %34 = vector.shape_cast %33 : vector<1x192x128xbf16> to vector<192x128xbf16>
    %c0_20 = arith.constant 0 : index
    %c0_21 = arith.constant 0 : index
    %c0_22 = arith.constant 0 : index
    %35 = vector.load %arg3[%c0_20, %c0_21, %c0_22] : memref<9x128x128xbf16, #tpu.memory_space<vmem>>, vector<1x128x128xbf16>
    %36 = vector.shape_cast %35 : vector<1x128x128xbf16> to vector<128x128xbf16>
    %cst_23 = arith.constant dense<0.000000e+00> : vector<192x128xf32>
    %37 = tpu.matmul %34, %36, %cst_23 {dimension_numbers = #tpu.dot_dimension_numbers<[1], [0], [0], [1], [0, 0, 1, 1], [], []>} : vector<192x128xbf16>, vector<128x128xbf16>, vector<192x128xf32> -> vector<192x128xf32>
    %38 = arith.addf %31, %37 : vector<192x128xf32>
    %39 = arith.index_cast %9 : i32 to index
    %c1 = arith.constant 1 : index
    %c0_24 = arith.constant 0 : index
    %40 = vector.load %arg9[%39, %c1, %c0_24] : memref<2x248x128xbf16, #tpu.memory_space<vmem>>, vector<1x192x128xbf16>
    %41 = vector.shape_cast %40 : vector<1x192x128xbf16> to vector<192x128xbf16>
    %c1_25 = arith.constant 1 : index
    %c0_26 = arith.constant 0 : index
    %c0_27 = arith.constant 0 : index
    %42 = vector.load %arg3[%c1_25, %c0_26, %c0_27] : memref<9x128x128xbf16, #tpu.memory_space<vmem>>, vector<1x128x128xbf16>
    %43 = vector.shape_cast %42 : vector<1x128x128xbf16> to vector<128x128xbf16>
    %cst_28 = arith.constant dense<0.000000e+00> : vector<192x128xf32>
    %44 = tpu.matmul %41, %43, %cst_28 {dimension_numbers = #tpu.dot_dimension_numbers<[1], [0], [0], [1], [0, 0, 1, 1], [], []>} : vector<192x128xbf16>, vector<128x128xbf16>, vector<192x128xf32> -> vector<192x128xf32>
    %45 = arith.addf %38, %44 : vector<192x128xf32>
    %46 = arith.index_cast %9 : i32 to index
    %c2 = arith.constant 2 : index
    %c0_29 = arith.constant 0 : index
    %47 = vector.load %arg9[%46, %c2, %c0_29] : memref<2x248x128xbf16, #tpu.memory_space<vmem>>, vector<1x192x128xbf16>
    %48 = vector.shape_cast %47 : vector<1x192x128xbf16> to vector<192x128xbf16>
    %c2_30 = arith.constant 2 : index
    %c0_31 = arith.constant 0 : index
    %c0_32 = arith.constant 0 : index
    %49 = vector.load %arg3[%c2_30, %c0_31, %c0_32] : memref<9x128x128xbf16, #tpu.memory_space<vmem>>, vector<1x128x128xbf16>
    %50 = vector.shape_cast %49 : vector<1x128x128xbf16> to vector<128x128xbf16>
    %cst_33 = arith.constant dense<0.000000e+00> : vector<192x128xf32>
    %51 = tpu.matmul %48, %50, %cst_33 {dimension_numbers = #tpu.dot_dimension_numbers<[1], [0], [0], [1], [0, 0, 1, 1], [], []>} : vector<192x128xbf16>, vector<128x128xbf16>, vector<192x128xf32> -> vector<192x128xf32>
    %52 = arith.addf %45, %51 : vector<192x128xf32>
    %53 = arith.index_cast %9 : i32 to index
    %c24 = arith.constant 24 : index
    %c0_34 = arith.constant 0 : index
    %54 = vector.load %arg9[%53, %c24, %c0_34] : memref<2x248x128xbf16, #tpu.memory_space<vmem>>, vector<1x192x128xbf16>
    %55 = vector.shape_cast %54 : vector<1x192x128xbf16> to vector<192x128xbf16>
    %c3 = arith.constant 3 : index
    %c0_35 = arith.constant 0 : index
    %c0_36 = arith.constant 0 : index
    %56 = vector.load %arg3[%c3, %c0_35, %c0_36] : memref<9x128x128xbf16, #tpu.memory_space<vmem>>, vector<1x128x128xbf16>
    %57 = vector.shape_cast %56 : vector<1x128x128xbf16> to vector<128x128xbf16>
    %cst_37 = arith.constant dense<0.000000e+00> : vector<192x128xf32>
    %58 = tpu.matmul %55, %57, %cst_37 {dimension_numbers = #tpu.dot_dimension_numbers<[1], [0], [0], [1], [0, 0, 1, 1], [], []>} : vector<192x128xbf16>, vector<128x128xbf16>, vector<192x128xf32> -> vector<192x128xf32>
    %59 = arith.addf %52, %58 : vector<192x128xf32>
    %60 = arith.index_cast %9 : i32 to index
    %c25 = arith.constant 25 : index
    %c0_38 = arith.constant 0 : index
    %61 = vector.load %arg9[%60, %c25, %c0_38] : memref<2x248x128xbf16, #tpu.memory_space<vmem>>, vector<1x192x128xbf16>
    %62 = vector.shape_cast %61 : vector<1x192x128xbf16> to vector<192x128xbf16>
    %c4 = arith.constant 4 : index
    %c0_39 = arith.constant 0 : index
    %c0_40 = arith.constant 0 : index
    %63 = vector.load %arg3[%c4, %c0_39, %c0_40] : memref<9x128x128xbf16, #tpu.memory_space<vmem>>, vector<1x128x128xbf16>
    %64 = vector.shape_cast %63 : vector<1x128x128xbf16> to vector<128x128xbf16>
    %cst_41 = arith.constant dense<0.000000e+00> : vector<192x128xf32>
    %65 = tpu.matmul %62, %64, %cst_41 {dimension_numbers = #tpu.dot_dimension_numbers<[1], [0], [0], [1], [0, 0, 1, 1], [], []>} : vector<192x128xbf16>, vector<128x128xbf16>, vector<192x128xf32> -> vector<192x128xf32>
    %66 = arith.addf %59, %65 : vector<192x128xf32>
    %67 = arith.index_cast %9 : i32 to index
    %c26 = arith.constant 26 : index
    %c0_42 = arith.constant 0 : index
    %68 = vector.load %arg9[%67, %c26, %c0_42] : memref<2x248x128xbf16, #tpu.memory_space<vmem>>, vector<1x192x128xbf16>
    %69 = vector.shape_cast %68 : vector<1x192x128xbf16> to vector<192x128xbf16>
    %c5 = arith.constant 5 : index
    %c0_43 = arith.constant 0 : index
    %c0_44 = arith.constant 0 : index
    %70 = vector.load %arg3[%c5, %c0_43, %c0_44] : memref<9x128x128xbf16, #tpu.memory_space<vmem>>, vector<1x128x128xbf16>
    %71 = vector.shape_cast %70 : vector<1x128x128xbf16> to vector<128x128xbf16>
    %cst_45 = arith.constant dense<0.000000e+00> : vector<192x128xf32>
    %72 = tpu.matmul %69, %71, %cst_45 {dimension_numbers = #tpu.dot_dimension_numbers<[1], [0], [0], [1], [0, 0, 1, 1], [], []>} : vector<192x128xbf16>, vector<128x128xbf16>, vector<192x128xf32> -> vector<192x128xf32>
    %73 = arith.addf %66, %72 : vector<192x128xf32>
    %74 = arith.index_cast %9 : i32 to index
    %c48 = arith.constant 48 : index
    %c0_46 = arith.constant 0 : index
    %75 = vector.load %arg9[%74, %c48, %c0_46] : memref<2x248x128xbf16, #tpu.memory_space<vmem>>, vector<1x192x128xbf16>
    %76 = vector.shape_cast %75 : vector<1x192x128xbf16> to vector<192x128xbf16>
    %c6 = arith.constant 6 : index
    %c0_47 = arith.constant 0 : index
    %c0_48 = arith.constant 0 : index
    %77 = vector.load %arg3[%c6, %c0_47, %c0_48] : memref<9x128x128xbf16, #tpu.memory_space<vmem>>, vector<1x128x128xbf16>
    %78 = vector.shape_cast %77 : vector<1x128x128xbf16> to vector<128x128xbf16>
    %cst_49 = arith.constant dense<0.000000e+00> : vector<192x128xf32>
    %79 = tpu.matmul %76, %78, %cst_49 {dimension_numbers = #tpu.dot_dimension_numbers<[1], [0], [0], [1], [0, 0, 1, 1], [], []>} : vector<192x128xbf16>, vector<128x128xbf16>, vector<192x128xf32> -> vector<192x128xf32>
    %80 = arith.addf %73, %79 : vector<192x128xf32>
    %81 = arith.index_cast %9 : i32 to index
    %c49 = arith.constant 49 : index
    %c0_50 = arith.constant 0 : index
    %82 = vector.load %arg9[%81, %c49, %c0_50] : memref<2x248x128xbf16, #tpu.memory_space<vmem>>, vector<1x192x128xbf16>
    %83 = vector.shape_cast %82 : vector<1x192x128xbf16> to vector<192x128xbf16>
    %c7 = arith.constant 7 : index
    %c0_51 = arith.constant 0 : index
    %c0_52 = arith.constant 0 : index
    %84 = vector.load %arg3[%c7, %c0_51, %c0_52] : memref<9x128x128xbf16, #tpu.memory_space<vmem>>, vector<1x128x128xbf16>
    %85 = vector.shape_cast %84 : vector<1x128x128xbf16> to vector<128x128xbf16>
    %cst_53 = arith.constant dense<0.000000e+00> : vector<192x128xf32>
    %86 = tpu.matmul %83, %85, %cst_53 {dimension_numbers = #tpu.dot_dimension_numbers<[1], [0], [0], [1], [0, 0, 1, 1], [], []>} : vector<192x128xbf16>, vector<128x128xbf16>, vector<192x128xf32> -> vector<192x128xf32>
    %87 = arith.addf %80, %86 : vector<192x128xf32>
    %88 = arith.index_cast %9 : i32 to index
    %c50 = arith.constant 50 : index
    %c0_54 = arith.constant 0 : index
    %89 = vector.load %arg9[%88, %c50, %c0_54] : memref<2x248x128xbf16, #tpu.memory_space<vmem>>, vector<1x192x128xbf16>
    %90 = vector.shape_cast %89 : vector<1x192x128xbf16> to vector<192x128xbf16>
    %c8 = arith.constant 8 : index
    %c0_55 = arith.constant 0 : index
    %c0_56 = arith.constant 0 : index
    %91 = vector.load %arg3[%c8, %c0_55, %c0_56] : memref<9x128x128xbf16, #tpu.memory_space<vmem>>, vector<1x128x128xbf16>
    %92 = vector.shape_cast %91 : vector<1x128x128xbf16> to vector<128x128xbf16>
    %cst_57 = arith.constant dense<0.000000e+00> : vector<192x128xf32>
    %93 = tpu.matmul %90, %92, %cst_57 {dimension_numbers = #tpu.dot_dimension_numbers<[1], [0], [0], [1], [0, 0, 1, 1], [], []>} : vector<192x128xbf16>, vector<128x128xbf16>, vector<192x128xf32> -> vector<192x128xf32>
    %94 = arith.addf %87, %93 : vector<192x128xf32>
    %95 = vector.broadcast %27 : vector<1x128xf32> to vector<192x128xf32>
    %96 = arith.addf %94, %95 : vector<192x128xf32>
    %97 = arith.truncf %96 : vector<192x128xf32> to vector<192x128xbf16>
    %c0_58 = arith.constant 0 : index
    %c0_59 = arith.constant 0 : index
    %c0_60 = arith.constant 0 : index
    %98 = vector.load %arg6[%c0_58, %c0_59, %c0_60] : memref<1x192x128xbf16, #tpu.memory_space<vmem>>, vector<1x192x128xbf16>
    %99 = vector.shape_cast %98 : vector<1x192x128xbf16> to vector<192x128xbf16>
    %100 = vector.shape_cast %97 : vector<192x128xbf16> to vector<1x192x128xbf16>
    tpu.vector_store %arg6[%c0_58, %c0_59, %c0_60], %100 {strides = array<i32>} : memref<1x192x128xbf16, #tpu.memory_space<vmem>>, vector<1x192x128xbf16>,
    %101 = vector.broadcast %28 : vector<192x1xf32> to vector<192x128xf32>
    %102 = arith.mulf %96, %101 : vector<192x128xf32>
    %cst_61 = arith.constant dense<0.000000e+00> : vector<128xf32>
    %103 = vector.multi_reduction <add>, %102, %cst_61 [0] : vector<192x128xf32> to vector<128xf32>
    %104 = vector.shape_cast %103 : vector<128xf32> to vector<1x128xf32>
    %105 = arith.addf %29, %104 : vector<1x128xf32>
    %106 = arith.mulf %96, %102 : vector<192x128xf32>
    %cst_62 = arith.constant dense<0.000000e+00> : vector<128xf32>
    %107 = vector.multi_reduction <add>, %106, %cst_62 [0] : vector<192x128xf32> to vector<128xf32>
    %108 = vector.shape_cast %107 : vector<128xf32> to vector<1x128xf32>
    %109 = arith.addf %30, %108 : vector<1x128xf32>
    %c0_63 = arith.constant 0 : index
    %c0_64 = arith.constant 0 : index
    %c0_65 = arith.constant 0 : index
    %110 = vector.load %arg7[%c0_63, %c0_64, %c0_65] : memref<1x1x128xf32, #tpu.memory_space<vmem>>, vector<1x1x128xf32>
    %111 = vector.shape_cast %110 : vector<1x1x128xf32> to vector<1x128xf32>
    %112 = arith.addf %111, %105 : vector<1x128xf32>
    %c0_66 = arith.constant 0 : index
    %c0_67 = arith.constant 0 : index
    %c0_68 = arith.constant 0 : index
    %113 = vector.load %arg7[%c0_66, %c0_67, %c0_68] : memref<1x1x128xf32, #tpu.memory_space<vmem>>, vector<1x1x128xf32>
    %114 = vector.shape_cast %113 : vector<1x1x128xf32> to vector<1x128xf32>
    %115 = vector.shape_cast %112 : vector<1x128xf32> to vector<1x1x128xf32>
    tpu.vector_store %arg7[%c0_66, %c0_67, %c0_68], %115 {strides = array<i32>} : memref<1x1x128xf32, #tpu.memory_space<vmem>>, vector<1x1x128xf32>,
    %c0_69 = arith.constant 0 : index
    %c0_70 = arith.constant 0 : index
    %c0_71 = arith.constant 0 : index
    %116 = vector.load %arg8[%c0_69, %c0_70, %c0_71] : memref<1x1x128xf32, #tpu.memory_space<vmem>>, vector<1x1x128xf32>
    %117 = vector.shape_cast %116 : vector<1x1x128xf32> to vector<1x128xf32>
    %118 = arith.addf %117, %109 : vector<1x128xf32>
    %c0_72 = arith.constant 0 : index
    %c0_73 = arith.constant 0 : index
    %c0_74 = arith.constant 0 : index
    %119 = vector.load %arg8[%c0_72, %c0_73, %c0_74] : memref<1x1x128xf32, #tpu.memory_space<vmem>>, vector<1x1x128xf32>
    %120 = vector.shape_cast %119 : vector<1x1x128xf32> to vector<1x128xf32>
    %121 = vector.shape_cast %118 : vector<1x128xf32> to vector<1x1x128xf32>
    tpu.vector_store %arg8[%c0_72, %c0_73, %c0_74], %121 {strides = array<i32>} : memref<1x1x128xf32, #tpu.memory_space<vmem>>, vector<1x1x128xf32>,
    return
  }
  func.func @transform_1(%arg0: i32, %arg1: i32) -> (i32, i32, i32) {
    %c0_i32 = arith.constant 0 : i32
    %c0_i32_0 = arith.constant 0 : i32
    %c0_i32_1 = arith.constant 0 : i32
    %c0_i32_2 = arith.constant 0 : i32
    return %c0_i32, %c0_i32_0, %c0_i32_1 : i32, i32, i32
  }
  func.func @transform_2(%arg0: i32, %arg1: i32) -> (i32, i32) {
    %c0_i32 = arith.constant 0 : i32
    %c0_i32_0 = arith.constant 0 : i32
    %c0_i32_1 = arith.constant 0 : i32
    return %c0_i32, %c0_i32_0 : i32, i32
  }
  func.func @transform_3(%arg0: i32, %arg1: i32) -> (i32, i32) {
    %c0_i32 = arith.constant 0 : i32
    %c0_i32_0 = arith.constant 0 : i32
    %c0_i32_1 = arith.constant 0 : i32
    return %c0_i32, %c0_i32_0 : i32, i32
  }
  func.func @transform_4(%arg0: i32, %arg1: i32) -> (i32, i32, i32) {
    %c0_i32 = arith.constant 0 : i32
    %c0_i32_0 = arith.constant 0 : i32
    return %arg0, %arg1, %c0_i32 : i32, i32, i32
  }
  func.func @transform_5(%arg0: i32, %arg1: i32) -> (i32, i32, i32) {
    %c0_i32 = arith.constant 0 : i32
    %c0_i32_0 = arith.constant 0 : i32
    %c0_i32_1 = arith.constant 0 : i32
    return %arg0, %c0_i32, %c0_i32_0 : i32, i32, i32
  }
  func.func @transform_6(%arg0: i32, %arg1: i32) -> (i32, i32, i32) {
    %c0_i32 = arith.constant 0 : i32
    %c0_i32_0 = arith.constant 0 : i32
    %c0_i32_1 = arith.constant 0 : i32
    return %arg0, %c0_i32, %c0_i32_0 : i32, i32, i32
  }
}

</mosaic_0001>

<llo_original>
// kernel: tpu_custom_call.1
$region0: #{tpu_custom_call.1}
  #allocation0 [shape = 'u32[]', space=smem, size = 0x4, offset = 0x4, fixed_abs, tag = 'smem constant byte address 0x4 - core index']
  #allocation1 [shape = 'u32[144,128]{1,0:T(1,128)}', space=vmem, size = 0x12000, scoped, tag = 'internal scratch']
  #allocation2 [shape = 'bf16[2,248,128]{2,1,0:T(8,128)(2,1)}', space=vmem, size = 0x1f000, scoped, tag = 'scratch operand']
  #allocation3 [shape = 's32[2]{0}', space=sflag, size = 0x8, scoped, tag = 'scratch operand']
  #allocation11 [shape = 's32[]', space=sflag, size = 0x4, offset = 0, fixed_abs, tag = 'sflag constant byte address 0x0 - dummy sync flag']
  #allocation12 [shape = 's32[]', space=sflag, size = 0x4, offset = 0, fixed_abs, tag = 'sflag constant byte address 0x0 - dummy sync flag']
  #allocation13 [shape = 'u32[]', space=smem, size = 0x4, offset = 0x44, fixed_abs, tag = 'smem constant byte address 0x44 - assertion arg 0']
  #allocation14 [shape = 'u32[]', space=smem, size = 0x4, offset = 0x48, fixed_abs, tag = 'smem constant byte address 0x48 - assertion arg 1']
  #allocation15 [shape = 's32[]', space=sflag, size = 0x4, offset = 0, fixed_abs, tag = 'sflag constant byte address 0x0 - dummy sync flag']
  #allocation16 [shape = 's32[]', space=sflag, size = 0x4, offset = 0, fixed_abs, tag = 'sflag constant byte address 0x0 - dummy sync flag']
  %s0 = inlined_call_operand.hbm [shape: bf16[2,456,128], index: 0, kind: input, shape index: {}]
  %s1 = inlined_call_operand.hbm [shape: bf16[9,128,128], index: 1, kind: input, shape index: {}]
  %s2 = inlined_call_operand.vmem [shape: f32[1,128], index: 2, kind: input, shape index: {}]
  %s3 = inlined_call_operand.vmem [shape: f32[192,1], index: 3, kind: input, shape index: {}]
  %s4 = inlined_call_operand.hbm [shape: bf16[2,384,128], index: 4, kind: output, shape index: {0}]
  %s5 = inlined_call_operand.hbm [shape: f32[2,1,128], index: 5, kind: output, shape index: {1}]
  %s6 = inlined_call_operand.hbm [shape: f32[2,1,128], index: 6, kind: output, shape index: {2}]
  %7 = xla_tuple %s4, %s5, %s6
  %s8 = sld [smem:[#allocation0]]
  $region85: #{tpu_custom_call.1} parent=0
    _
  %s10 = ssub.s32 1, %s8
  %s11 = scalar_select 0, %s10, %s8
  $region1: #{tpu_custom_call.1} parent=0
    #allocation4 [shape = 'u8[294912]{0}', space=vmem, size = 0x48000, scoped, tag = 'input window, operand 1, single buffered']
    #allocation5 [shape = 's32[2]{0}', space=sflag, size = 0x8, scoped, tag = 'scoped memory for tpu_custom_call.1']
    #allocation6 [shape = 's32[2]{0}', space=sflag, size = 0x8, scoped, tag = 'scoped memory for tpu_custom_call.1']
    #allocation7 [shape = 'u8[98304]{0}', space=vmem, size = 0x18000, scoped, tag = 'output window, operand 0']
    #allocation8 [shape = 'u8[1024]{0}', space=vmem, size = 0x400, scoped, tag = 'output window, operand 1']
    #allocation9 [shape = 's32[2]{0}', space=sflag, size = 0x8, scoped, tag = 'scoped memory for tpu_custom_call.1']
    #allocation10 [shape = 'u8[1024]{0}', space=vmem, size = 0x400, scoped, tag = 'output window, operand 2']
    %12 = vsyncpa [#allocation5], 0
    %13 = vsyncpa [#allocation6], 0
    %s14 = scalar_lea.sflag [#allocation6], 1
    %15 = vsyncpa %s14, 0
    %16 = vsyncpa [#allocation9], 0
    %s17 = scalar_lea.sflag [#allocation9], 1
    %18 = vsyncpa %s17, 0
    loop: start=0, step=1, limit=6
    $region2: #{tpu_custom_call.1} parent=1 // loop_pre_header
      _
    $region3: #{tpu_custom_call.1} parent=1 // loop_header
      %s20 = sphi 0, %s24
      %p21 = scmp.ge.s32.totalorder %s20, 6
      %s27 = sphi 0, %s39
      %s28 = sphi 0, %s35
      %s29 = sphi 0, %s27
      %s30 = sphi 0, %s28
      %s31 = sphi 0, %s29
      %s32 = sphi 0, %s30
      %s40 = sphi 0, %s40
      %s42 = sphi 0, %s40
      %s43 = sphi 0, %s42
      %s57 = sphi 0, %s43
      %s61 = sphi 0, %s61
      %s63 = sphi 0, %s61
      %s64 = sphi 0, %s63
      %s78 = sphi 0, %s64
      %s82 = sphi 0, %s82
      %s84 = sphi 0, %s82
      %s85 = sphi 0, %s84
      %s99 = sphi 0, %s85
      %s107 = sphi 0, %s109
      %s110 = sphi 0, %s107
      %s111 = sphi 0, %s110
      %s127 = sphi 0, %s111
      %s133 = sphi 0, %s135
      %s136 = sphi 0, %s133
      %s137 = sphi 0, %s136
      %s153 = sphi 0, %s137
      %s159 = sphi 0, %s161
      %s162 = sphi 0, %s159
      %s163 = sphi 0, %s162
      %s179 = sphi 0, %s163
    $region4: #{tpu_custom_call.1} parent=1 // loop_header_branch
      %23 = sbr.rel (%p21) target = $region8
    $region5: #{tpu_custom_call.1} parent=1 // loop_body
      %s25 = ssub.s32 %s20, 1
      %s26 = ssub.s32 %s20, 2
      %s33 = sadd.s32 1, %s28
      %p34 = scmp.ge.s32.totalorder %s33, 2
      %s35 = scalar_select %p34, 0, %s33
      %s36 = sadd.s32 1, %s27
      %s37 = scalar_select %p34, %s36, %s27
      %p38 = scmp.ge.s32.totalorder %s37, 2
      %s39 = scalar_select %p38, 0, %s37
      %s41 = sadd.s32 %s40, 1
      %p44 = scmp.eq.s32.totalorder %s20, 3
      %p45 = scmp.ne.s32.totalorder %s40, %s42
      %p46 = scmp.eq.s32.totalorder %s20, 0
      %p47 = por %p45, %p46
      %p48 = scmp.ne.s32.totalorder %s40, %s42
      %p49 = scmp.eq.s32.totalorder %s25, 3
      %p50 = por %p48, %p49
      %p51 = scmp.ne.s32.totalorder %s42, %s43
      %p52 = scmp.eq.s32.totalorder %s25, 0
      %p53 = por %p51, %p52
      %p54 = scmp.ne.s32.totalorder %s42, %s43
      %p55 = scmp.eq.s32.totalorder %s26, 3
      %p56 = por %p54, %p55
      %p58 = scmp.ne.s32.totalorder %s43, %s57
      %p59 = scmp.eq.s32.totalorder %s26, 0
      %p60 = por %p58, %p59
      %s62 = sadd.s32 %s61, 1
      %p65 = scmp.eq.s32.totalorder %s20, 3
      %p66 = scmp.ne.s32.totalorder %s61, %s63
      %p67 = scmp.eq.s32.totalorder %s20, 0
      %p68 = por %p66, %p67
      %p69 = scmp.ne.s32.totalorder %s61, %s63
      %p70 = scmp.eq.s32.totalorder %s25, 3
      %p71 = por %p69, %p70
      %p72 = scmp.ne.s32.totalorder %s63, %s64
      %p73 = scmp.eq.s32.totalorder %s25, 0
      %p74 = por %p72, %p73
      %p75 = scmp.ne.s32.totalorder %s63, %s64
      %p76 = scmp.eq.s32.totalorder %s26, 3
      %p77 = por %p75, %p76
      %p79 = scmp.ne.s32.totalorder %s64, %s78
      %p80 = scmp.eq.s32.totalorder %s26, 0
      %p81 = por %p79, %p80
      %s83 = sadd.s32 %s82, 1
      %p86 = scmp.eq.s32.totalorder %s20, 3
      %p87 = scmp.ne.s32.totalorder %s82, %s84
      %p88 = scmp.eq.s32.totalorder %s20, 0
      %p89 = por %p87, %p88
      %p90 = scmp.ne.s32.totalorder %s82, %s84
      %p91 = scmp.eq.s32.totalorder %s25, 3
      %p92 = por %p90, %p91
      %p93 = scmp.ne.s32.totalorder %s84, %s85
      %p94 = scmp.eq.s32.totalorder %s25, 0
      %p95 = por %p93, %p94
      %p96 = scmp.ne.s32.totalorder %s84, %s85
      %p97 = scmp.eq.s32.totalorder %s26, 3
      %p98 = por %p96, %p97
      %p100 = scmp.ne.s32.totalorder %s85, %s99
      %p101 = scmp.eq.s32.totalorder %s26, 0
      %p102 = por %p100, %p101
      %s103 = ssub.s32 %s27, %s39
      %s104 = ssub.s32 %s28, %s35
      %s105 = sor.u32 %s103, %s104
      %p106 = scmp.eq.s32.totalorder %s105, 0
      %s108 = sadd.s32 %s107, 1
      %s109 = scalar_select %p106, %s107, %s108
      %p112 = pneg %p106
      %p113 = scmp.eq.s32.totalorder %s20, 3
      %p114 = por %p112, %p113
      %p115 = scmp.ne.s32.totalorder %s107, %s110
      %p116 = scmp.eq.s32.totalorder %s20, 0
      %p117 = por %p115, %p116
      %p118 = scmp.ne.s32.totalorder %s107, %s110
      %p119 = scmp.eq.s32.totalorder %s25, 3
      %p120 = por %p118, %p119
      %p121 = scmp.ne.s32.totalorder %s110, %s111
      %p122 = scmp.eq.s32.totalorder %s25, 0
      %p123 = por %p121, %p122
      %p124 = scmp.ne.s32.totalorder %s110, %s111
      %p125 = scmp.eq.s32.totalorder %s26, 3
      %p126 = por %p124, %p125
      %p128 = scmp.ne.s32.totalorder %s111, %s127
      %p129 = scmp.eq.s32.totalorder %s26, 0
      %p130 = por %p128, %p129
      %s131 = ssub.s32 %s27, %s39
      %p132 = scmp.eq.s32.totalorder %s131, 0
      %s134 = sadd.s32 %s133, 1
      %s135 = scalar_select %p132, %s133, %s134
      %p138 = pneg %p132
      %p139 = scmp.eq.s32.totalorder %s20, 3
      %p140 = por %p138, %p139
      %p141 = scmp.ne.s32.totalorder %s133, %s136
      %p142 = scmp.eq.s32.totalorder %s20, 0
      %p143 = por %p141, %p142
      %p144 = scmp.ne.s32.totalorder %s133, %s136
      %p145 = scmp.eq.s32.totalorder %s25, 3
      %p146 = por %p144, %p145
      %p147 = scmp.ne.s32.totalorder %s136, %s137
      %p148 = scmp.eq.s32.totalorder %s25, 0
      %p149 = por %p147, %p148
      %p150 = scmp.ne.s32.totalorder %s136, %s137
      %p151 = scmp.eq.s32.totalorder %s26, 3
      %p152 = por %p150, %p151
      %p154 = scmp.ne.s32.totalorder %s137, %s153
      %p155 = scmp.eq.s32.totalorder %s26, 0
      %p156 = por %p154, %p155
      %s157 = ssub.s32 %s27, %s39
      %p158 = scmp.eq.s32.totalorder %s157, 0
      %s160 = sadd.s32 %s159, 1
      %s161 = scalar_select %p158, %s159, %s160
      %p164 = pneg %p158
      %p165 = scmp.eq.s32.totalorder %s20, 3
      %p166 = por %p164, %p165
      %p167 = scmp.ne.s32.totalorder %s159, %s162
      %p168 = scmp.eq.s32.totalorder %s20, 0
      %p169 = por %p167, %p168
      %p170 = scmp.ne.s32.totalorder %s159, %s162
      %p171 = scmp.eq.s32.totalorder %s25, 3
      %p172 = por %p170, %p171
      %p173 = scmp.ne.s32.totalorder %s162, %s163
      %p174 = scmp.eq.s32.totalorder %s25, 0
      %p175 = por %p173, %p174
      %p176 = scmp.ne.s32.totalorder %s162, %s163
      %p177 = scmp.eq.s32.totalorder %s26, 3
      %p178 = por %p176, %p177
      %p180 = scmp.ne.s32.totalorder %s163, %s179
      %p181 = scmp.eq.s32.totalorder %s26, 0
      %p182 = por %p180, %p181
      %p183 = scmp.le.s32.totalorder 1, %s20
      %p184 = scmp.lt.s32.totalorder %s20, 5
      %p185 = pnand %p183, %p184
      %p186 = pneg %p185
      // Predicated region
      $region9: #{tpu_custom_call.1} parent=5 // pred_check
        _
      $region10: #{tpu_custom_call.1} parent=5 // pred_check_branch
        %188 = sbr.rel (%p185) target = $region12
      $region11: #{tpu_custom_call.1} parent=5 // pred_region
        %s189 = ssub.s32 %s20, 1
        // Predicated region
        $region13: #{tpu_custom_call.1} parent=11 // pred_check
          %p190 = pneg %p53
        $region14: #{tpu_custom_call.1} parent=11 // pred_check_branch
          %192 = sbr.rel (%p190) target = $region16
        $region15: #{tpu_custom_call.1} parent=11 // pred_region
          %s194 = ssub.s32 9216, 9216
          %195 = vsyncadd [#allocation5], %s194
          %s196 = sshll.u32 [#allocation4], 4
          %s197 = int_to_ptr.vmem [resolvable:$true] %s196
          %202 = dma.hbm_to_vmem [thread:$0]  %s1, 9216, %s197, [#allocation5], 64, 64, 4
        $region16: #{tpu_custom_call.1} parent=11 // pred_fallthru
          _
        // Predicated region
        $region17: #{tpu_custom_call.1} parent=11 // pred_check
          %p203 = pneg %p74
        $region18: #{tpu_custom_call.1} parent=11 // pred_check_branch
          %205 = sbr.rel (%p203) target = $region20
        $region19: #{tpu_custom_call.1} parent=11 // pred_region
          _
        $region20: #{tpu_custom_call.1} parent=11 // pred_fallthru
          _
        // Predicated region
        $region21: #{tpu_custom_call.1} parent=11 // pred_check
          %p206 = pneg %p95
        $region22: #{tpu_custom_call.1} parent=11 // pred_check_branch
          %208 = sbr.rel (%p206) target = $region24
        $region23: #{tpu_custom_call.1} parent=11 // pred_region
          _
        $region24: #{tpu_custom_call.1} parent=11 // pred_fallthru
          _
      $region12: #{tpu_custom_call.1} parent=5 // pred_fallthru
        _
      %p209 = scmp.lt.s32.totalorder %s20, 4
      // Predicated region
      $region25: #{tpu_custom_call.1} parent=5 // pred_check
        %p210 = pneg %p209
      $region26: #{tpu_custom_call.1} parent=5 // pred_check_branch
        %212 = sbr.rel (%p210) target = $region28
      $region27: #{tpu_custom_call.1} parent=5 // pred_region
        _
      $region28: #{tpu_custom_call.1} parent=5 // pred_fallthru
        _
      %p213 = scmp.le.s32.totalorder 1, %s20
      %p214 = scmp.lt.s32.totalorder %s20, 5
      %p215 = pnand %p213, %p214
      %p216 = pneg %p215
      // Predicated region
      $region29: #{tpu_custom_call.1} parent=5 // pred_check
        _
      $region30: #{tpu_custom_call.1} parent=5 // pred_check_branch
        %218 = sbr.rel (%p215) target = $region32
      $region31: #{tpu_custom_call.1} parent=5 // pred_region
        %s219 = ssub.s32 %s20, 1
        // Predicated region
        $region33: #{tpu_custom_call.1} parent=31 // pred_check
          %p220 = pneg %p53
        $region34: #{tpu_custom_call.1} parent=31 // pred_check_branch
          %222 = sbr.rel (%p220) target = $region36
        $region35: #{tpu_custom_call.1} parent=31 // pred_region
          %223 = dma.done [#allocation5], 9216
        $region36: #{tpu_custom_call.1} parent=31 // pred_fallthru
          _
        %p224 = pneg %p53
        %p225 = pneg %p50
        %p226 = pneg %p74
        %p227 = pneg %p71
        %p228 = pneg %p95
        %p229 = pneg %p92
        %p230 = pneg %p123
        %p231 = pneg %p120
        %s232 = sand.u32 %s110, 1
        %s233 = scalar_lea.sflag [#allocation6], %s232
        %s234 = sand.u32 %s110, 1
        %s235 = smul.addr %s234, 96
        %s236 = scalar_lea.vmem [#allocation7], %s235
        %p237 = pneg %p149
        %p238 = pneg %p146
        %s239 = sand.u32 %s25, 1
        %s240 = scalar_lea.sflag [#allocation9], %s239
        %s241 = sand.u32 %s136, 1
        %s242 = scalar_lea.vmem [#allocation8], %s241
        %p243 = pneg %p175
        %p244 = pneg %p172
        %s245 = sand.u32 %s25, 1
        %s246 = scalar_lea.sflag [#allocation9], %s245
        %s247 = sand.u32 %s162, 1
        %s248 = scalar_lea.vmem [#allocation10], %s247
        %s249 = smul.u32 24, %s30
        %p251 = scmp.lt.s32.totalorder %s30, 0
        %s252 = ssub.s32 0, %s30
        %s253 = scalar_select %p251, %s252, %s30
        %s254 = sand.u32 %s253, 1
        %s255 = ssub.s32 0, %s254
        %s256 = scalar_select %p251, %s255, %s254
        %p257 = scmp.ne.s32.totalorder %s256, 0
        %p258 = scmp.lt.s32.totalorder %s256, 0
        %p259 = pnand %p258, %p257
        %p260 = pneg %p259
        %s261 = sadd.s32 %s256, 2
        %s262 = scalar_select %p260, %s261, %s256
        %p263 = scmp.eq.s32.totalorder %s30, 0
        // Predicated region
        $region37: #{tpu_custom_call.1} parent=31 // pred_check
          %p264 = pneg %p263
        $region38: #{tpu_custom_call.1} parent=31 // pred_check_branch
          %266 = sbr.rel (%p264) target = $region40
        $region39: #{tpu_custom_call.1} parent=31 // pred_region
          %s267 = smul.u32 %s29, 57
          %s268 = smul.addr %s267, 64
          %s269 = scalar_lea.hbm %s0, %s268
          // Predicated region
          $region41: #{tpu_custom_call.1} parent=39 // pred_check
            _
          $region42: #{tpu_custom_call.1} parent=39 // pred_check_branch
            %271 = sbr.rel target = $region44
          $region43: #{tpu_custom_call.1} parent=39 // pred_region
            %272 = sst [smem:[#allocation13]] [#allocation12]
            %273 = sst [smem:[#allocation14]] [#allocation11]
          $region44: #{tpu_custom_call.1} parent=39 // pred_fallthru
            _
          %275 = shalt.err (0)
          %s277 = sshll.u32 [#allocation2], 4
          %s278 = int_to_ptr.vmem [resolvable:$true] %s277
          %280 = dma.hbm_to_vmem [thread:$0]  %s269, 1984, %s278, [#allocation3]
        $region40: #{tpu_custom_call.1} parent=31 // pred_fallthru
          _
        %s281 = smul.u32 %s262, 31
        %s282 = smul.addr %s281, 4
        %s283 = scalar_lea.vmem [#allocation2], %s282
        %s284 = scalar_lea.sflag [#allocation3], %s262
        %s285 = smul.u32 4, 31
        %s286 = smul.u32 %s285, 1
        %s287 = sshll.u32 %s286, 4
        %288 = dma.done %s284, %s287
        %s289 = sadd.s32 %s30, 1
        %p290 = scmp.lt.s32.totalorder %s289, 2
        // Predicated region
        $region45: #{tpu_custom_call.1} parent=31 // pred_check
          %p291 = pneg %p290
        $region46: #{tpu_custom_call.1} parent=31 // pred_check_branch
          %293 = sbr.rel (%p291) target = $region48
        $region47: #{tpu_custom_call.1} parent=31 // pred_region
          %s294 = ssub.s32 1, %s262
          %s295 = smul.u32 %s289, 192
          %s296 = sshra.s32 %s295, 3
          %s297 = sand.u32 %s295, 7
          %s298 = smul.u32 %s29, 57
          %s299 = sadd.s32 %s296, %s298
          %s300 = smul.addr %s299, 64
          %s301 = scalar_lea.hbm %s0, %s300
          %s302 = smul.u32 %s294, 31
          %s303 = smul.addr %s302, 4
          %s304 = scalar_lea.vmem [#allocation2], %s303
          %s305 = scalar_lea.sflag [#allocation3], %s294
          // Predicated region
          $region49: #{tpu_custom_call.1} parent=47 // pred_check
            _
          $region50: #{tpu_custom_call.1} parent=47 // pred_check_branch
            %307 = sbr.rel target = $region52
          $region51: #{tpu_custom_call.1} parent=47 // pred_region
            %308 = sst [smem:[#allocation13]] [#allocation16]
            %309 = sst [smem:[#allocation14]] [#allocation15]
          $region52: #{tpu_custom_call.1} parent=47 // pred_fallthru
            _
          %311 = shalt.err (0)
          %s313 = sshll.u32 %s304, 4
          %s314 = int_to_ptr.vmem [resolvable:$true] %s313
          %316 = dma.hbm_to_vmem [thread:$0]  %s301, 1984, %s314, %s305
        $region48: #{tpu_custom_call.1} parent=31 // pred_fallthru
          _
        // Predicated region
        $region53: #{tpu_custom_call.1} parent=31 // pred_check
          %p317 = pneg %p263
        $region54: #{tpu_custom_call.1} parent=31 // pred_check_branch
          %319 = sbr.rel (%p317) target = $region56
        $region55: #{tpu_custom_call.1} parent=31 // pred_region
          %320 = vst [vmem:[%s242] sm:$0x1] 0.0
          %321 = vst [vmem:[%s248] sm:$0x1] 0.0
        $region56: #{tpu_custom_call.1} parent=31 // pred_fallthru
          _
        %v322 = vld [vmem:[%s2] sm:$0x1]
        %v323 = vld [vmem:[%s3] sm:$0xff]
        %v324 = vld [vmem:[%s3 + $0x8] sm:$0xff]
        %v325 = vld [vmem:[%s3 + $0x10] sm:$0xff]
        %v326 = vld [vmem:[%s3 + $0x18] sm:$0xff]
        %v327 = vld [vmem:[%s3 + $0x20] sm:$0xff]
        %v328 = vld [vmem:[%s3 + $0x28] sm:$0xff]
        %v329 = vld [vmem:[%s3 + $0x30] sm:$0xff]
        %v330 = vld [vmem:[%s3 + $0x38] sm:$0xff]
        %v331 = vld [vmem:[%s3 + $0x40] sm:$0xff]
        %v332 = vld [vmem:[%s3 + $0x48] sm:$0xff]
        %v333 = vld [vmem:[%s3 + $0x50] sm:$0xff]
        %v334 = vld [vmem:[%s3 + $0x58] sm:$0xff]
        %v335 = vld [vmem:[%s3 + $0x60] sm:$0xff]
        %v336 = vld [vmem:[%s3 + $0x68] sm:$0xff]
        %v337 = vld [vmem:[%s3 + $0x70] sm:$0xff]
        %v338 = vld [vmem:[%s3 + $0x78] sm:$0xff]
        %v339 = vld [vmem:[%s3 + $0x80] sm:$0xff]
        %v340 = vld [vmem:[%s3 + $0x88] sm:$0xff]
        %v341 = vld [vmem:[%s3 + $0x90] sm:$0xff]
        %v342 = vld [vmem:[%s3 + $0x98] sm:$0xff]
        %v343 = vld [vmem:[%s3 + $0xa0] sm:$0xff]
        %v344 = vld [vmem:[%s3 + $0xa8] sm:$0xff]
        %v345 = vld [vmem:[%s3 + $0xb0] sm:$0xff]
        %v346 = vld [vmem:[%s3 + $0xb8] sm:$0xff]
        %v347 = vld [vmem:[%s283] sm:$0xf]
        %v348 = vld [vmem:[%s283 + $0x4] sm:$0xf]
        %v349 = vld [vmem:[%s283 + $0x8] sm:$0xf]
        %v350 = vld [vmem:[%s283 + $0xc] sm:$0xf]
        %v351 = vld [vmem:[%s283 + $0x10] sm:$0xf]
        %v352 = vld [vmem:[%s283 + $0x14] sm:$0xf]
        %v353 = vld [vmem:[%s283 + $0x18] sm:$0xf]
        %v354 = vld [vmem:[%s283 + $0x1c] sm:$0xf]
        %v355 = vld [vmem:[%s283 + $0x20] sm:$0xf]
        %v356 = vld [vmem:[%s283 + $0x24] sm:$0xf]
        %v357 = vld [vmem:[%s283 + $0x28] sm:$0xf]
        %v358 = vld [vmem:[%s283 + $0x2c] sm:$0xf]
        %v359 = vld [vmem:[%s283 + $0x30] sm:$0xf]
        %v360 = vld [vmem:[%s283 + $0x34] sm:$0xf]
        %v361 = vld [vmem:[%s283 + $0x38] sm:$0xf]
        %v362 = vld [vmem:[%s283 + $0x3c] sm:$0xf]
        %v363 = vld [vmem:[%s283 + $0x40] sm:$0xf]
        %v364 = vld [vmem:[%s283 + $0x44] sm:$0xf]
        %v365 = vld [vmem:[%s283 + $0x48] sm:$0xf]
        %v366 = vld [vmem:[%s283 + $0x4c] sm:$0xf]
        %v367 = vld [vmem:[%s283 + $0x50] sm:$0xf]
        %v368 = vld [vmem:[%s283 + $0x54] sm:$0xf]
        %v369 = vld [vmem:[%s283 + $0x58] sm:$0xf]
        %v370 = vld [vmem:[%s283 + $0x5c] sm:$0xf]
        %v371 = vld [vmem:[#allocation4] sm:$0xf]
        %v372 = vld [vmem:[#allocation4 + $0x4] sm:$0xf]
        %v373 = vld [vmem:[#allocation4 + $0x8] sm:$0xf]
        %v374 = vld [vmem:[#allocation4 + $0xc] sm:$0xf]
        %v375 = vld [vmem:[#allocation4 + $0x10] sm:$0xf]
        %v376 = vld [vmem:[#allocation4 + $0x14] sm:$0xf]
        %v377 = vld [vmem:[#allocation4 + $0x18] sm:$0xf]
        %v378 = vld [vmem:[#allocation4 + $0x1c] sm:$0xf]
        %v379 = vld [vmem:[#allocation4 + $0x20] sm:$0xf]
        %v380 = vld [vmem:[#allocation4 + $0x24] sm:$0xf]
        %v381 = vld [vmem:[#allocation4 + $0x28] sm:$0xf]
        %v382 = vld [vmem:[#allocation4 + $0x2c] sm:$0xf]
        %v383 = vld [vmem:[#allocation4 + $0x30] sm:$0xf]
        %v384 = vld [vmem:[#allocation4 + $0x34] sm:$0xf]
        %v385 = vld [vmem:[#allocation4 + $0x38] sm:$0xf]
        %v386 = vld [vmem:[#allocation4 + $0x3c] sm:$0xf]
        %v387 = vld [vmem:[%s283 + $0x60] sm:$0x1]
        %s388 = scalar_lea.vmem [#allocation4], 64
        %v389 = vld [vmem:[%s388] sm:$0xf]
        %v390 = vld [vmem:[%s388 + $0x4] sm:$0xf]
        %v391 = vld [vmem:[%s388 + $0x8] sm:$0xf]
        %v392 = vld [vmem:[%s388 + $0xc] sm:$0xf]
        %v393 = vld [vmem:[%s388 + $0x10] sm:$0xf]
        %v394 = vld [vmem:[%s388 + $0x14] sm:$0xf]
        %v395 = vld [vmem:[%s388 + $0x18] sm:$0xf]
        %v396 = vld [vmem:[%s388 + $0x1c] sm:$0xf]
        %v397 = vld [vmem:[%s388 + $0x20] sm:$0xf]
        %v398 = vld [vmem:[%s388 + $0x24] sm:$0xf]
        %v399 = vld [vmem:[%s388 + $0x28] sm:$0xf]
        %v400 = vld [vmem:[%s388 + $0x2c] sm:$0xf]
        %v401 = vld [vmem:[%s388 + $0x30] sm:$0xf]
        %v402 = vld [vmem:[%s388 + $0x34] sm:$0xf]
        %v403 = vld [vmem:[%s388 + $0x38] sm:$0xf]
        %v404 = vld [vmem:[%s388 + $0x3c] sm:$0xf]
        %v430 = vunpack.c.l.b16 %v347
        %v431 = vunpack.c.l.b16 %v348
        %v432 = vunpack.c.l.b16 %v349
        %v433 = vunpack.c.l.b16 %v350
        %v434 = vunpack.c.l.b16 %v351
        %v435 = vunpack.c.l.b16 %v352
        %v436 = vunpack.c.l.b16 %v353
        %v437 = vunpack.c.l.b16 %v354
        %v438 = vunpack.c.l.b16 %v355
        %v439 = vunpack.c.l.b16 %v356
        %v440 = vunpack.c.l.b16 %v357
        %v441 = vunpack.c.l.b16 %v358
        %v442 = vunpack.c.l.b16 %v359
        %v443 = vunpack.c.l.b16 %v360
        %v444 = vunpack.c.l.b16 %v361
        %v445 = vunpack.c.l.b16 %v362
        %v446 = vunpack.c.l.b16 %v363
        %v447 = vunpack.c.l.b16 %v364
        %v448 = vunpack.c.l.b16 %v365
        %v449 = vunpack.c.l.b16 %v366
        %v450 = vunpack.c.l.b16 %v367
        %v451 = vunpack.c.l.b16 %v368
        %v452 = vunpack.c.l.b16 %v369
        %v453 = vunpack.c.l.b16 %v370
        %v454 = vunpack.c.l.b16 %v387
        %v455 = vpack.c.b16 %v431, %v430
        %v456 = vpack.c.b16 %v433, %v432
        %v457 = vpack.c.b16 %v435, %v434
        %v458 = vpack.c.b16 %v437, %v436
        %v459 = vpack.c.b16 %v439, %v438
        %v460 = vpack.c.b16 %v441, %v440
        %v461 = vpack.c.b16 %v443, %v442
        %v462 = vpack.c.b16 %v445, %v444
        %v463 = vpack.c.b16 %v447, %v446
        %v464 = vpack.c.b16 %v449, %v448
        %v465 = vpack.c.b16 %v451, %v450
        %v466 = vpack.c.b16 %v453, %v452
        %v467 = vpack.c.b16 %v454, %v454
        %vm468 = vsmask.f32 7424
        %v470 = vshrl.u32 %v455, 16
        %v472 = vshll.u32 %v455, 16
        %v474 = vrot.slane %v472, 1
        %v475 = vor.u32 %v470, %v474
        %v477 = vshll.u32 %v456, 16
        %v479 = vrot.slane %v477, 1
        %v480 = vsel %vm468, %v475, %v479
        %v481 = vshrl.u32 %v456, 16
        %v483 = vor.u32 %v481, %v479
        %v485 = vshll.u32 %v457, 16
        %v487 = vrot.slane %v485, 1
        %v488 = vsel %vm468, %v483, %v487
        %v489 = vshrl.u32 %v457, 16
        %v491 = vor.u32 %v489, %v487
        %v493 = vshll.u32 %v458, 16
        %v495 = vrot.slane %v493, 1
        %v496 = vsel %vm468, %v491, %v495
        %v497 = vshrl.u32 %v458, 16
        %v499 = vor.u32 %v497, %v495
        %v501 = vshll.u32 %v459, 16
        %v503 = vrot.slane %v501, 1
        %v504 = vsel %vm468, %v499, %v503
        %v505 = vshrl.u32 %v459, 16
        %v507 = vor.u32 %v505, %v503
        %v509 = vshll.u32 %v460, 16
        %v511 = vrot.slane %v509, 1
        %v512 = vsel %vm468, %v507, %v511
        %v513 = vshrl.u32 %v460, 16
        %v515 = vor.u32 %v513, %v511
        %v517 = vshll.u32 %v461, 16
        %v519 = vrot.slane %v517, 1
        %v520 = vsel %vm468, %v515, %v519
        %v521 = vshrl.u32 %v461, 16
        %v523 = vor.u32 %v521, %v519
        %v525 = vshll.u32 %v462, 16
        %v527 = vrot.slane %v525, 1
        %v528 = vsel %vm468, %v523, %v527
        %v529 = vshrl.u32 %v462, 16
        %v531 = vor.u32 %v529, %v527
        %v533 = vshll.u32 %v463, 16
        %v535 = vrot.slane %v533, 1
        %v536 = vsel %vm468, %v531, %v535
        %v537 = vshrl.u32 %v463, 16
        %v539 = vor.u32 %v537, %v535
        %v541 = vshll.u32 %v464, 16
        %v543 = vrot.slane %v541, 1
        %v544 = vsel %vm468, %v539, %v543
        %v545 = vshrl.u32 %v464, 16
        %v547 = vor.u32 %v545, %v543
        %v549 = vshll.u32 %v465, 16
        %v551 = vrot.slane %v549, 1
        %v552 = vsel %vm468, %v547, %v551
        %v553 = vshrl.u32 %v465, 16
        %v555 = vor.u32 %v553, %v551
        %v557 = vshll.u32 %v466, 16
        %v559 = vrot.slane %v557, 1
        %v560 = vsel %vm468, %v555, %v559
        %v561 = vshrl.u32 %v466, 16
        %v563 = vor.u32 %v561, %v559
        %v565 = vshll.u32 %v467, 16
        %v567 = vrot.slane %v565, 1
        %v568 = vsel %vm468, %v563, %v567
        %v597 = vunpack.c.l.b16 %v389
        %v598 = vunpack.c.l.b16 %v390
        %v599 = vunpack.c.l.b16 %v391
        %v600 = vunpack.c.l.b16 %v392
        %v601 = vunpack.c.l.b16 %v393
        %v602 = vunpack.c.l.b16 %v394
        %v603 = vunpack.c.l.b16 %v395
        %v604 = vunpack.c.l.b16 %v396
        %v605 = vunpack.c.l.b16 %v397
        %v606 = vunpack.c.l.b16 %v398
        %v607 = vunpack.c.l.b16 %v399
        %v608 = vunpack.c.l.b16 %v400
        %v609 = vunpack.c.l.b16 %v401
        %v610 = vunpack.c.l.b16 %v402
        %v611 = vunpack.c.l.b16 %v403
        %v612 = vunpack.c.l.b16 %v404
        %v613 = vpack.c.b16 %v598, %v597
        %v614 = vpack.c.b16 %v600, %v599
        %v615 = vpack.c.b16 %v602, %v601
        %v616 = vpack.c.b16 %v604, %v603
        %v617 = vpack.c.b16 %v606, %v605
        %v618 = vpack.c.b16 %v608, %v607
        %v619 = vpack.c.b16 %v610, %v609
        %v620 = vpack.c.b16 %v612, %v611
        %629 = vmatprep.subr.bf16.mxu0 0
        %630 = vmatpush1.bf16.msra.mxu0 %v620
        %631 = vmatprep.subr.bf16.mxu0 0
        %632 = vmatpush1.bf16.msra.mxu0 %v619
        %633 = vmatprep.subr.bf16.mxu0 0
        %634 = vmatpush1.bf16.msra.mxu0 %v618
        %635 = vmatprep.subr.bf16.mxu0 0
        %636 = vmatpush1.bf16.msra.mxu0 %v617
        %637 = vmatprep.subr.bf16.mxu0 0
        %638 = vmatpush1.bf16.msra.mxu0 %v616
        %639 = vmatprep.subr.bf16.mxu0 0
        %640 = vmatpush1.bf16.msra.mxu0 %v615
        %641 = vmatprep.subr.bf16.mxu0 0
        %642 = vmatpush1.bf16.msra.mxu0 %v614
        %643 = vmatprep.subr.bf16.mxu0 0
        %644 = vmatpush1.bf16.msra.mxu0 %v613
        %645 = vmatprep.subr.bf16.mxu0 0
        %646 = vmatpush2.bf16.msra.mxu0 0
        %647 = vmatprep.subr.bf16.mxu0 0
        %648 = vmatpush2.bf16.msra.mxu0 0
        %649 = vmatprep.subr.bf16.mxu0 0
        %650 = vmatpush2.bf16.msra.mxu0 0
        %651 = vmatprep.subr.bf16.mxu0 0
        %652 = vmatpush2.bf16.msra.mxu0 0
        %653 = vmatprep.subr.bf16.mxu0 0
        %654 = vmatpush2.bf16.msra.mxu0 0
        %655 = vmatprep.subr.bf16.mxu0 0
        %656 = vmatpush2.bf16.msra.mxu0 0
        %657 = vmatprep.subr.bf16.mxu0 0
        %658 = vmatpush2.bf16.msra.mxu0 0
        %659 = vmatprep.subr.bf16.mxu0 0
        %660 = vmatpush2.bf16.msra.mxu0 0
        %661 = vmatprep.mubr.bf16.mxu0 0
        %662 = vmatmul.mubr.bf16.gmra.mxu0 %v480
        %v663 = vpop.f32.mrf.mxu0
        %v664 = vadd.f32 0.0, %v663
        %v665 = vpop.f32.mrf.mxu0
        %v666 = vpop.f32.mrf.mxu0
        %v667 = vadd.f32 0.0, %v666
        %v668 = vpop.f32.mrf.mxu0
        %669 = vmatprep.mubr.bf16.mxu0 0
        %670 = vmatmul.mubr.bf16.gmra.mxu0 %v488
        %v671 = vpop.f32.mrf.mxu0
        %v672 = vadd.f32 0.0, %v671
        %v673 = vpop.f32.mrf.mxu0
        %v674 = vpop.f32.mrf.mxu0
        %v675 = vadd.f32 0.0, %v674
        %v676 = vpop.f32.mrf.mxu0
        %677 = vmatprep.mubr.bf16.mxu0 0
        %678 = vmatmul.mubr.bf16.gmra.mxu0 %v496
        %v679 = vpop.f32.mrf.mxu0
        %v680 = vadd.f32 0.0, %v679
        %v681 = vpop.f32.mrf.mxu0
        %v682 = vpop.f32.mrf.mxu0
        %v683 = vadd.f32 0.0, %v682
        %v684 = vpop.f32.mrf.mxu0
        %685 = vmatprep.mubr.bf16.mxu0 0
        %686 = vmatmul.mubr.bf16.gmra.mxu0 %v504
        %v687 = vpop.f32.mrf.mxu0
        %v688 = vadd.f32 0.0, %v687
        %v689 = vpop.f32.mrf.mxu0
        %v690 = vpop.f32.mrf.mxu0
        %v691 = vadd.f32 0.0, %v690
        %v692 = vpop.f32.mrf.mxu0
        %693 = vmatprep.mubr.bf16.mxu0 0
        %694 = vmatmul.mubr.bf16.gmra.mxu0 %v512
        %v695 = vpop.f32.mrf.mxu0
        %v696 = vadd.f32 0.0, %v695
        %v697 = vpop.f32.mrf.mxu0
        %v698 = vpop.f32.mrf.mxu0
        %v699 = vadd.f32 0.0, %v698
        %v700 = vpop.f32.mrf.mxu0
        %701 = vmatprep.mubr.bf16.mxu0 0
        %702 = vmatmul.mubr.bf16.gmra.mxu0 %v520
        %v703 = vpop.f32.mrf.mxu0
        %v704 = vadd.f32 0.0, %v703
        %v705 = vpop.f32.mrf.mxu0
        %v706 = vpop.f32.mrf.mxu0
        %v707 = vadd.f32 0.0, %v706
        %v708 = vpop.f32.mrf.mxu0
        %709 = vmatprep.mubr.bf16.mxu0 0
        %710 = vmatmul.mubr.bf16.gmra.mxu0 %v528
        %v711 = vpop.f32.mrf.mxu0
        %v712 = vadd.f32 0.0, %v711
        %v713 = vpop.f32.mrf.mxu0
        %v714 = vpop.f32.mrf.mxu0
        %v715 = vadd.f32 0.0, %v714
        %v716 = vpop.f32.mrf.mxu0
        %717 = vmatprep.mubr.bf16.mxu0 0
        %718 = vmatmul.mubr.bf16.gmra.mxu0 %v536
        %v719 = vpop.f32.mrf.mxu0
        %v720 = vadd.f32 0.0, %v719
        %v721 = vpop.f32.mrf.mxu0
        %v722 = vpop.f32.mrf.mxu0
        %v723 = vadd.f32 0.0, %v722
        %v724 = vpop.f32.mrf.mxu0
        %725 = vmatprep.mubr.bf16.mxu0 0
        %726 = vmatmul.mubr.bf16.gmra.mxu0 %v544
        %v727 = vpop.f32.mrf.mxu0
        %v728 = vadd.f32 0.0, %v727
        %v729 = vpop.f32.mrf.mxu0
        %v730 = vpop.f32.mrf.mxu0
        %v731 = vadd.f32 0.0, %v730
        %v732 = vpop.f32.mrf.mxu0
        %733 = vmatprep.mubr.bf16.mxu0 0
        %734 = vmatmul.mubr.bf16.gmra.mxu0 %v552
        %v735 = vpop.f32.mrf.mxu0
        %v736 = vadd.f32 0.0, %v735
        %v737 = vpop.f32.mrf.mxu0
        %v738 = vpop.f32.mrf.mxu0
        %v739 = vadd.f32 0.0, %v738
        %v740 = vpop.f32.mrf.mxu0
        %741 = vmatprep.mubr.bf16.mxu0 0
        %742 = vmatmul.mubr.bf16.gmra.mxu0 %v560
        %v743 = vpop.f32.mrf.mxu0
        %v744 = vadd.f32 0.0, %v743
        %v745 = vpop.f32.mrf.mxu0
        %v746 = vpop.f32.mrf.mxu0
        %v747 = vadd.f32 0.0, %v746
        %v748 = vpop.f32.mrf.mxu0
        %749 = vmatprep.mubr.bf16.mxu0 0
        %750 = vmatmul.mubr.bf16.gmra.mxu0 %v568
        %v751 = vpop.f32.mrf.mxu0
        %v752 = vadd.f32 0.0, %v751
        %v753 = vpop.f32.mrf.mxu0
        %v754 = vpop.f32.mrf.mxu0
        %v755 = vadd.f32 0.0, %v754
        %v756 = vpop.f32.mrf.mxu0
        %757 = vdwg.mxu0
        %v786 = vunpack.c.l.b16 %v371
        %v787 = vunpack.c.l.b16 %v372
        %v788 = vunpack.c.l.b16 %v373
        %v789 = vunpack.c.l.b16 %v374
        %v790 = vunpack.c.l.b16 %v375
        %v791 = vunpack.c.l.b16 %v376
        %v792 = vunpack.c.l.b16 %v377
        %v793 = vunpack.c.l.b16 %v378
        %v794 = vunpack.c.l.b16 %v379
        %v795 = vunpack.c.l.b16 %v380
        %v796 = vunpack.c.l.b16 %v381
        %v797 = vunpack.c.l.b16 %v382
        %v798 = vunpack.c.l.b16 %v383
        %v799 = vunpack.c.l.b16 %v384
        %v800 = vunpack.c.l.b16 %v385
        %v801 = vunpack.c.l.b16 %v386
        %v802 = vpack.c.b16 %v787, %v786
        %v803 = vpack.c.b16 %v789, %v788
        %v804 = vpack.c.b16 %v791, %v790
        %v805 = vpack.c.b16 %v793, %v792
        %v806 = vpack.c.b16 %v795, %v794
        %v807 = vpack.c.b16 %v797, %v796
        %v808 = vpack.c.b16 %v799, %v798
        %v809 = vpack.c.b16 %v801, %v800
        %818 = vmatprep.subr.bf16.mxu0 0
        %819 = vmatpush1.bf16.msra.mxu0 %v809
        %820 = vmatprep.subr.bf16.mxu0 0
        %821 = vmatpush1.bf16.msra.mxu0 %v808
        %822 = vmatprep.subr.bf16.mxu0 0
        %823 = vmatpush1.bf16.msra.mxu0 %v807
        %824 = vmatprep.subr.bf16.mxu0 0
        %825 = vmatpush1.bf16.msra.mxu0 %v806
        %826 = vmatprep.subr.bf16.mxu0 0
        %827 = vmatpush1.bf16.msra.mxu0 %v805
        %828 = vmatprep.subr.bf16.mxu0 0
        %829 = vmatpush1.bf16.msra.mxu0 %v804
        %830 = vmatprep.subr.bf16.mxu0 0
        %831 = vmatpush1.bf16.msra.mxu0 %v803
        %832 = vmatprep.subr.bf16.mxu0 0
        %833 = vmatpush1.bf16.msra.mxu0 %v802
        %834 = vmatprep.subr.bf16.mxu0 0
        %835 = vmatpush2.bf16.msra.mxu0 0
        %836 = vmatprep.subr.bf16.mxu0 0
        %837 = vmatpush2.bf16.msra.mxu0 0
        %838 = vmatprep.subr.bf16.mxu0 0
        %839 = vmatpush2.bf16.msra.mxu0 0
        %840 = vmatprep.subr.bf16.mxu0 0
        %841 = vmatpush2.bf16.msra.mxu0 0
        %842 = vmatprep.subr.bf16.mxu0 0
        %843 = vmatpush2.bf16.msra.mxu0 0
        %844 = vmatprep.subr.bf16.mxu0 0
        %845 = vmatpush2.bf16.msra.mxu0 0
        %846 = vmatprep.subr.bf16.mxu0 0
        %847 = vmatpush2.bf16.msra.mxu0 0
        %848 = vmatprep.subr.bf16.mxu0 0
        %849 = vmatpush2.bf16.msra.mxu0 0
        %850 = vmatprep.mubr.bf16.mxu0 0
        %851 = vmatmul.mubr.bf16.gmra.mxu0 %v455
        %v852 = vpop.f32.mrf.mxu0
        %v853 = vadd.f32 %v664, %v852
        %v854 = vpop.f32.mrf.mxu0
        %v855 = vpop.f32.mrf.mxu0
        %v856 = vadd.f32 %v667, %v855
        %v857 = vpop.f32.mrf.mxu0
        %858 = vmatprep.mubr.bf16.mxu0 0
        %859 = vmatmul.mubr.bf16.gmra.mxu0 %v456
        %v860 = vpop.f32.mrf.mxu0
        %v861 = vadd.f32 %v672, %v860
        %v862 = vpop.f32.mrf.mxu0
        %v863 = vpop.f32.mrf.mxu0
        %v864 = vadd.f32 %v675, %v863
        %v865 = vpop.f32.mrf.mxu0
        %866 = vmatprep.mubr.bf16.mxu0 0
        %867 = vmatmul.mubr.bf16.gmra.mxu0 %v457
        %v868 = vpop.f32.mrf.mxu0
        %v869 = vadd.f32 %v680, %v868
        %v870 = vpop.f32.mrf.mxu0
        %v871 = vpop.f32.mrf.mxu0
        %v872 = vadd.f32 %v683, %v871
        %v873 = vpop.f32.mrf.mxu0
        %874 = vmatprep.mubr.bf16.mxu0 0
        %875 = vmatmul.mubr.bf16.gmra.mxu0 %v458
        %v876 = vpop.f32.mrf.mxu0
        %v877 = vadd.f32 %v688, %v876
        %v878 = vpop.f32.mrf.mxu0
        %v879 = vpop.f32.mrf.mxu0
        %v880 = vadd.f32 %v691, %v879
        %v881 = vpop.f32.mrf.mxu0
        %882 = vmatprep.mubr.bf16.mxu0 0
        %883 = vmatmul.mubr.bf16.gmra.mxu0 %v459
        %v884 = vpop.f32.mrf.mxu0
        %v885 = vadd.f32 %v696, %v884
        %v886 = vpop.f32.mrf.mxu0
        %v887 = vpop.f32.mrf.mxu0
        %v888 = vadd.f32 %v699, %v887
        %v889 = vpop.f32.mrf.mxu0
        %890 = vmatprep.mubr.bf16.mxu0 0
        %891 = vmatmul.mubr.bf16.gmra.mxu0 %v460
        %v892 = vpop.f32.mrf.mxu0
        %v893 = vadd.f32 %v704, %v892
        %v894 = vpop.f32.mrf.mxu0
        %v895 = vpop.f32.mrf.mxu0
        %v896 = vadd.f32 %v707, %v895
        %v897 = vpop.f32.mrf.mxu0
        %898 = vmatprep.mubr.bf16.mxu0 0
        %899 = vmatmul.mubr.bf16.gmra.mxu0 %v461
        %v900 = vpop.f32.mrf.mxu0
        %v901 = vadd.f32 %v712, %v900
        %v902 = vpop.f32.mrf.mxu0
        %v903 = vpop.f32.mrf.mxu0
        %v904 = vadd.f32 %v715, %v903
        %v905 = vpop.f32.mrf.mxu0
        %906 = vmatprep.mubr.bf16.mxu0 0
        %907 = vmatmul.mubr.bf16.gmra.mxu0 %v462
        %v908 = vpop.f32.mrf.mxu0
        %v909 = vadd.f32 %v720, %v908
        %v910 = vpop.f32.mrf.mxu0
        %v911 = vpop.f32.mrf.mxu0
        %v912 = vadd.f32 %v723, %v911
        %v913 = vpop.f32.mrf.mxu0
        %914 = vmatprep.mubr.bf16.mxu0 0
        %915 = vmatmul.mubr.bf16.gmra.mxu0 %v463
        %v916 = vpop.f32.mrf.mxu0
        %v917 = vadd.f32 %v728, %v916
        %v918 = vpop.f32.mrf.mxu0
        %v919 = vpop.f32.mrf.mxu0
        %v920 = vadd.f32 %v731, %v919
        %v921 = vpop.f32.mrf.mxu0
        %922 = vmatprep.mubr.bf16.mxu0 0
        %923 = vmatmul.mubr.bf16.gmra.mxu0 %v464
        %v924 = vpop.f32.mrf.mxu0
        %v925 = vadd.f32 %v736, %v924
        %v926 = vpop.f32.mrf.mxu0
        %v927 = vpop.f32.mrf.mxu0
        %v928 = vadd.f32 %v739, %v927
        %v929 = vpop.f32.mrf.mxu0
        %930 = vmatprep.mubr.bf16.mxu0 0
        %931 = vmatmul.mubr.bf16.gmra.mxu0 %v465
        %v932 = vpop.f32.mrf.mxu0
        %v933 = vadd.f32 %v744, %v932
        %v934 = vpop.f32.mrf.mxu0
        %v935 = vpop.f32.mrf.mxu0
        %v936 = vadd.f32 %v747, %v935
        %v937 = vpop.f32.mrf.mxu0
        %938 = vmatprep.mubr.bf16.mxu0 0
        %939 = vmatmul.mubr.bf16.gmra.mxu0 %v466
        %v940 = vpop.f32.mrf.mxu0
        %v941 = vadd.f32 %v752, %v940
        %v942 = vpop.f32.mrf.mxu0
        %v943 = vpop.f32.mrf.mxu0
        %v944 = vadd.f32 %v755, %v943
        %v945 = vpop.f32.mrf.mxu0
        %946 = vdwg.mxu0
        %v947 = vld [vmem:[%s283] sm:$0xe]
        %s948 = scalar_lea.vmem [#allocation4], 128
        %v949 = vld [vmem:[%s948] sm:$0xf]
        %v950 = vld [vmem:[%s948 + $0x4] sm:$0xf]
        %v951 = vld [vmem:[%s948 + $0x8] sm:$0xf]
        %v952 = vld [vmem:[%s948 + $0xc] sm:$0xf]
        %v953 = vld [vmem:[%s948 + $0x10] sm:$0xf]
        %v954 = vld [vmem:[%s948 + $0x14] sm:$0xf]
        %v955 = vld [vmem:[%s948 + $0x18] sm:$0xf]
        %v956 = vld [vmem:[%s948 + $0x1c] sm:$0xf]
        %v957 = vld [vmem:[%s948 + $0x20] sm:$0xf]
        %v958 = vld [vmem:[%s948 + $0x24] sm:$0xf]
        %v959 = vld [vmem:[%s948 + $0x28] sm:$0xf]
        %v960 = vld [vmem:[%s948 + $0x2c] sm:$0xf]
        %v961 = vld [vmem:[%s948 + $0x30] sm:$0xf]
        %v962 = vld [vmem:[%s948 + $0x34] sm:$0xf]
        %v963 = vld [vmem:[%s948 + $0x38] sm:$0xf]
        %v964 = vld [vmem:[%s948 + $0x3c] sm:$0xf]
        %v966 = vunpack.c.l.b16 %v947
        %v967 = vpack.c.b16 %v431, %v966
        %vm968 = vcmask 1046528
        %v969 = vrot.slane %v967, 1
        %v970 = vrot.slane %v456, 1
        %v971 = vsel %vm968, %v969, %v970
        %v972 = vrot.slane %v457, 1
        %v973 = vsel %vm968, %v970, %v972
        %v974 = vrot.slane %v458, 1
        %v975 = vsel %vm968, %v972, %v974
        %v976 = vrot.slane %v459, 1
        %v977 = vsel %vm968, %v974, %v976
        %v978 = vrot.slane %v460, 1
        %v979 = vsel %vm968, %v976, %v978
        %v980 = vrot.slane %v461, 1
        %v981 = vsel %vm968, %v978, %v980
        %v982 = vrot.slane %v462, 1
        %v983 = vsel %vm968, %v980, %v982
        %v984 = vrot.slane %v463, 1
        %v985 = vsel %vm968, %v982, %v984
        %v986 = vrot.slane %v464, 1
        %v987 = vsel %vm968, %v984, %v986
        %v988 = vrot.slane %v465, 1
        %v989 = vsel %vm968, %v986, %v988
        %v990 = vrot.slane %v466, 1
        %v991 = vsel %vm968, %v988, %v990
        %v992 = vrot.slane %v467, 1
        %v993 = vsel %vm968, %v990, %v992
        %v1022 = vunpack.c.l.b16 %v949
        %v1023 = vunpack.c.l.b16 %v950
        %v1024 = vunpack.c.l.b16 %v951
        %v1025 = vunpack.c.l.b16 %v952
        %v1026 = vunpack.c.l.b16 %v953
        %v1027 = vunpack.c.l.b16 %v954
        %v1028 = vunpack.c.l.b16 %v955
        %v1029 = vunpack.c.l.b16 %v956
        %v1030 = vunpack.c.l.b16 %v957
        %v1031 = vunpack.c.l.b16 %v958
        %v1032 = vunpack.c.l.b16 %v959
        %v1033 = vunpack.c.l.b16 %v960
        %v1034 = vunpack.c.l.b16 %v961
        %v1035 = vunpack.c.l.b16 %v962
        %v1036 = vunpack.c.l.b16 %v963
        %v1037 = vunpack.c.l.b16 %v964
        %v1038 = vpack.c.b16 %v1023, %v1022
        %v1039 = vpack.c.b16 %v1025, %v1024
        %v1040 = vpack.c.b16 %v1027, %v1026
        %v1041 = vpack.c.b16 %v1029, %v1028
        %v1042 = vpack.c.b16 %v1031, %v1030
        %v1043 = vpack.c.b16 %v1033, %v1032
        %v1044 = vpack.c.b16 %v1035, %v1034
        %v1045 = vpack.c.b16 %v1037, %v1036
        %1054 = vmatprep.subr.bf16.mxu0 0
        %1055 = vmatpush1.bf16.msra.mxu0 %v1045
        %1056 = vmatprep.subr.bf16.mxu0 0
        %1057 = vmatpush1.bf16.msra.mxu0 %v1044
        %1058 = vmatprep.subr.bf16.mxu0 0
        %1059 = vmatpush1.bf16.msra.mxu0 %v1043
        %1060 = vmatprep.subr.bf16.mxu0 0
        %1061 = vmatpush1.bf16.msra.mxu0 %v1042
        %1062 = vmatprep.subr.bf16.mxu0 0
        %1063 = vmatpush1.bf16.msra.mxu0 %v1041
        %1064 = vmatprep.subr.bf16.mxu0 0
        %1065 = vmatpush1.bf16.msra.mxu0 %v1040
        %1066 = vmatprep.subr.bf16.mxu0 0
        %1067 = vmatpush1.bf16.msra.mxu0 %v1039
        %1068 = vmatprep.subr.bf16.mxu0 0
        %1069 = vmatpush1.bf16.msra.mxu0 %v1038
        %1070 = vmatprep.subr.bf16.mxu0 0
        %1071 = vmatpush2.bf16.msra.mxu0 0
        %1072 = vmatprep.subr.bf16.mxu0 0
        %1073 = vmatpush2.bf16.msra.mxu0 0
        %1074 = vmatprep.subr.bf16.mxu0 0
        %1075 = vmatpush2.bf16.msra.mxu0 0
        %1076 = vmatprep.subr.bf16.mxu0 0
        %1077 = vmatpush2.bf16.msra.mxu0 0
        %1078 = vmatprep.subr.bf16.mxu0 0
        %1079 = vmatpush2.bf16.msra.mxu0 0
        %1080 = vmatprep.subr.bf16.mxu0 0
        %1081 = vmatpush2.bf16.msra.mxu0 0
        %1082 = vmatprep.subr.bf16.mxu0 0
        %1083 = vmatpush2.bf16.msra.mxu0 0
        %1084 = vmatprep.subr.bf16.mxu0 0
        %1085 = vmatpush2.bf16.msra.mxu0 0
        %1086 = vmatprep.mubr.bf16.mxu0 0
        %1087 = vmatmul.mubr.bf16.gmra.mxu0 %v971
        %v1088 = vpop.f32.mrf.mxu0
        %v1089 = vadd.f32 0.0, %v1088
        %v1090 = vpop.f32.mrf.mxu0
        %v1091 = vpop.f32.mrf.mxu0
        %v1092 = vadd.f32 0.0, %v1091
        %v1093 = vpop.f32.mrf.mxu0
        %1094 = vmatprep.mubr.bf16.mxu0 0
        %1095 = vmatmul.mubr.bf16.gmra.mxu0 %v973
        %v1096 = vpop.f32.mrf.mxu0
        %v1097 = vadd.f32 0.0, %v1096
        %v1098 = vpop.f32.mrf.mxu0
        %v1099 = vpop.f32.mrf.mxu0
        %v1100 = vadd.f32 0.0, %v1099
        %v1101 = vpop.f32.mrf.mxu0
        %1102 = vmatprep.mubr.bf16.mxu0 0
        %1103 = vmatmul.mubr.bf16.gmra.mxu0 %v975
        %v1104 = vpop.f32.mrf.mxu0
        %v1105 = vadd.f32 0.0, %v1104
        %v1106 = vpop.f32.mrf.mxu0
        %v1107 = vpop.f32.mrf.mxu0
        %v1108 = vadd.f32 0.0, %v1107
        %v1109 = vpop.f32.mrf.mxu0
        %1110 = vmatprep.mubr.bf16.mxu0 0
        %1111 = vmatmul.mubr.bf16.gmra.mxu0 %v977
        %v1112 = vpop.f32.mrf.mxu0
        %v1113 = vadd.f32 0.0, %v1112
        %v1114 = vpop.f32.mrf.mxu0
        %v1115 = vpop.f32.mrf.mxu0
        %v1116 = vadd.f32 0.0, %v1115
        %v1117 = vpop.f32.mrf.mxu0
        %1118 = vmatprep.mubr.bf16.mxu0 0
        %1119 = vmatmul.mubr.bf16.gmra.mxu0 %v979
        %v1120 = vpop.f32.mrf.mxu0
        %v1121 = vadd.f32 0.0, %v1120
        %v1122 = vpop.f32.mrf.mxu0
        %v1123 = vpop.f32.mrf.mxu0
        %v1124 = vadd.f32 0.0, %v1123
        %v1125 = vpop.f32.mrf.mxu0
        %1126 = vmatprep.mubr.bf16.mxu0 0
        %1127 = vmatmul.mubr.bf16.gmra.mxu0 %v981
        %v1128 = vpop.f32.mrf.mxu0
        %v1129 = vadd.f32 0.0, %v1128
        %v1130 = vpop.f32.mrf.mxu0
        %v1131 = vpop.f32.mrf.mxu0
        %v1132 = vadd.f32 0.0, %v1131
        %v1133 = vpop.f32.mrf.mxu0
        %1134 = vmatprep.mubr.bf16.mxu0 0
        %1135 = vmatmul.mubr.bf16.gmra.mxu0 %v983
        %v1136 = vpop.f32.mrf.mxu0
        %v1137 = vadd.f32 0.0, %v1136
        %v1138 = vpop.f32.mrf.mxu0
        %v1139 = vpop.f32.mrf.mxu0
        %v1140 = vadd.f32 0.0, %v1139
        %v1141 = vpop.f32.mrf.mxu0
        %1142 = vmatprep.mubr.bf16.mxu0 0
        %1143 = vmatmul.mubr.bf16.gmra.mxu0 %v985
        %v1144 = vpop.f32.mrf.mxu0
        %v1145 = vadd.f32 0.0, %v1144
        %v1146 = vpop.f32.mrf.mxu0
        %v1147 = vpop.f32.mrf.mxu0
        %v1148 = vadd.f32 0.0, %v1147
        %v1149 = vpop.f32.mrf.mxu0
        %1150 = vmatprep.mubr.bf16.mxu0 0
        %1151 = vmatmul.mubr.bf16.gmra.mxu0 %v987
        %v1152 = vpop.f32.mrf.mxu0
        %v1153 = vadd.f32 0.0, %v1152
        %v1154 = vpop.f32.mrf.mxu0
        %v1155 = vpop.f32.mrf.mxu0
        %v1156 = vadd.f32 0.0, %v1155
        %v1157 = vpop.f32.mrf.mxu0
        %1158 = vmatprep.mubr.bf16.mxu0 0
        %1159 = vmatmul.mubr.bf16.gmra.mxu0 %v989
        %v1160 = vpop.f32.mrf.mxu0
        %v1161 = vadd.f32 0.0, %v1160
        %v1162 = vpop.f32.mrf.mxu0
        %v1163 = vpop.f32.mrf.mxu0
        %v1164 = vadd.f32 0.0, %v1163
        %v1165 = vpop.f32.mrf.mxu0
        %1166 = vmatprep.mubr.bf16.mxu0 0
        %1167 = vmatmul.mubr.bf16.gmra.mxu0 %v991
        %v1168 = vpop.f32.mrf.mxu0
        %v1169 = vadd.f32 0.0, %v1168
        %v1170 = vpop.f32.mrf.mxu0
        %v1171 = vpop.f32.mrf.mxu0
        %v1172 = vadd.f32 0.0, %v1171
        %v1173 = vpop.f32.mrf.mxu0
        %1174 = vmatprep.mubr.bf16.mxu0 0
        %1175 = vmatmul.mubr.bf16.gmra.mxu0 %v993
        %v1176 = vpop.f32.mrf.mxu0
        %v1177 = vadd.f32 0.0, %v1176
        %v1178 = vpop.f32.mrf.mxu0
        %v1179 = vpop.f32.mrf.mxu0
        %v1180 = vadd.f32 0.0, %v1179
        %v1181 = vpop.f32.mrf.mxu0
        %1182 = vdwg.mxu0
        %v1183 = vadd.f32 %v853, %v1089
        %v1184 = vadd.f32 %v856, %v1092
        %v1185 = vadd.f32 %v861, %v1097
        %v1186 = vadd.f32 %v864, %v1100
        %v1187 = vadd.f32 %v869, %v1105
        %v1188 = vadd.f32 %v872, %v1108
        %v1189 = vadd.f32 %v877, %v1113
        %v1190 = vadd.f32 %v880, %v1116
        %v1191 = vadd.f32 %v885, %v1121
        %v1192 = vadd.f32 %v888, %v1124
        %v1193 = vadd.f32 %v893, %v1129
        %v1194 = vadd.f32 %v896, %v1132
        %v1195 = vadd.f32 %v901, %v1137
        %v1196 = vadd.f32 %v904, %v1140
        %v1197 = vadd.f32 %v909, %v1145
        %v1198 = vadd.f32 %v912, %v1148
        %v1199 = vadd.f32 %v917, %v1153
        %v1200 = vadd.f32 %v920, %v1156
        %v1201 = vadd.f32 %v925, %v1161
        %v1202 = vadd.f32 %v928, %v1164
        %v1203 = vadd.f32 %v933, %v1169
        %v1204 = vadd.f32 %v936, %v1172
        %v1205 = vadd.f32 %v941, %v1177
        %v1206 = vadd.f32 %v944, %v1180
        %v1207 = vld [vmem:[%s283 + $0xc] sm:$0xf]
        %v1208 = vld [vmem:[%s283 + $0x10] sm:$0xf]
        %v1209 = vld [vmem:[%s283 + $0x14] sm:$0xf]
        %v1210 = vld [vmem:[%s283 + $0x18] sm:$0xf]
        %v1211 = vld [vmem:[%s283 + $0x1c] sm:$0xf]
        %v1212 = vld [vmem:[%s283 + $0x20] sm:$0xf]
        %v1213 = vld [vmem:[%s283 + $0x24] sm:$0xf]
        %v1214 = vld [vmem:[%s283 + $0x28] sm:$0xf]
        %v1215 = vld [vmem:[%s283 + $0x2c] sm:$0xf]
        %v1216 = vld [vmem:[%s283 + $0x30] sm:$0xf]
        %v1217 = vld [vmem:[%s283 + $0x34] sm:$0xf]
        %v1218 = vld [vmem:[%s283 + $0x38] sm:$0xf]
        %v1219 = vld [vmem:[%s283 + $0x3c] sm:$0xf]
        %v1220 = vld [vmem:[%s283 + $0x40] sm:$0xf]
        %v1221 = vld [vmem:[%s283 + $0x44] sm:$0xf]
        %v1222 = vld [vmem:[%s283 + $0x48] sm:$0xf]
        %v1223 = vld [vmem:[%s283 + $0x4c] sm:$0xf]
        %v1224 = vld [vmem:[%s283 + $0x50] sm:$0xf]
        %v1225 = vld [vmem:[%s283 + $0x54] sm:$0xf]
        %v1226 = vld [vmem:[%s283 + $0x58] sm:$0xf]
        %v1227 = vld [vmem:[%s283 + $0x5c] sm:$0xf]
        %v1228 = vld [vmem:[%s283 + $0x60] sm:$0xf]
        %v1229 = vld [vmem:[%s283 + $0x64] sm:$0xf]
        %v1230 = vld [vmem:[%s283 + $0x68] sm:$0xf]
        %s1231 = scalar_lea.vmem [#allocation4], 192
        %v1232 = vld [vmem:[%s1231] sm:$0xf]
        %v1233 = vld [vmem:[%s1231 + $0x4] sm:$0xf]
        %v1234 = vld [vmem:[%s1231 + $0x8] sm:$0xf]
        %v1235 = vld [vmem:[%s1231 + $0xc] sm:$0xf]
        %v1236 = vld [vmem:[%s1231 + $0x10] sm:$0xf]
        %v1237 = vld [vmem:[%s1231 + $0x14] sm:$0xf]
        %v1238 = vld [vmem:[%s1231 + $0x18] sm:$0xf]
        %v1239 = vld [vmem:[%s1231 + $0x1c] sm:$0xf]
        %v1240 = vld [vmem:[%s1231 + $0x20] sm:$0xf]
        %v1241 = vld [vmem:[%s1231 + $0x24] sm:$0xf]
        %v1242 = vld [vmem:[%s1231 + $0x28] sm:$0xf]
        %v1243 = vld [vmem:[%s1231 + $0x2c] sm:$0xf]
        %v1244 = vld [vmem:[%s1231 + $0x30] sm:$0xf]
        %v1245 = vld [vmem:[%s1231 + $0x34] sm:$0xf]
        %v1246 = vld [vmem:[%s1231 + $0x38] sm:$0xf]
        %v1247 = vld [vmem:[%s1231 + $0x3c] sm:$0xf]
        %v1272 = vunpack.c.l.b16 %v1207
        %v1273 = vunpack.c.l.b16 %v1208
        %v1274 = vunpack.c.l.b16 %v1209
        %v1275 = vunpack.c.l.b16 %v1210
        %v1276 = vunpack.c.l.b16 %v1211
        %v1277 = vunpack.c.l.b16 %v1212
        %v1278 = vunpack.c.l.b16 %v1213
        %v1279 = vunpack.c.l.b16 %v1214
        %v1280 = vunpack.c.l.b16 %v1215
        %v1281 = vunpack.c.l.b16 %v1216
        %v1282 = vunpack.c.l.b16 %v1217
        %v1283 = vunpack.c.l.b16 %v1218
        %v1284 = vunpack.c.l.b16 %v1219
        %v1285 = vunpack.c.l.b16 %v1220
        %v1286 = vunpack.c.l.b16 %v1221
        %v1287 = vunpack.c.l.b16 %v1222
        %v1288 = vunpack.c.l.b16 %v1223
        %v1289 = vunpack.c.l.b16 %v1224
        %v1290 = vunpack.c.l.b16 %v1225
        %v1291 = vunpack.c.l.b16 %v1226
        %v1292 = vunpack.c.l.b16 %v1227
        %v1293 = vunpack.c.l.b16 %v1228
        %v1294 = vunpack.c.l.b16 %v1229
        %v1295 = vunpack.c.l.b16 %v1230
        %v1296 = vpack.c.b16 %v1273, %v1272
        %v1297 = vpack.c.b16 %v1275, %v1274
        %v1298 = vpack.c.b16 %v1277, %v1276
        %v1299 = vpack.c.b16 %v1279, %v1278
        %v1300 = vpack.c.b16 %v1281, %v1280
        %v1301 = vpack.c.b16 %v1283, %v1282
        %v1302 = vpack.c.b16 %v1285, %v1284
        %v1303 = vpack.c.b16 %v1287, %v1286
        %v1304 = vpack.c.b16 %v1289, %v1288
        %v1305 = vpack.c.b16 %v1291, %v1290
        %v1306 = vpack.c.b16 %v1293, %v1292
        %v1307 = vpack.c.b16 %v1295, %v1294
        %v1336 = vunpack.c.l.b16 %v1232
        %v1337 = vunpack.c.l.b16 %v1233
        %v1338 = vunpack.c.l.b16 %v1234
        %v1339 = vunpack.c.l.b16 %v1235
        %v1340 = vunpack.c.l.b16 %v1236
        %v1341 = vunpack.c.l.b16 %v1237
        %v1342 = vunpack.c.l.b16 %v1238
        %v1343 = vunpack.c.l.b16 %v1239
        %v1344 = vunpack.c.l.b16 %v1240
        %v1345 = vunpack.c.l.b16 %v1241
        %v1346 = vunpack.c.l.b16 %v1242
        %v1347 = vunpack.c.l.b16 %v1243
        %v1348 = vunpack.c.l.b16 %v1244
        %v1349 = vunpack.c.l.b16 %v1245
        %v1350 = vunpack.c.l.b16 %v1246
        %v1351 = vunpack.c.l.b16 %v1247
        %v1352 = vpack.c.b16 %v1337, %v1336
        %v1353 = vpack.c.b16 %v1339, %v1338
        %v1354 = vpack.c.b16 %v1341, %v1340
        %v1355 = vpack.c.b16 %v1343, %v1342
        %v1356 = vpack.c.b16 %v1345, %v1344
        %v1357 = vpack.c.b16 %v1347, %v1346
        %v1358 = vpack.c.b16 %v1349, %v1348
        %v1359 = vpack.c.b16 %v1351, %v1350
        %1368 = vmatprep.subr.bf16.mxu0 0
        %1369 = vmatpush1.bf16.msra.mxu0 %v1359
        %1370 = vmatprep.subr.bf16.mxu0 0
        %1371 = vmatpush1.bf16.msra.mxu0 %v1358
        %1372 = vmatprep.subr.bf16.mxu0 0
        %1373 = vmatpush1.bf16.msra.mxu0 %v1357
        %1374 = vmatprep.subr.bf16.mxu0 0
        %1375 = vmatpush1.bf16.msra.mxu0 %v1356
        %1376 = vmatprep.subr.bf16.mxu0 0
        %1377 = vmatpush1.bf16.msra.mxu0 %v1355
        %1378 = vmatprep.subr.bf16.mxu0 0
        %1379 = vmatpush1.bf16.msra.mxu0 %v1354
        %1380 = vmatprep.subr.bf16.mxu0 0
        %1381 = vmatpush1.bf16.msra.mxu0 %v1353
        %1382 = vmatprep.subr.bf16.mxu0 0
        %1383 = vmatpush1.bf16.msra.mxu0 %v1352
        %1384 = vmatprep.subr.bf16.mxu0 0
        %1385 = vmatpush2.bf16.msra.mxu0 0
        %1386 = vmatprep.subr.bf16.mxu0 0
        %1387 = vmatpush2.bf16.msra.mxu0 0
        %1388 = vmatprep.subr.bf16.mxu0 0
        %1389 = vmatpush2.bf16.msra.mxu0 0
        %1390 = vmatprep.subr.bf16.mxu0 0
        %1391 = vmatpush2.bf16.msra.mxu0 0
        %1392 = vmatprep.subr.bf16.mxu0 0
        %1393 = vmatpush2.bf16.msra.mxu0 0
        %1394 = vmatprep.subr.bf16.mxu0 0
        %1395 = vmatpush2.bf16.msra.mxu0 0
        %1396 = vmatprep.subr.bf16.mxu0 0
        %1397 = vmatpush2.bf16.msra.mxu0 0
        %1398 = vmatprep.subr.bf16.mxu0 0
        %1399 = vmatpush2.bf16.msra.mxu0 0
        %1400 = vmatprep.mubr.bf16.mxu0 0
        %1401 = vmatmul.mubr.bf16.gmra.mxu0 %v1296
        %v1402 = vpop.f32.mrf.mxu0
        %v1403 = vadd.f32 0.0, %v1402
        %v1404 = vpop.f32.mrf.mxu0
        %v1405 = vpop.f32.mrf.mxu0
        %v1406 = vadd.f32 0.0, %v1405
        %v1407 = vpop.f32.mrf.mxu0
        %1408 = vmatprep.mubr.bf16.mxu0 0
        %1409 = vmatmul.mubr.bf16.gmra.mxu0 %v1297
        %v1410 = vpop.f32.mrf.mxu0
        %v1411 = vadd.f32 0.0, %v1410
        %v1412 = vpop.f32.mrf.mxu0
        %v1413 = vpop.f32.mrf.mxu0
        %v1414 = vadd.f32 0.0, %v1413
        %v1415 = vpop.f32.mrf.mxu0
        %1416 = vmatprep.mubr.bf16.mxu0 0
        %1417 = vmatmul.mubr.bf16.gmra.mxu0 %v1298
        %v1418 = vpop.f32.mrf.mxu0
        %v1419 = vadd.f32 0.0, %v1418
        %v1420 = vpop.f32.mrf.mxu0
        %v1421 = vpop.f32.mrf.mxu0
        %v1422 = vadd.f32 0.0, %v1421
        %v1423 = vpop.f32.mrf.mxu0
        %1424 = vmatprep.mubr.bf16.mxu0 0
        %1425 = vmatmul.mubr.bf16.gmra.mxu0 %v1299
        %v1426 = vpop.f32.mrf.mxu0
        %v1427 = vadd.f32 0.0, %v1426
        %v1428 = vpop.f32.mrf.mxu0
        %v1429 = vpop.f32.mrf.mxu0
        %v1430 = vadd.f32 0.0, %v1429
        %v1431 = vpop.f32.mrf.mxu0
        %1432 = vmatprep.mubr.bf16.mxu0 0
        %1433 = vmatmul.mubr.bf16.gmra.mxu0 %v1300
        %v1434 = vpop.f32.mrf.mxu0
        %v1435 = vadd.f32 0.0, %v1434
        %v1436 = vpop.f32.mrf.mxu0
        %v1437 = vpop.f32.mrf.mxu0
        %v1438 = vadd.f32 0.0, %v1437
        %v1439 = vpop.f32.mrf.mxu0
        %1440 = vmatprep.mubr.bf16.mxu0 0
        %1441 = vmatmul.mubr.bf16.gmra.mxu0 %v1301
        %v1442 = vpop.f32.mrf.mxu0
        %v1443 = vadd.f32 0.0, %v1442
        %v1444 = vpop.f32.mrf.mxu0
        %v1445 = vpop.f32.mrf.mxu0
        %v1446 = vadd.f32 0.0, %v1445
        %v1447 = vpop.f32.mrf.mxu0
        %1448 = vmatprep.mubr.bf16.mxu0 0
        %1449 = vmatmul.mubr.bf16.gmra.mxu0 %v1302
        %v1450 = vpop.f32.mrf.mxu0
        %v1451 = vadd.f32 0.0, %v1450
        %v1452 = vpop.f32.mrf.mxu0
        %v1453 = vpop.f32.mrf.mxu0
        %v1454 = vadd.f32 0.0, %v1453
        %v1455 = vpop.f32.mrf.mxu0
        %1456 = vmatprep.mubr.bf16.mxu0 0
        %1457 = vmatmul.mubr.bf16.gmra.mxu0 %v1303
        %v1458 = vpop.f32.mrf.mxu0
        %v1459 = vadd.f32 0.0, %v1458
        %v1460 = vpop.f32.mrf.mxu0
        %v1461 = vpop.f32.mrf.mxu0
        %v1462 = vadd.f32 0.0, %v1461
        %v1463 = vpop.f32.mrf.mxu0
        %1464 = vmatprep.mubr.bf16.mxu0 0
        %1465 = vmatmul.mubr.bf16.gmra.mxu0 %v1304
        %v1466 = vpop.f32.mrf.mxu0
        %v1467 = vadd.f32 0.0, %v1466
        %v1468 = vpop.f32.mrf.mxu0
        %v1469 = vpop.f32.mrf.mxu0
        %v1470 = vadd.f32 0.0, %v1469
        %v1471 = vpop.f32.mrf.mxu0
        %1472 = vmatprep.mubr.bf16.mxu0 0
        %1473 = vmatmul.mubr.bf16.gmra.mxu0 %v1305
        %v1474 = vpop.f32.mrf.mxu0
        %v1475 = vadd.f32 0.0, %v1474
        %v1476 = vpop.f32.mrf.mxu0
        %v1477 = vpop.f32.mrf.mxu0
        %v1478 = vadd.f32 0.0, %v1477
        %v1479 = vpop.f32.mrf.mxu0
        %1480 = vmatprep.mubr.bf16.mxu0 0
        %1481 = vmatmul.mubr.bf16.gmra.mxu0 %v1306
        %v1482 = vpop.f32.mrf.mxu0
        %v1483 = vadd.f32 0.0, %v1482
        %v1484 = vpop.f32.mrf.mxu0
        %v1485 = vpop.f32.mrf.mxu0
        %v1486 = vadd.f32 0.0, %v1485
        %v1487 = vpop.f32.mrf.mxu0
        %1488 = vmatprep.mubr.bf16.mxu0 0
        %1489 = vmatmul.mubr.bf16.gmra.mxu0 %v1307
        %v1490 = vpop.f32.mrf.mxu0
        %v1491 = vadd.f32 0.0, %v1490
        %v1492 = vpop.f32.mrf.mxu0
        %v1493 = vpop.f32.mrf.mxu0
        %v1494 = vadd.f32 0.0, %v1493
        %v1495 = vpop.f32.mrf.mxu0
        %1496 = vdwg.mxu0
        %v1497 = vadd.f32 %v1183, %v1403
        %v1498 = vadd.f32 %v1184, %v1406
        %v1499 = vadd.f32 %v1185, %v1411
        %v1500 = vadd.f32 %v1186, %v1414
        %v1501 = vadd.f32 %v1187, %v1419
        %v1502 = vadd.f32 %v1188, %v1422
        %v1503 = vadd.f32 %v1189, %v1427
        %v1504 = vadd.f32 %v1190, %v1430
        %v1505 = vadd.f32 %v1191, %v1435
        %v1506 = vadd.f32 %v1192, %v1438
        %v1507 = vadd.f32 %v1193, %v1443
        %v1508 = vadd.f32 %v1194, %v1446
        %v1509 = vadd.f32 %v1195, %v1451
        %v1510 = vadd.f32 %v1196, %v1454
        %v1511 = vadd.f32 %v1197, %v1459
        %v1512 = vadd.f32 %v1198, %v1462
        %v1513 = vadd.f32 %v1199, %v1467
        %v1514 = vadd.f32 %v1200, %v1470
        %v1515 = vadd.f32 %v1201, %v1475
        %v1516 = vadd.f32 %v1202, %v1478
        %v1517 = vadd.f32 %v1203, %v1483
        %v1518 = vadd.f32 %v1204, %v1486
        %v1519 = vadd.f32 %v1205, %v1491
        %v1520 = vadd.f32 %v1206, %v1494
        %v1521 = vld [vmem:[%s283 + $0xc] sm:$0xf]
        %v1522 = vld [vmem:[%s283 + $0x10] sm:$0xf]
        %v1523 = vld [vmem:[%s283 + $0x14] sm:$0xf]
        %v1524 = vld [vmem:[%s283 + $0x18] sm:$0xf]
        %v1525 = vld [vmem:[%s283 + $0x1c] sm:$0xf]
        %v1526 = vld [vmem:[%s283 + $0x20] sm:$0xf]
        %v1527 = vld [vmem:[%s283 + $0x24] sm:$0xf]
        %v1528 = vld [vmem:[%s283 + $0x28] sm:$0xf]
        %v1529 = vld [vmem:[%s283 + $0x2c] sm:$0xf]
        %v1530 = vld [vmem:[%s283 + $0x30] sm:$0xf]
        %v1531 = vld [vmem:[%s283 + $0x34] sm:$0xf]
        %v1532 = vld [vmem:[%s283 + $0x38] sm:$0xf]
        %v1533 = vld [vmem:[%s283 + $0x3c] sm:$0xf]
        %v1534 = vld [vmem:[%s283 + $0x40] sm:$0xf]
        %v1535 = vld [vmem:[%s283 + $0x44] sm:$0xf]
        %v1536 = vld [vmem:[%s283 + $0x48] sm:$0xf]
        %v1537 = vld [vmem:[%s283 + $0x4c] sm:$0xf]
        %v1538 = vld [vmem:[%s283 + $0x50] sm:$0xf]
        %v1539 = vld [vmem:[%s283 + $0x54] sm:$0xf]
        %v1540 = vld [vmem:[%s283 + $0x58] sm:$0xf]
        %v1541 = vld [vmem:[%s283 + $0x5c] sm:$0xf]
        %v1542 = vld [vmem:[%s283 + $0x60] sm:$0xf]
        %v1543 = vld [vmem:[%s283 + $0x64] sm:$0xf]
        %v1544 = vld [vmem:[%s283 + $0x68] sm:$0xf]
        %v1545 = vld [vmem:[%s283 + $0x6c] sm:$0x1]
        %s1546 = scalar_lea.vmem [#allocation4], 256
        %v1547 = vld [vmem:[%s1546] sm:$0xf]
        %v1548 = vld [vmem:[%s1546 + $0x4] sm:$0xf]
        %v1549 = vld [vmem:[%s1546 + $0x8] sm:$0xf]
        %v1550 = vld [vmem:[%s1546 + $0xc] sm:$0xf]
        %v1551 = vld [vmem:[%s1546 + $0x10] sm:$0xf]
        %v1552 = vld [vmem:[%s1546 + $0x14] sm:$0xf]
        %v1553 = vld [vmem:[%s1546 + $0x18] sm:$0xf]
        %v1554 = vld [vmem:[%s1546 + $0x1c] sm:$0xf]
        %v1555 = vld [vmem:[%s1546 + $0x20] sm:$0xf]
        %v1556 = vld [vmem:[%s1546 + $0x24] sm:$0xf]
        %v1557 = vld [vmem:[%s1546 + $0x28] sm:$0xf]
        %v1558 = vld [vmem:[%s1546 + $0x2c] sm:$0xf]
        %v1559 = vld [vmem:[%s1546 + $0x30] sm:$0xf]
        %v1560 = vld [vmem:[%s1546 + $0x34] sm:$0xf]
        %v1561 = vld [vmem:[%s1546 + $0x38] sm:$0xf]
        %v1562 = vld [vmem:[%s1546 + $0x3c] sm:$0xf]
        %v1588 = vunpack.c.l.b16 %v1521
        %v1589 = vunpack.c.l.b16 %v1522
        %v1590 = vunpack.c.l.b16 %v1523
        %v1591 = vunpack.c.l.b16 %v1524
        %v1592 = vunpack.c.l.b16 %v1525
        %v1593 = vunpack.c.l.b16 %v1526
        %v1594 = vunpack.c.l.b16 %v1527
        %v1595 = vunpack.c.l.b16 %v1528
        %v1596 = vunpack.c.l.b16 %v1529
        %v1597 = vunpack.c.l.b16 %v1530
        %v1598 = vunpack.c.l.b16 %v1531
        %v1599 = vunpack.c.l.b16 %v1532
        %v1600 = vunpack.c.l.b16 %v1533
        %v1601 = vunpack.c.l.b16 %v1534
        %v1602 = vunpack.c.l.b16 %v1535
        %v1603 = vunpack.c.l.b16 %v1536
        %v1604 = vunpack.c.l.b16 %v1537
        %v1605 = vunpack.c.l.b16 %v1538
        %v1606 = vunpack.c.l.b16 %v1539
        %v1607 = vunpack.c.l.b16 %v1540
        %v1608 = vunpack.c.l.b16 %v1541
        %v1609 = vunpack.c.l.b16 %v1542
        %v1610 = vunpack.c.l.b16 %v1543
        %v1611 = vunpack.c.l.b16 %v1544
        %v1612 = vunpack.c.l.b16 %v1545
        %v1613 = vpack.c.b16 %v1589, %v1588
        %v1614 = vpack.c.b16 %v1591, %v1590
        %v1615 = vpack.c.b16 %v1593, %v1592
        %v1616 = vpack.c.b16 %v1595, %v1594
        %v1617 = vpack.c.b16 %v1597, %v1596
        %v1618 = vpack.c.b16 %v1599, %v1598
        %v1619 = vpack.c.b16 %v1601, %v1600
        %v1620 = vpack.c.b16 %v1603, %v1602
        %v1621 = vpack.c.b16 %v1605, %v1604
        %v1622 = vpack.c.b16 %v1607, %v1606
        %v1623 = vpack.c.b16 %v1609, %v1608
        %v1624 = vpack.c.b16 %v1611, %v1610
        %v1625 = vpack.c.b16 %v1612, %v1612
        %v1627 = vshrl.u32 %v1613, 16
        %v1629 = vshll.u32 %v1613, 16
        %v1631 = vrot.slane %v1629, 1
        %v1632 = vor.u32 %v1627, %v1631
        %v1634 = vshll.u32 %v1614, 16
        %v1636 = vrot.slane %v1634, 1
        %v1637 = vsel %vm468, %v1632, %v1636
        %v1638 = vshrl.u32 %v1614, 16
        %v1640 = vor.u32 %v1638, %v1636
        %v1642 = vshll.u32 %v1615, 16
        %v1644 = vrot.slane %v1642, 1
        %v1645 = vsel %vm468, %v1640, %v1644
        %v1646 = vshrl.u32 %v1615, 16
        %v1648 = vor.u32 %v1646, %v1644
        %v1650 = vshll.u32 %v1616, 16
        %v1652 = vrot.slane %v1650, 1
        %v1653 = vsel %vm468, %v1648, %v1652
        %v1654 = vshrl.u32 %v1616, 16
        %v1656 = vor.u32 %v1654, %v1652
        %v1658 = vshll.u32 %v1617, 16
        %v1660 = vrot.slane %v1658, 1
        %v1661 = vsel %vm468, %v1656, %v1660
        %v1662 = vshrl.u32 %v1617, 16
        %v1664 = vor.u32 %v1662, %v1660
        %v1666 = vshll.u32 %v1618, 16
        %v1668 = vrot.slane %v1666, 1
        %v1669 = vsel %vm468, %v1664, %v1668
        %v1670 = vshrl.u32 %v1618, 16
        %v1672 = vor.u32 %v1670, %v1668
        %v1674 = vshll.u32 %v1619, 16
        %v1676 = vrot.slane %v1674, 1
        %v1677 = vsel %vm468, %v1672, %v1676
        %v1678 = vshrl.u32 %v1619, 16
        %v1680 = vor.u32 %v1678, %v1676
        %v1682 = vshll.u32 %v1620, 16
        %v1684 = vrot.slane %v1682, 1
        %v1685 = vsel %vm468, %v1680, %v1684
        %v1686 = vshrl.u32 %v1620, 16
        %v1688 = vor.u32 %v1686, %v1684
        %v1690 = vshll.u32 %v1621, 16
        %v1692 = vrot.slane %v1690, 1
        %v1693 = vsel %vm468, %v1688, %v1692
        %v1694 = vshrl.u32 %v1621, 16
        %v1696 = vor.u32 %v1694, %v1692
        %v1698 = vshll.u32 %v1622, 16
        %v1700 = vrot.slane %v1698, 1
        %v1701 = vsel %vm468, %v1696, %v1700
        %v1702 = vshrl.u32 %v1622, 16
        %v1704 = vor.u32 %v1702, %v1700
        %v1706 = vshll.u32 %v1623, 16
        %v1708 = vrot.slane %v1706, 1
        %v1709 = vsel %vm468, %v1704, %v1708
        %v1710 = vshrl.u32 %v1623, 16
        %v1712 = vor.u32 %v1710, %v1708
        %v1714 = vshll.u32 %v1624, 16
        %v1716 = vrot.slane %v1714, 1
        %v1717 = vsel %vm468, %v1712, %v1716
        %v1718 = vshrl.u32 %v1624, 16
        %v1720 = vor.u32 %v1718, %v1716
        %v1722 = vshll.u32 %v1625, 16
        %v1724 = vrot.slane %v1722, 1
        %v1725 = vsel %vm468, %v1720, %v1724
        %v1754 = vunpack.c.l.b16 %v1547
        %v1755 = vunpack.c.l.b16 %v1548
        %v1756 = vunpack.c.l.b16 %v1549
        %v1757 = vunpack.c.l.b16 %v1550
        %v1758 = vunpack.c.l.b16 %v1551
        %v1759 = vunpack.c.l.b16 %v1552
        %v1760 = vunpack.c.l.b16 %v1553
        %v1761 = vunpack.c.l.b16 %v1554
        %v1762 = vunpack.c.l.b16 %v1555
        %v1763 = vunpack.c.l.b16 %v1556
        %v1764 = vunpack.c.l.b16 %v1557
        %v1765 = vunpack.c.l.b16 %v1558
        %v1766 = vunpack.c.l.b16 %v1559
        %v1767 = vunpack.c.l.b16 %v1560
        %v1768 = vunpack.c.l.b16 %v1561
        %v1769 = vunpack.c.l.b16 %v1562
        %v1770 = vpack.c.b16 %v1755, %v1754
        %v1771 = vpack.c.b16 %v1757, %v1756
        %v1772 = vpack.c.b16 %v1759, %v1758
        %v1773 = vpack.c.b16 %v1761, %v1760
        %v1774 = vpack.c.b16 %v1763, %v1762
        %v1775 = vpack.c.b16 %v1765, %v1764
        %v1776 = vpack.c.b16 %v1767, %v1766
        %v1777 = vpack.c.b16 %v1769, %v1768
        %1786 = vmatprep.subr.bf16.mxu0 0
        %1787 = vmatpush1.bf16.msra.mxu0 %v1777
        %1788 = vmatprep.subr.bf16.mxu0 0
        %1789 = vmatpush1.bf16.msra.mxu0 %v1776
        %1790 = vmatprep.subr.bf16.mxu0 0
        %1791 = vmatpush1.bf16.msra.mxu0 %v1775
        %1792 = vmatprep.subr.bf16.mxu0 0
        %1793 = vmatpush1.bf16.msra.mxu0 %v1774
        %1794 = vmatprep.subr.bf16.mxu0 0
        %1795 = vmatpush1.bf16.msra.mxu0 %v1773
        %1796 = vmatprep.subr.bf16.mxu0 0
        %1797 = vmatpush1.bf16.msra.mxu0 %v1772
        %1798 = vmatprep.subr.bf16.mxu0 0
        %1799 = vmatpush1.bf16.msra.mxu0 %v1771
        %1800 = vmatprep.subr.bf16.mxu0 0
        %1801 = vmatpush1.bf16.msra.mxu0 %v1770
        %1802 = vmatprep.subr.bf16.mxu0 0
        %1803 = vmatpush2.bf16.msra.mxu0 0
        %1804 = vmatprep.subr.bf16.mxu0 0
        %1805 = vmatpush2.bf16.msra.mxu0 0
        %1806 = vmatprep.subr.bf16.mxu0 0
        %1807 = vmatpush2.bf16.msra.mxu0 0
        %1808 = vmatprep.subr.bf16.mxu0 0
        %1809 = vmatpush2.bf16.msra.mxu0 0
        %1810 = vmatprep.subr.bf16.mxu0 0
        %1811 = vmatpush2.bf16.msra.mxu0 0
        %1812 = vmatprep.subr.bf16.mxu0 0
        %1813 = vmatpush2.bf16.msra.mxu0 0
        %1814 = vmatprep.subr.bf16.mxu0 0
        %1815 = vmatpush2.bf16.msra.mxu0 0
        %1816 = vmatprep.subr.bf16.mxu0 0
        %1817 = vmatpush2.bf16.msra.mxu0 0
        %1818 = vmatprep.mubr.bf16.mxu0 0
        %1819 = vmatmul.mubr.bf16.gmra.mxu0 %v1637
        %v1820 = vpop.f32.mrf.mxu0
        %v1821 = vadd.f32 0.0, %v1820
        %v1822 = vpop.f32.mrf.mxu0
        %v1823 = vpop.f32.mrf.mxu0
        %v1824 = vadd.f32 0.0, %v1823
        %v1825 = vpop.f32.mrf.mxu0
        %1826 = vmatprep.mubr.bf16.mxu0 0
        %1827 = vmatmul.mubr.bf16.gmra.mxu0 %v1645
        %v1828 = vpop.f32.mrf.mxu0
        %v1829 = vadd.f32 0.0, %v1828
        %v1830 = vpop.f32.mrf.mxu0
        %v1831 = vpop.f32.mrf.mxu0
        %v1832 = vadd.f32 0.0, %v1831
        %v1833 = vpop.f32.mrf.mxu0
        %1834 = vmatprep.mubr.bf16.mxu0 0
        %1835 = vmatmul.mubr.bf16.gmra.mxu0 %v1653
        %v1836 = vpop.f32.mrf.mxu0
        %v1837 = vadd.f32 0.0, %v1836
        %v1838 = vpop.f32.mrf.mxu0
        %v1839 = vpop.f32.mrf.mxu0
        %v1840 = vadd.f32 0.0, %v1839
        %v1841 = vpop.f32.mrf.mxu0
        %1842 = vmatprep.mubr.bf16.mxu0 0
        %1843 = vmatmul.mubr.bf16.gmra.mxu0 %v1661
        %v1844 = vpop.f32.mrf.mxu0
        %v1845 = vadd.f32 0.0, %v1844
        %v1846 = vpop.f32.mrf.mxu0
        %v1847 = vpop.f32.mrf.mxu0
        %v1848 = vadd.f32 0.0, %v1847
        %v1849 = vpop.f32.mrf.mxu0
        %1850 = vmatprep.mubr.bf16.mxu0 0
        %1851 = vmatmul.mubr.bf16.gmra.mxu0 %v1669
        %v1852 = vpop.f32.mrf.mxu0
        %v1853 = vadd.f32 0.0, %v1852
        %v1854 = vpop.f32.mrf.mxu0
        %v1855 = vpop.f32.mrf.mxu0
        %v1856 = vadd.f32 0.0, %v1855
        %v1857 = vpop.f32.mrf.mxu0
        %1858 = vmatprep.mubr.bf16.mxu0 0
        %1859 = vmatmul.mubr.bf16.gmra.mxu0 %v1677
        %v1860 = vpop.f32.mrf.mxu0
        %v1861 = vadd.f32 0.0, %v1860
        %v1862 = vpop.f32.mrf.mxu0
        %v1863 = vpop.f32.mrf.mxu0
        %v1864 = vadd.f32 0.0, %v1863
        %v1865 = vpop.f32.mrf.mxu0
        %1866 = vmatprep.mubr.bf16.mxu0 0
        %1867 = vmatmul.mubr.bf16.gmra.mxu0 %v1685
        %v1868 = vpop.f32.mrf.mxu0
        %v1869 = vadd.f32 0.0, %v1868
        %v1870 = vpop.f32.mrf.mxu0
        %v1871 = vpop.f32.mrf.mxu0
        %v1872 = vadd.f32 0.0, %v1871
        %v1873 = vpop.f32.mrf.mxu0
        %1874 = vmatprep.mubr.bf16.mxu0 0
        %1875 = vmatmul.mubr.bf16.gmra.mxu0 %v1693
        %v1876 = vpop.f32.mrf.mxu0
        %v1877 = vadd.f32 0.0, %v1876
        %v1878 = vpop.f32.mrf.mxu0
        %v1879 = vpop.f32.mrf.mxu0
        %v1880 = vadd.f32 0.0, %v1879
        %v1881 = vpop.f32.mrf.mxu0
        %1882 = vmatprep.mubr.bf16.mxu0 0
        %1883 = vmatmul.mubr.bf16.gmra.mxu0 %v1701
        %v1884 = vpop.f32.mrf.mxu0
        %v1885 = vadd.f32 0.0, %v1884
        %v1886 = vpop.f32.mrf.mxu0
        %v1887 = vpop.f32.mrf.mxu0
        %v1888 = vadd.f32 0.0, %v1887
        %v1889 = vpop.f32.mrf.mxu0
        %1890 = vmatprep.mubr.bf16.mxu0 0
        %1891 = vmatmul.mubr.bf16.gmra.mxu0 %v1709
        %v1892 = vpop.f32.mrf.mxu0
        %v1893 = vadd.f32 0.0, %v1892
        %v1894 = vpop.f32.mrf.mxu0
        %v1895 = vpop.f32.mrf.mxu0
        %v1896 = vadd.f32 0.0, %v1895
        %v1897 = vpop.f32.mrf.mxu0
        %1898 = vmatprep.mubr.bf16.mxu0 0
        %1899 = vmatmul.mubr.bf16.gmra.mxu0 %v1717
        %v1900 = vpop.f32.mrf.mxu0
        %v1901 = vadd.f32 0.0, %v1900
        %v1902 = vpop.f32.mrf.mxu0
        %v1903 = vpop.f32.mrf.mxu0
        %v1904 = vadd.f32 0.0, %v1903
        %v1905 = vpop.f32.mrf.mxu0
        %1906 = vmatprep.mubr.bf16.mxu0 0
        %1907 = vmatmul.mubr.bf16.gmra.mxu0 %v1725
        %v1908 = vpop.f32.mrf.mxu0
        %v1909 = vadd.f32 0.0, %v1908
        %v1910 = vpop.f32.mrf.mxu0
        %v1911 = vpop.f32.mrf.mxu0
        %v1912 = vadd.f32 0.0, %v1911
        %v1913 = vpop.f32.mrf.mxu0
        %1914 = vdwg.mxu0
        %v1915 = vadd.f32 %v1497, %v1821
        %v1916 = vadd.f32 %v1498, %v1824
        %v1917 = vadd.f32 %v1499, %v1829
        %v1918 = vadd.f32 %v1500, %v1832
        %v1919 = vadd.f32 %v1501, %v1837
        %v1920 = vadd.f32 %v1502, %v1840
        %v1921 = vadd.f32 %v1503, %v1845
        %v1922 = vadd.f32 %v1504, %v1848
        %v1923 = vadd.f32 %v1505, %v1853
        %v1924 = vadd.f32 %v1506, %v1856
        %v1925 = vadd.f32 %v1507, %v1861
        %v1926 = vadd.f32 %v1508, %v1864
        %v1927 = vadd.f32 %v1509, %v1869
        %v1928 = vadd.f32 %v1510, %v1872
        %v1929 = vadd.f32 %v1511, %v1877
        %v1930 = vadd.f32 %v1512, %v1880
        %v1931 = vadd.f32 %v1513, %v1885
        %v1932 = vadd.f32 %v1514, %v1888
        %v1933 = vadd.f32 %v1515, %v1893
        %v1934 = vadd.f32 %v1516, %v1896
        %v1935 = vadd.f32 %v1517, %v1901
        %v1936 = vadd.f32 %v1518, %v1904
        %v1937 = vadd.f32 %v1519, %v1909
        %v1938 = vadd.f32 %v1520, %v1912
        %v1939 = vld [vmem:[%s283 + $0xc] sm:$0xe]
        %s1940 = scalar_lea.vmem [#allocation4], 320
        %v1941 = vld [vmem:[%s1940] sm:$0xf]
        %v1942 = vld [vmem:[%s1940 + $0x4] sm:$0xf]
        %v1943 = vld [vmem:[%s1940 + $0x8] sm:$0xf]
        %v1944 = vld [vmem:[%s1940 + $0xc] sm:$0xf]
        %v1945 = vld [vmem:[%s1940 + $0x10] sm:$0xf]
        %v1946 = vld [vmem:[%s1940 + $0x14] sm:$0xf]
        %v1947 = vld [vmem:[%s1940 + $0x18] sm:$0xf]
        %v1948 = vld [vmem:[%s1940 + $0x1c] sm:$0xf]
        %v1949 = vld [vmem:[%s1940 + $0x20] sm:$0xf]
        %v1950 = vld [vmem:[%s1940 + $0x24] sm:$0xf]
        %v1951 = vld [vmem:[%s1940 + $0x28] sm:$0xf]
        %v1952 = vld [vmem:[%s1940 + $0x2c] sm:$0xf]
        %v1953 = vld [vmem:[%s1940 + $0x30] sm:$0xf]
        %v1954 = vld [vmem:[%s1940 + $0x34] sm:$0xf]
        %v1955 = vld [vmem:[%s1940 + $0x38] sm:$0xf]
        %v1956 = vld [vmem:[%s1940 + $0x3c] sm:$0xf]
        %v1958 = vunpack.c.l.b16 %v1939
        %v1959 = vpack.c.b16 %v1589, %v1958
        %v1960 = vrot.slane %v1959, 1
        %v1961 = vrot.slane %v1614, 1
        %v1962 = vsel %vm968, %v1960, %v1961
        %v1963 = vrot.slane %v1615, 1
        %v1964 = vsel %vm968, %v1961, %v1963
        %v1965 = vrot.slane %v1616, 1
        %v1966 = vsel %vm968, %v1963, %v1965
        %v1967 = vrot.slane %v1617, 1
        %v1968 = vsel %vm968, %v1965, %v1967
        %v1969 = vrot.slane %v1618, 1
        %v1970 = vsel %vm968, %v1967, %v1969
        %v1971 = vrot.slane %v1619, 1
        %v1972 = vsel %vm968, %v1969, %v1971
        %v1973 = vrot.slane %v1620, 1
        %v1974 = vsel %vm968, %v1971, %v1973
        %v1975 = vrot.slane %v1621, 1
        %v1976 = vsel %vm968, %v1973, %v1975
        %v1977 = vrot.slane %v1622, 1
        %v1978 = vsel %vm968, %v1975, %v1977
        %v1979 = vrot.slane %v1623, 1
        %v1980 = vsel %vm968, %v1977, %v1979
        %v1981 = vrot.slane %v1624, 1
        %v1982 = vsel %vm968, %v1979, %v1981
        %v1983 = vrot.slane %v1625, 1
        %v1984 = vsel %vm968, %v1981, %v1983
        %v2013 = vunpack.c.l.b16 %v1941
        %v2014 = vunpack.c.l.b16 %v1942
        %v2015 = vunpack.c.l.b16 %v1943
        %v2016 = vunpack.c.l.b16 %v1944
        %v2017 = vunpack.c.l.b16 %v1945
        %v2018 = vunpack.c.l.b16 %v1946
        %v2019 = vunpack.c.l.b16 %v1947
        %v2020 = vunpack.c.l.b16 %v1948
        %v2021 = vunpack.c.l.b16 %v1949
        %v2022 = vunpack.c.l.b16 %v1950
        %v2023 = vunpack.c.l.b16 %v1951
        %v2024 = vunpack.c.l.b16 %v1952
        %v2025 = vunpack.c.l.b16 %v1953
        %v2026 = vunpack.c.l.b16 %v1954
        %v2027 = vunpack.c.l.b16 %v1955
        %v2028 = vunpack.c.l.b16 %v1956
        %v2029 = vpack.c.b16 %v2014, %v2013
        %v2030 = vpack.c.b16 %v2016, %v2015
        %v2031 = vpack.c.b16 %v2018, %v2017
        %v2032 = vpack.c.b16 %v2020, %v2019
        %v2033 = vpack.c.b16 %v2022, %v2021
        %v2034 = vpack.c.b16 %v2024, %v2023
        %v2035 = vpack.c.b16 %v2026, %v2025
        %v2036 = vpack.c.b16 %v2028, %v2027
        %2045 = vmatprep.subr.bf16.mxu0 0
        %2046 = vmatpush1.bf16.msra.mxu0 %v2036
        %2047 = vmatprep.subr.bf16.mxu0 0
        %2048 = vmatpush1.bf16.msra.mxu0 %v2035
        %2049 = vmatprep.subr.bf16.mxu0 0
        %2050 = vmatpush1.bf16.msra.mxu0 %v2034
        %2051 = vmatprep.subr.bf16.mxu0 0
        %2052 = vmatpush1.bf16.msra.mxu0 %v2033
        %2053 = vmatprep.subr.bf16.mxu0 0
        %2054 = vmatpush1.bf16.msra.mxu0 %v2032
        %2055 = vmatprep.subr.bf16.mxu0 0
        %2056 = vmatpush1.bf16.msra.mxu0 %v2031
        %2057 = vmatprep.subr.bf16.mxu0 0
        %2058 = vmatpush1.bf16.msra.mxu0 %v2030
        %2059 = vmatprep.subr.bf16.mxu0 0
        %2060 = vmatpush1.bf16.msra.mxu0 %v2029
        %2061 = vmatprep.subr.bf16.mxu0 0
        %2062 = vmatpush2.bf16.msra.mxu0 0
        %2063 = vmatprep.subr.bf16.mxu0 0
        %2064 = vmatpush2.bf16.msra.mxu0 0
        %2065 = vmatprep.subr.bf16.mxu0 0
        %2066 = vmatpush2.bf16.msra.mxu0 0
        %2067 = vmatprep.subr.bf16.mxu0 0
        %2068 = vmatpush2.bf16.msra.mxu0 0
        %2069 = vmatprep.subr.bf16.mxu0 0
        %2070 = vmatpush2.bf16.msra.mxu0 0
        %2071 = vmatprep.subr.bf16.mxu0 0
        %2072 = vmatpush2.bf16.msra.mxu0 0
        %2073 = vmatprep.subr.bf16.mxu0 0
        %2074 = vmatpush2.bf16.msra.mxu0 0
        %2075 = vmatprep.subr.bf16.mxu0 0
        %2076 = vmatpush2.bf16.msra.mxu0 0
        %2077 = vmatprep.mubr.bf16.mxu0 0
        %2078 = vmatmul.mubr.bf16.gmra.mxu0 %v1962
        %v2079 = vpop.f32.mrf.mxu0
        %v2080 = vadd.f32 0.0, %v2079
        %v2081 = vpop.f32.mrf.mxu0
        %v2082 = vpop.f32.mrf.mxu0
        %v2083 = vadd.f32 0.0, %v2082
        %v2084 = vpop.f32.mrf.mxu0
        %2085 = vmatprep.mubr.bf16.mxu0 0
        %2086 = vmatmul.mubr.bf16.gmra.mxu0 %v1964
        %v2087 = vpop.f32.mrf.mxu0
        %v2088 = vadd.f32 0.0, %v2087
        %v2089 = vpop.f32.mrf.mxu0
        %v2090 = vpop.f32.mrf.mxu0
        %v2091 = vadd.f32 0.0, %v2090
        %v2092 = vpop.f32.mrf.mxu0
        %2093 = vmatprep.mubr.bf16.mxu0 0
        %2094 = vmatmul.mubr.bf16.gmra.mxu0 %v1966
        %v2095 = vpop.f32.mrf.mxu0
        %v2096 = vadd.f32 0.0, %v2095
        %v2097 = vpop.f32.mrf.mxu0
        %v2098 = vpop.f32.mrf.mxu0
        %v2099 = vadd.f32 0.0, %v2098
        %v2100 = vpop.f32.mrf.mxu0
        %2101 = vmatprep.mubr.bf16.mxu0 0
        %2102 = vmatmul.mubr.bf16.gmra.mxu0 %v1968
        %v2103 = vpop.f32.mrf.mxu0
        %v2104 = vadd.f32 0.0, %v2103
        %v2105 = vpop.f32.mrf.mxu0
        %v2106 = vpop.f32.mrf.mxu0
        %v2107 = vadd.f32 0.0, %v2106
        %v2108 = vpop.f32.mrf.mxu0
        %2109 = vmatprep.mubr.bf16.mxu0 0
        %2110 = vmatmul.mubr.bf16.gmra.mxu0 %v1970
        %v2111 = vpop.f32.mrf.mxu0
        %v2112 = vadd.f32 0.0, %v2111
        %v2113 = vpop.f32.mrf.mxu0
        %v2114 = vpop.f32.mrf.mxu0
        %v2115 = vadd.f32 0.0, %v2114
        %v2116 = vpop.f32.mrf.mxu0
        %2117 = vmatprep.mubr.bf16.mxu0 0
        %2118 = vmatmul.mubr.bf16.gmra.mxu0 %v1972
        %v2119 = vpop.f32.mrf.mxu0
        %v2120 = vadd.f32 0.0, %v2119
        %v2121 = vpop.f32.mrf.mxu0
        %v2122 = vpop.f32.mrf.mxu0
        %v2123 = vadd.f32 0.0, %v2122
        %v2124 = vpop.f32.mrf.mxu0
        %2125 = vmatprep.mubr.bf16.mxu0 0
        %2126 = vmatmul.mubr.bf16.gmra.mxu0 %v1974
        %v2127 = vpop.f32.mrf.mxu0
        %v2128 = vadd.f32 0.0, %v2127
        %v2129 = vpop.f32.mrf.mxu0
        %v2130 = vpop.f32.mrf.mxu0
        %v2131 = vadd.f32 0.0, %v2130
        %v2132 = vpop.f32.mrf.mxu0
        %2133 = vmatprep.mubr.bf16.mxu0 0
        %2134 = vmatmul.mubr.bf16.gmra.mxu0 %v1976
        %v2135 = vpop.f32.mrf.mxu0
        %v2136 = vadd.f32 0.0, %v2135
        %v2137 = vpop.f32.mrf.mxu0
        %v2138 = vpop.f32.mrf.mxu0
        %v2139 = vadd.f32 0.0, %v2138
        %v2140 = vpop.f32.mrf.mxu0
        %2141 = vmatprep.mubr.bf16.mxu0 0
        %2142 = vmatmul.mubr.bf16.gmra.mxu0 %v1978
        %v2143 = vpop.f32.mrf.mxu0
        %v2144 = vadd.f32 0.0, %v2143
        %v2145 = vpop.f32.mrf.mxu0
        %v2146 = vpop.f32.mrf.mxu0
        %v2147 = vadd.f32 0.0, %v2146
        %v2148 = vpop.f32.mrf.mxu0
        %2149 = vmatprep.mubr.bf16.mxu0 0
        %2150 = vmatmul.mubr.bf16.gmra.mxu0 %v1980
        %v2151 = vpop.f32.mrf.mxu0
        %v2152 = vadd.f32 0.0, %v2151
        %v2153 = vpop.f32.mrf.mxu0
        %v2154 = vpop.f32.mrf.mxu0
        %v2155 = vadd.f32 0.0, %v2154
        %v2156 = vpop.f32.mrf.mxu0
        %2157 = vmatprep.mubr.bf16.mxu0 0
        %2158 = vmatmul.mubr.bf16.gmra.mxu0 %v1982
        %v2159 = vpop.f32.mrf.mxu0
        %v2160 = vadd.f32 0.0, %v2159
        %v2161 = vpop.f32.mrf.mxu0
        %v2162 = vpop.f32.mrf.mxu0
        %v2163 = vadd.f32 0.0, %v2162
        %v2164 = vpop.f32.mrf.mxu0
        %2165 = vmatprep.mubr.bf16.mxu0 0
        %2166 = vmatmul.mubr.bf16.gmra.mxu0 %v1984
        %v2167 = vpop.f32.mrf.mxu0
        %v2168 = vadd.f32 0.0, %v2167
        %v2169 = vpop.f32.mrf.mxu0
        %v2170 = vpop.f32.mrf.mxu0
        %v2171 = vadd.f32 0.0, %v2170
        %v2172 = vpop.f32.mrf.mxu0
        %2173 = vdwg.mxu0
        %v2174 = vadd.f32 %v1915, %v2080
        %v2175 = vadd.f32 %v1916, %v2083
        %v2176 = vadd.f32 %v1917, %v2088
        %v2177 = vadd.f32 %v1918, %v2091
        %v2178 = vadd.f32 %v1919, %v2096
        %v2179 = vadd.f32 %v1920, %v2099
        %v2180 = vadd.f32 %v1921, %v2104
        %v2181 = vadd.f32 %v1922, %v2107
        %v2182 = vadd.f32 %v1923, %v2112
        %v2183 = vadd.f32 %v1924, %v2115
        %v2184 = vadd.f32 %v1925, %v2120
        %v2185 = vadd.f32 %v1926, %v2123
        %v2186 = vadd.f32 %v1927, %v2128
        %v2187 = vadd.f32 %v1928, %v2131
        %v2188 = vadd.f32 %v1929, %v2136
        %v2189 = vadd.f32 %v1930, %v2139
        %v2190 = vadd.f32 %v1931, %v2144
        %v2191 = vadd.f32 %v1932, %v2147
        %v2192 = vadd.f32 %v1933, %v2152
        %v2193 = vadd.f32 %v1934, %v2155
        %v2194 = vadd.f32 %v1935, %v2160
        %v2195 = vadd.f32 %v1936, %v2163
        %v2196 = vadd.f32 %v1937, %v2168
        %v2197 = vadd.f32 %v1938, %v2171
        %v2198 = vld [vmem:[%s283 + $0x18] sm:$0xf]
        %v2199 = vld [vmem:[%s283 + $0x1c] sm:$0xf]
        %v2200 = vld [vmem:[%s283 + $0x20] sm:$0xf]
        %v2201 = vld [vmem:[%s283 + $0x24] sm:$0xf]
        %v2202 = vld [vmem:[%s283 + $0x28] sm:$0xf]
        %v2203 = vld [vmem:[%s283 + $0x2c] sm:$0xf]
        %v2204 = vld [vmem:[%s283 + $0x30] sm:$0xf]
        %v2205 = vld [vmem:[%s283 + $0x34] sm:$0xf]
        %v2206 = vld [vmem:[%s283 + $0x38] sm:$0xf]
        %v2207 = vld [vmem:[%s283 + $0x3c] sm:$0xf]
        %v2208 = vld [vmem:[%s283 + $0x40] sm:$0xf]
        %v2209 = vld [vmem:[%s283 + $0x44] sm:$0xf]
        %v2210 = vld [vmem:[%s283 + $0x48] sm:$0xf]
        %v2211 = vld [vmem:[%s283 + $0x4c] sm:$0xf]
        %v2212 = vld [vmem:[%s283 + $0x50] sm:$0xf]
        %v2213 = vld [vmem:[%s283 + $0x54] sm:$0xf]
        %v2214 = vld [vmem:[%s283 + $0x58] sm:$0xf]
        %v2215 = vld [vmem:[%s283 + $0x5c] sm:$0xf]
        %v2216 = vld [vmem:[%s283 + $0x60] sm:$0xf]
        %v2217 = vld [vmem:[%s283 + $0x64] sm:$0xf]
        %v2218 = vld [vmem:[%s283 + $0x68] sm:$0xf]
        %v2219 = vld [vmem:[%s283 + $0x6c] sm:$0xf]
        %v2220 = vld [vmem:[%s283 + $0x70] sm:$0xf]
        %v2221 = vld [vmem:[%s283 + $0x74] sm:$0xf]
        %s2222 = scalar_lea.vmem [#allocation4], 384
        %v2223 = vld [vmem:[%s2222] sm:$0xf]
        %v2224 = vld [vmem:[%s2222 + $0x4] sm:$0xf]
        %v2225 = vld [vmem:[%s2222 + $0x8] sm:$0xf]
        %v2226 = vld [vmem:[%s2222 + $0xc] sm:$0xf]
        %v2227 = vld [vmem:[%s2222 + $0x10] sm:$0xf]
        %v2228 = vld [vmem:[%s2222 + $0x14] sm:$0xf]
        %v2229 = vld [vmem:[%s2222 + $0x18] sm:$0xf]
        %v2230 = vld [vmem:[%s2222 + $0x1c] sm:$0xf]
        %v2231 = vld [vmem:[%s2222 + $0x20] sm:$0xf]
        %v2232 = vld [vmem:[%s2222 + $0x24] sm:$0xf]
        %v2233 = vld [vmem:[%s2222 + $0x28] sm:$0xf]
        %v2234 = vld [vmem:[%s2222 + $0x2c] sm:$0xf]
        %v2235 = vld [vmem:[%s2222 + $0x30] sm:$0xf]
        %v2236 = vld [vmem:[%s2222 + $0x34] sm:$0xf]
        %v2237 = vld [vmem:[%s2222 + $0x38] sm:$0xf]
        %v2238 = vld [vmem:[%s2222 + $0x3c] sm:$0xf]
        %v2263 = vunpack.c.l.b16 %v2198
        %v2264 = vunpack.c.l.b16 %v2199
        %v2265 = vunpack.c.l.b16 %v2200
        %v2266 = vunpack.c.l.b16 %v2201
        %v2267 = vunpack.c.l.b16 %v2202
        %v2268 = vunpack.c.l.b16 %v2203
        %v2269 = vunpack.c.l.b16 %v2204
        %v2270 = vunpack.c.l.b16 %v2205
        %v2271 = vunpack.c.l.b16 %v2206
        %v2272 = vunpack.c.l.b16 %v2207
        %v2273 = vunpack.c.l.b16 %v2208
        %v2274 = vunpack.c.l.b16 %v2209
        %v2275 = vunpack.c.l.b16 %v2210
        %v2276 = vunpack.c.l.b16 %v2211
        %v2277 = vunpack.c.l.b16 %v2212
        %v2278 = vunpack.c.l.b16 %v2213
        %v2279 = vunpack.c.l.b16 %v2214
        %v2280 = vunpack.c.l.b16 %v2215
        %v2281 = vunpack.c.l.b16 %v2216
        %v2282 = vunpack.c.l.b16 %v2217
        %v2283 = vunpack.c.l.b16 %v2218
        %v2284 = vunpack.c.l.b16 %v2219
        %v2285 = vunpack.c.l.b16 %v2220
        %v2286 = vunpack.c.l.b16 %v2221
        %v2287 = vpack.c.b16 %v2264, %v2263
        %v2288 = vpack.c.b16 %v2266, %v2265
        %v2289 = vpack.c.b16 %v2268, %v2267
        %v2290 = vpack.c.b16 %v2270, %v2269
        %v2291 = vpack.c.b16 %v2272, %v2271
        %v2292 = vpack.c.b16 %v2274, %v2273
        %v2293 = vpack.c.b16 %v2276, %v2275
        %v2294 = vpack.c.b16 %v2278, %v2277
        %v2295 = vpack.c.b16 %v2280, %v2279
        %v2296 = vpack.c.b16 %v2282, %v2281
        %v2297 = vpack.c.b16 %v2284, %v2283
        %v2298 = vpack.c.b16 %v2286, %v2285
        %v2327 = vunpack.c.l.b16 %v2223
        %v2328 = vunpack.c.l.b16 %v2224
        %v2329 = vunpack.c.l.b16 %v2225
        %v2330 = vunpack.c.l.b16 %v2226
        %v2331 = vunpack.c.l.b16 %v2227
        %v2332 = vunpack.c.l.b16 %v2228
        %v2333 = vunpack.c.l.b16 %v2229
        %v2334 = vunpack.c.l.b16 %v2230
        %v2335 = vunpack.c.l.b16 %v2231
        %v2336 = vunpack.c.l.b16 %v2232
        %v2337 = vunpack.c.l.b16 %v2233
        %v2338 = vunpack.c.l.b16 %v2234
        %v2339 = vunpack.c.l.b16 %v2235
        %v2340 = vunpack.c.l.b16 %v2236
        %v2341 = vunpack.c.l.b16 %v2237
        %v2342 = vunpack.c.l.b16 %v2238
        %v2343 = vpack.c.b16 %v2328, %v2327
        %v2344 = vpack.c.b16 %v2330, %v2329
        %v2345 = vpack.c.b16 %v2332, %v2331
        %v2346 = vpack.c.b16 %v2334, %v2333
        %v2347 = vpack.c.b16 %v2336, %v2335
        %v2348 = vpack.c.b16 %v2338, %v2337
        %v2349 = vpack.c.b16 %v2340, %v2339
        %v2350 = vpack.c.b16 %v2342, %v2341
        %2359 = vmatprep.subr.bf16.mxu0 0
        %2360 = vmatpush1.bf16.msra.mxu0 %v2350
        %2361 = vmatprep.subr.bf16.mxu0 0
        %2362 = vmatpush1.bf16.msra.mxu0 %v2349
        %2363 = vmatprep.subr.bf16.mxu0 0
        %2364 = vmatpush1.bf16.msra.mxu0 %v2348
        %2365 = vmatprep.subr.bf16.mxu0 0
        %2366 = vmatpush1.bf16.msra.mxu0 %v2347
        %2367 = vmatprep.subr.bf16.mxu0 0
        %2368 = vmatpush1.bf16.msra.mxu0 %v2346
        %2369 = vmatprep.subr.bf16.mxu0 0
        %2370 = vmatpush1.bf16.msra.mxu0 %v2345
        %2371 = vmatprep.subr.bf16.mxu0 0
        %2372 = vmatpush1.bf16.msra.mxu0 %v2344
        %2373 = vmatprep.subr.bf16.mxu0 0
        %2374 = vmatpush1.bf16.msra.mxu0 %v2343
        %2375 = vmatprep.subr.bf16.mxu0 0
        %2376 = vmatpush2.bf16.msra.mxu0 0
        %2377 = vmatprep.subr.bf16.mxu0 0
        %2378 = vmatpush2.bf16.msra.mxu0 0
        %2379 = vmatprep.subr.bf16.mxu0 0
        %2380 = vmatpush2.bf16.msra.mxu0 0
        %2381 = vmatprep.subr.bf16.mxu0 0
        %2382 = vmatpush2.bf16.msra.mxu0 0
        %2383 = vmatprep.subr.bf16.mxu0 0
        %2384 = vmatpush2.bf16.msra.mxu0 0
        %2385 = vmatprep.subr.bf16.mxu0 0
        %2386 = vmatpush2.bf16.msra.mxu0 0
        %2387 = vmatprep.subr.bf16.mxu0 0
        %2388 = vmatpush2.bf16.msra.mxu0 0
        %2389 = vmatprep.subr.bf16.mxu0 0
        %2390 = vmatpush2.bf16.msra.mxu0 0
        %2391 = vmatprep.mubr.bf16.mxu0 0
        %2392 = vmatmul.mubr.bf16.gmra.mxu0 %v2287
        %v2393 = vpop.f32.mrf.mxu0
        %v2394 = vadd.f32 0.0, %v2393
        %v2395 = vpop.f32.mrf.mxu0
        %v2396 = vpop.f32.mrf.mxu0
        %v2397 = vadd.f32 0.0, %v2396
        %v2398 = vpop.f32.mrf.mxu0
        %2399 = vmatprep.mubr.bf16.mxu0 0
        %2400 = vmatmul.mubr.bf16.gmra.mxu0 %v2288
        %v2401 = vpop.f32.mrf.mxu0
        %v2402 = vadd.f32 0.0, %v2401
        %v2403 = vpop.f32.mrf.mxu0
        %v2404 = vpop.f32.mrf.mxu0
        %v2405 = vadd.f32 0.0, %v2404
        %v2406 = vpop.f32.mrf.mxu0
        %2407 = vmatprep.mubr.bf16.mxu0 0
        %2408 = vmatmul.mubr.bf16.gmra.mxu0 %v2289
        %v2409 = vpop.f32.mrf.mxu0
        %v2410 = vadd.f32 0.0, %v2409
        %v2411 = vpop.f32.mrf.mxu0
        %v2412 = vpop.f32.mrf.mxu0
        %v2413 = vadd.f32 0.0, %v2412
        %v2414 = vpop.f32.mrf.mxu0
        %2415 = vmatprep.mubr.bf16.mxu0 0
        %2416 = vmatmul.mubr.bf16.gmra.mxu0 %v2290
        %v2417 = vpop.f32.mrf.mxu0
        %v2418 = vadd.f32 0.0, %v2417
        %v2419 = vpop.f32.mrf.mxu0
        %v2420 = vpop.f32.mrf.mxu0
        %v2421 = vadd.f32 0.0, %v2420
        %v2422 = vpop.f32.mrf.mxu0
        %2423 = vmatprep.mubr.bf16.mxu0 0
        %2424 = vmatmul.mubr.bf16.gmra.mxu0 %v2291
        %v2425 = vpop.f32.mrf.mxu0
        %v2426 = vadd.f32 0.0, %v2425
        %v2427 = vpop.f32.mrf.mxu0
        %v2428 = vpop.f32.mrf.mxu0
        %v2429 = vadd.f32 0.0, %v2428
        %v2430 = vpop.f32.mrf.mxu0
        %2431 = vmatprep.mubr.bf16.mxu0 0
        %2432 = vmatmul.mubr.bf16.gmra.mxu0 %v2292
        %v2433 = vpop.f32.mrf.mxu0
        %v2434 = vadd.f32 0.0, %v2433
        %v2435 = vpop.f32.mrf.mxu0
        %v2436 = vpop.f32.mrf.mxu0
        %v2437 = vadd.f32 0.0, %v2436
        %v2438 = vpop.f32.mrf.mxu0
        %2439 = vmatprep.mubr.bf16.mxu0 0
        %2440 = vmatmul.mubr.bf16.gmra.mxu0 %v2293
        %v2441 = vpop.f32.mrf.mxu0
        %v2442 = vadd.f32 0.0, %v2441
        %v2443 = vpop.f32.mrf.mxu0
        %v2444 = vpop.f32.mrf.mxu0
        %v2445 = vadd.f32 0.0, %v2444
        %v2446 = vpop.f32.mrf.mxu0
        %2447 = vmatprep.mubr.bf16.mxu0 0
        %2448 = vmatmul.mubr.bf16.gmra.mxu0 %v2294
        %v2449 = vpop.f32.mrf.mxu0
        %v2450 = vadd.f32 0.0, %v2449
        %v2451 = vpop.f32.mrf.mxu0
        %v2452 = vpop.f32.mrf.mxu0
        %v2453 = vadd.f32 0.0, %v2452
        %v2454 = vpop.f32.mrf.mxu0
        %2455 = vmatprep.mubr.bf16.mxu0 0
        %2456 = vmatmul.mubr.bf16.gmra.mxu0 %v2295
        %v2457 = vpop.f32.mrf.mxu0
        %v2458 = vadd.f32 0.0, %v2457
        %v2459 = vpop.f32.mrf.mxu0
        %v2460 = vpop.f32.mrf.mxu0
        %v2461 = vadd.f32 0.0, %v2460
        %v2462 = vpop.f32.mrf.mxu0
        %2463 = vmatprep.mubr.bf16.mxu0 0
        %2464 = vmatmul.mubr.bf16.gmra.mxu0 %v2296
        %v2465 = vpop.f32.mrf.mxu0
        %v2466 = vadd.f32 0.0, %v2465
        %v2467 = vpop.f32.mrf.mxu0
        %v2468 = vpop.f32.mrf.mxu0
        %v2469 = vadd.f32 0.0, %v2468
        %v2470 = vpop.f32.mrf.mxu0
        %2471 = vmatprep.mubr.bf16.mxu0 0
        %2472 = vmatmul.mubr.bf16.gmra.mxu0 %v2297
        %v2473 = vpop.f32.mrf.mxu0
        %v2474 = vadd.f32 0.0, %v2473
        %v2475 = vpop.f32.mrf.mxu0
        %v2476 = vpop.f32.mrf.mxu0
        %v2477 = vadd.f32 0.0, %v2476
        %v2478 = vpop.f32.mrf.mxu0
        %2479 = vmatprep.mubr.bf16.mxu0 0
        %2480 = vmatmul.mubr.bf16.gmra.mxu0 %v2298
        %v2481 = vpop.f32.mrf.mxu0
        %v2482 = vadd.f32 0.0, %v2481
        %v2483 = vpop.f32.mrf.mxu0
        %v2484 = vpop.f32.mrf.mxu0
        %v2485 = vadd.f32 0.0, %v2484
        %v2486 = vpop.f32.mrf.mxu0
        %2487 = vdwg.mxu0
        %v2488 = vadd.f32 %v2174, %v2394
        %v2489 = vadd.f32 %v2175, %v2397
        %v2490 = vadd.f32 %v2176, %v2402
        %v2491 = vadd.f32 %v2177, %v2405
        %v2492 = vadd.f32 %v2178, %v2410
        %v2493 = vadd.f32 %v2179, %v2413
        %v2494 = vadd.f32 %v2180, %v2418
        %v2495 = vadd.f32 %v2181, %v2421
        %v2496 = vadd.f32 %v2182, %v2426
        %v2497 = vadd.f32 %v2183, %v2429
        %v2498 = vadd.f32 %v2184, %v2434
        %v2499 = vadd.f32 %v2185, %v2437
        %v2500 = vadd.f32 %v2186, %v2442
        %v2501 = vadd.f32 %v2187, %v2445
        %v2502 = vadd.f32 %v2188, %v2450
        %v2503 = vadd.f32 %v2189, %v2453
        %v2504 = vadd.f32 %v2190, %v2458
        %v2505 = vadd.f32 %v2191, %v2461
        %v2506 = vadd.f32 %v2192, %v2466
        %v2507 = vadd.f32 %v2193, %v2469
        %v2508 = vadd.f32 %v2194, %v2474
        %v2509 = vadd.f32 %v2195, %v2477
        %v2510 = vadd.f32 %v2196, %v2482
        %v2511 = vadd.f32 %v2197, %v2485
        %v2512 = vld [vmem:[%s283 + $0x18] sm:$0xf]
        %v2513 = vld [vmem:[%s283 + $0x1c] sm:$0xf]
        %v2514 = vld [vmem:[%s283 + $0x20] sm:$0xf]
        %v2515 = vld [vmem:[%s283 + $0x24] sm:$0xf]
        %v2516 = vld [vmem:[%s283 + $0x28] sm:$0xf]
        %v2517 = vld [vmem:[%s283 + $0x2c] sm:$0xf]
        %v2518 = vld [vmem:[%s283 + $0x30] sm:$0xf]
        %v2519 = vld [vmem:[%s283 + $0x34] sm:$0xf]
        %v2520 = vld [vmem:[%s283 + $0x38] sm:$0xf]
        %v2521 = vld [vmem:[%s283 + $0x3c] sm:$0xf]
        %v2522 = vld [vmem:[%s283 + $0x40] sm:$0xf]
        %v2523 = vld [vmem:[%s283 + $0x44] sm:$0xf]
        %v2524 = vld [vmem:[%s283 + $0x48] sm:$0xf]
        %v2525 = vld [vmem:[%s283 + $0x4c] sm:$0xf]
        %v2526 = vld [vmem:[%s283 + $0x50] sm:$0xf]
        %v2527 = vld [vmem:[%s283 + $0x54] sm:$0xf]
        %v2528 = vld [vmem:[%s283 + $0x58] sm:$0xf]
        %v2529 = vld [vmem:[%s283 + $0x5c] sm:$0xf]
        %v2530 = vld [vmem:[%s283 + $0x60] sm:$0xf]
        %v2531 = vld [vmem:[%s283 + $0x64] sm:$0xf]
        %v2532 = vld [vmem:[%s283 + $0x68] sm:$0xf]
        %v2533 = vld [vmem:[%s283 + $0x6c] sm:$0xf]
        %v2534 = vld [vmem:[%s283 + $0x70] sm:$0xf]
        %v2535 = vld [vmem:[%s283 + $0x74] sm:$0xf]
        %v2536 = vld [vmem:[%s283 + $0x78] sm:$0x1]
        %s2537 = scalar_lea.vmem [#allocation4], 448
        %v2538 = vld [vmem:[%s2537] sm:$0xf]
        %v2539 = vld [vmem:[%s2537 + $0x4] sm:$0xf]
        %v2540 = vld [vmem:[%s2537 + $0x8] sm:$0xf]
        %v2541 = vld [vmem:[%s2537 + $0xc] sm:$0xf]
        %v2542 = vld [vmem:[%s2537 + $0x10] sm:$0xf]
        %v2543 = vld [vmem:[%s2537 + $0x14] sm:$0xf]
        %v2544 = vld [vmem:[%s2537 + $0x18] sm:$0xf]
        %v2545 = vld [vmem:[%s2537 + $0x1c] sm:$0xf]
        %v2546 = vld [vmem:[%s2537 + $0x20] sm:$0xf]
        %v2547 = vld [vmem:[%s2537 + $0x24] sm:$0xf]
        %v2548 = vld [vmem:[%s2537 + $0x28] sm:$0xf]
        %v2549 = vld [vmem:[%s2537 + $0x2c] sm:$0xf]
        %v2550 = vld [vmem:[%s2537 + $0x30] sm:$0xf]
        %v2551 = vld [vmem:[%s2537 + $0x34] sm:$0xf]
        %v2552 = vld [vmem:[%s2537 + $0x38] sm:$0xf]
        %v2553 = vld [vmem:[%s2537 + $0x3c] sm:$0xf]
        %v2579 = vunpack.c.l.b16 %v2512
        %v2580 = vunpack.c.l.b16 %v2513
        %v2581 = vunpack.c.l.b16 %v2514
        %v2582 = vunpack.c.l.b16 %v2515
        %v2583 = vunpack.c.l.b16 %v2516
        %v2584 = vunpack.c.l.b16 %v2517
        %v2585 = vunpack.c.l.b16 %v2518
        %v2586 = vunpack.c.l.b16 %v2519
        %v2587 = vunpack.c.l.b16 %v2520
        %v2588 = vunpack.c.l.b16 %v2521
        %v2589 = vunpack.c.l.b16 %v2522
        %v2590 = vunpack.c.l.b16 %v2523
        %v2591 = vunpack.c.l.b16 %v2524
        %v2592 = vunpack.c.l.b16 %v2525
        %v2593 = vunpack.c.l.b16 %v2526
        %v2594 = vunpack.c.l.b16 %v2527
        %v2595 = vunpack.c.l.b16 %v2528
        %v2596 = vunpack.c.l.b16 %v2529
        %v2597 = vunpack.c.l.b16 %v2530
        %v2598 = vunpack.c.l.b16 %v2531
        %v2599 = vunpack.c.l.b16 %v2532
        %v2600 = vunpack.c.l.b16 %v2533
        %v2601 = vunpack.c.l.b16 %v2534
        %v2602 = vunpack.c.l.b16 %v2535
        %v2603 = vunpack.c.l.b16 %v2536
        %v2604 = vpack.c.b16 %v2580, %v2579
        %v2605 = vpack.c.b16 %v2582, %v2581
        %v2606 = vpack.c.b16 %v2584, %v2583
        %v2607 = vpack.c.b16 %v2586, %v2585
        %v2608 = vpack.c.b16 %v2588, %v2587
        %v2609 = vpack.c.b16 %v2590, %v2589
        %v2610 = vpack.c.b16 %v2592, %v2591
        %v2611 = vpack.c.b16 %v2594, %v2593
        %v2612 = vpack.c.b16 %v2596, %v2595
        %v2613 = vpack.c.b16 %v2598, %v2597
        %v2614 = vpack.c.b16 %v2600, %v2599
        %v2615 = vpack.c.b16 %v2602, %v2601
        %v2616 = vpack.c.b16 %v2603, %v2603
        %v2618 = vshrl.u32 %v2604, 16
        %v2620 = vshll.u32 %v2604, 16
        %v2622 = vrot.slane %v2620, 1
        %v2623 = vor.u32 %v2618, %v2622
        %v2625 = vshll.u32 %v2605, 16
        %v2627 = vrot.slane %v2625, 1
        %v2628 = vsel %vm468, %v2623, %v2627
        %v2629 = vshrl.u32 %v2605, 16
        %v2631 = vor.u32 %v2629, %v2627
        %v2633 = vshll.u32 %v2606, 16
        %v2635 = vrot.slane %v2633, 1
        %v2636 = vsel %vm468, %v2631, %v2635
        %v2637 = vshrl.u32 %v2606, 16
        %v2639 = vor.u32 %v2637, %v2635
        %v2641 = vshll.u32 %v2607, 16
        %v2643 = vrot.slane %v2641, 1
        %v2644 = vsel %vm468, %v2639, %v2643
        %v2645 = vshrl.u32 %v2607, 16
        %v2647 = vor.u32 %v2645, %v2643
        %v2649 = vshll.u32 %v2608, 16
        %v2651 = vrot.slane %v2649, 1
        %v2652 = vsel %vm468, %v2647, %v2651
        %v2653 = vshrl.u32 %v2608, 16
        %v2655 = vor.u32 %v2653, %v2651
        %v2657 = vshll.u32 %v2609, 16
        %v2659 = vrot.slane %v2657, 1
        %v2660 = vsel %vm468, %v2655, %v2659
        %v2661 = vshrl.u32 %v2609, 16
        %v2663 = vor.u32 %v2661, %v2659
        %v2665 = vshll.u32 %v2610, 16
        %v2667 = vrot.slane %v2665, 1
        %v2668 = vsel %vm468, %v2663, %v2667
        %v2669 = vshrl.u32 %v2610, 16
        %v2671 = vor.u32 %v2669, %v2667
        %v2673 = vshll.u32 %v2611, 16
        %v2675 = vrot.slane %v2673, 1
        %v2676 = vsel %vm468, %v2671, %v2675
        %v2677 = vshrl.u32 %v2611, 16
        %v2679 = vor.u32 %v2677, %v2675
        %v2681 = vshll.u32 %v2612, 16
        %v2683 = vrot.slane %v2681, 1
        %v2684 = vsel %vm468, %v2679, %v2683
        %v2685 = vshrl.u32 %v2612, 16
        %v2687 = vor.u32 %v2685, %v2683
        %v2689 = vshll.u32 %v2613, 16
        %v2691 = vrot.slane %v2689, 1
        %v2692 = vsel %vm468, %v2687, %v2691
        %v2693 = vshrl.u32 %v2613, 16
        %v2695 = vor.u32 %v2693, %v2691
        %v2697 = vshll.u32 %v2614, 16
        %v2699 = vrot.slane %v2697, 1
        %v2700 = vsel %vm468, %v2695, %v2699
        %v2701 = vshrl.u32 %v2614, 16
        %v2703 = vor.u32 %v2701, %v2699
        %v2705 = vshll.u32 %v2615, 16
        %v2707 = vrot.slane %v2705, 1
        %v2708 = vsel %vm468, %v2703, %v2707
        %v2709 = vshrl.u32 %v2615, 16
        %v2711 = vor.u32 %v2709, %v2707
        %v2713 = vshll.u32 %v2616, 16
        %v2715 = vrot.slane %v2713, 1
        %v2716 = vsel %vm468, %v2711, %v2715
        %v2745 = vunpack.c.l.b16 %v2538
        %v2746 = vunpack.c.l.b16 %v2539
        %v2747 = vunpack.c.l.b16 %v2540
        %v2748 = vunpack.c.l.b16 %v2541
        %v2749 = vunpack.c.l.b16 %v2542
        %v2750 = vunpack.c.l.b16 %v2543
        %v2751 = vunpack.c.l.b16 %v2544
        %v2752 = vunpack.c.l.b16 %v2545
        %v2753 = vunpack.c.l.b16 %v2546
        %v2754 = vunpack.c.l.b16 %v2547
        %v2755 = vunpack.c.l.b16 %v2548
        %v2756 = vunpack.c.l.b16 %v2549
        %v2757 = vunpack.c.l.b16 %v2550
        %v2758 = vunpack.c.l.b16 %v2551
        %v2759 = vunpack.c.l.b16 %v2552
        %v2760 = vunpack.c.l.b16 %v2553
        %v2761 = vpack.c.b16 %v2746, %v2745
        %v2762 = vpack.c.b16 %v2748, %v2747
        %v2763 = vpack.c.b16 %v2750, %v2749
        %v2764 = vpack.c.b16 %v2752, %v2751
        %v2765 = vpack.c.b16 %v2754, %v2753
        %v2766 = vpack.c.b16 %v2756, %v2755
        %v2767 = vpack.c.b16 %v2758, %v2757
        %v2768 = vpack.c.b16 %v2760, %v2759
        %2777 = vmatprep.subr.bf16.mxu0 0
        %2778 = vmatpush1.bf16.msra.mxu0 %v2768
        %2779 = vmatprep.subr.bf16.mxu0 0
        %2780 = vmatpush1.bf16.msra.mxu0 %v2767
        %2781 = vmatprep.subr.bf16.mxu0 0
        %2782 = vmatpush1.bf16.msra.mxu0 %v2766
        %2783 = vmatprep.subr.bf16.mxu0 0
        %2784 = vmatpush1.bf16.msra.mxu0 %v2765
        %2785 = vmatprep.subr.bf16.mxu0 0
        %2786 = vmatpush1.bf16.msra.mxu0 %v2764
        %2787 = vmatprep.subr.bf16.mxu0 0
        %2788 = vmatpush1.bf16.msra.mxu0 %v2763
        %2789 = vmatprep.subr.bf16.mxu0 0
        %2790 = vmatpush1.bf16.msra.mxu0 %v2762
        %2791 = vmatprep.subr.bf16.mxu0 0
        %2792 = vmatpush1.bf16.msra.mxu0 %v2761
        %2793 = vmatprep.subr.bf16.mxu0 0
        %2794 = vmatpush2.bf16.msra.mxu0 0
        %2795 = vmatprep.subr.bf16.mxu0 0
        %2796 = vmatpush2.bf16.msra.mxu0 0
        %2797 = vmatprep.subr.bf16.mxu0 0
        %2798 = vmatpush2.bf16.msra.mxu0 0
        %2799 = vmatprep.subr.bf16.mxu0 0
        %2800 = vmatpush2.bf16.msra.mxu0 0
        %2801 = vmatprep.subr.bf16.mxu0 0
        %2802 = vmatpush2.bf16.msra.mxu0 0
        %2803 = vmatprep.subr.bf16.mxu0 0
        %2804 = vmatpush2.bf16.msra.mxu0 0
        %2805 = vmatprep.subr.bf16.mxu0 0
        %2806 = vmatpush2.bf16.msra.mxu0 0
        %2807 = vmatprep.subr.bf16.mxu0 0
        %2808 = vmatpush2.bf16.msra.mxu0 0
        %2809 = vmatprep.mubr.bf16.mxu0 0
        %2810 = vmatmul.mubr.bf16.gmra.mxu0 %v2628
        %v2811 = vpop.f32.mrf.mxu0
        %v2812 = vadd.f32 0.0, %v2811
        %v2813 = vpop.f32.mrf.mxu0
        %v2814 = vpop.f32.mrf.mxu0
        %v2815 = vadd.f32 0.0, %v2814
        %v2816 = vpop.f32.mrf.mxu0
        %2817 = vmatprep.mubr.bf16.mxu0 0
        %2818 = vmatmul.mubr.bf16.gmra.mxu0 %v2636
        %v2819 = vpop.f32.mrf.mxu0
        %v2820 = vadd.f32 0.0, %v2819
        %v2821 = vpop.f32.mrf.mxu0
        %v2822 = vpop.f32.mrf.mxu0
        %v2823 = vadd.f32 0.0, %v2822
        %v2824 = vpop.f32.mrf.mxu0
        %2825 = vmatprep.mubr.bf16.mxu0 0
        %2826 = vmatmul.mubr.bf16.gmra.mxu0 %v2644
        %v2827 = vpop.f32.mrf.mxu0
        %v2828 = vadd.f32 0.0, %v2827
        %v2829 = vpop.f32.mrf.mxu0
        %v2830 = vpop.f32.mrf.mxu0
        %v2831 = vadd.f32 0.0, %v2830
        %v2832 = vpop.f32.mrf.mxu0
        %2833 = vmatprep.mubr.bf16.mxu0 0
        %2834 = vmatmul.mubr.bf16.gmra.mxu0 %v2652
        %v2835 = vpop.f32.mrf.mxu0
        %v2836 = vadd.f32 0.0, %v2835
        %v2837 = vpop.f32.mrf.mxu0
        %v2838 = vpop.f32.mrf.mxu0
        %v2839 = vadd.f32 0.0, %v2838
        %v2840 = vpop.f32.mrf.mxu0
        %2841 = vmatprep.mubr.bf16.mxu0 0
        %2842 = vmatmul.mubr.bf16.gmra.mxu0 %v2660
        %v2843 = vpop.f32.mrf.mxu0
        %v2844 = vadd.f32 0.0, %v2843
        %v2845 = vpop.f32.mrf.mxu0
        %v2846 = vpop.f32.mrf.mxu0
        %v2847 = vadd.f32 0.0, %v2846
        %v2848 = vpop.f32.mrf.mxu0
        %2849 = vmatprep.mubr.bf16.mxu0 0
        %2850 = vmatmul.mubr.bf16.gmra.mxu0 %v2668
        %v2851 = vpop.f32.mrf.mxu0
        %v2852 = vadd.f32 0.0, %v2851
        %v2853 = vpop.f32.mrf.mxu0
        %v2854 = vpop.f32.mrf.mxu0
        %v2855 = vadd.f32 0.0, %v2854
        %v2856 = vpop.f32.mrf.mxu0
        %2857 = vmatprep.mubr.bf16.mxu0 0
        %2858 = vmatmul.mubr.bf16.gmra.mxu0 %v2676
        %v2859 = vpop.f32.mrf.mxu0
        %v2860 = vadd.f32 0.0, %v2859
        %v2861 = vpop.f32.mrf.mxu0
        %v2862 = vpop.f32.mrf.mxu0
        %v2863 = vadd.f32 0.0, %v2862
        %v2864 = vpop.f32.mrf.mxu0
        %2865 = vmatprep.mubr.bf16.mxu0 0
        %2866 = vmatmul.mubr.bf16.gmra.mxu0 %v2684
        %v2867 = vpop.f32.mrf.mxu0
        %v2868 = vadd.f32 0.0, %v2867
        %v2869 = vpop.f32.mrf.mxu0
        %v2870 = vpop.f32.mrf.mxu0
        %v2871 = vadd.f32 0.0, %v2870
        %v2872 = vpop.f32.mrf.mxu0
        %2873 = vmatprep.mubr.bf16.mxu0 0
        %2874 = vmatmul.mubr.bf16.gmra.mxu0 %v2692
        %v2875 = vpop.f32.mrf.mxu0
        %v2876 = vadd.f32 0.0, %v2875
        %v2877 = vpop.f32.mrf.mxu0
        %v2878 = vpop.f32.mrf.mxu0
        %v2879 = vadd.f32 0.0, %v2878
        %v2880 = vpop.f32.mrf.mxu0
        %2881 = vmatprep.mubr.bf16.mxu0 0
        %2882 = vmatmul.mubr.bf16.gmra.mxu0 %v2700
        %v2883 = vpop.f32.mrf.mxu0
        %v2884 = vadd.f32 0.0, %v2883
        %v2885 = vpop.f32.mrf.mxu0
        %v2886 = vpop.f32.mrf.mxu0
        %v2887 = vadd.f32 0.0, %v2886
        %v2888 = vpop.f32.mrf.mxu0
        %2889 = vmatprep.mubr.bf16.mxu0 0
        %2890 = vmatmul.mubr.bf16.gmra.mxu0 %v2708
        %v2891 = vpop.f32.mrf.mxu0
        %v2892 = vadd.f32 0.0, %v2891
        %v2893 = vpop.f32.mrf.mxu0
        %v2894 = vpop.f32.mrf.mxu0
        %v2895 = vadd.f32 0.0, %v2894
        %v2896 = vpop.f32.mrf.mxu0
        %2897 = vmatprep.mubr.bf16.mxu0 0
        %2898 = vmatmul.mubr.bf16.gmra.mxu0 %v2716
        %v2899 = vpop.f32.mrf.mxu0
        %v2900 = vadd.f32 0.0, %v2899
        %v2901 = vpop.f32.mrf.mxu0
        %v2902 = vpop.f32.mrf.mxu0
        %v2903 = vadd.f32 0.0, %v2902
        %v2904 = vpop.f32.mrf.mxu0
        %2905 = vdwg.mxu0
        %v2906 = vadd.f32 %v2488, %v2812
        %v2907 = vadd.f32 %v2489, %v2815
        %v2908 = vadd.f32 %v2490, %v2820
        %v2909 = vadd.f32 %v2491, %v2823
        %v2910 = vadd.f32 %v2492, %v2828
        %v2911 = vadd.f32 %v2493, %v2831
        %v2912 = vadd.f32 %v2494, %v2836
        %v2913 = vadd.f32 %v2495, %v2839
        %v2914 = vadd.f32 %v2496, %v2844
        %v2915 = vadd.f32 %v2497, %v2847
        %v2916 = vadd.f32 %v2498, %v2852
        %v2917 = vadd.f32 %v2499, %v2855
        %v2918 = vadd.f32 %v2500, %v2860
        %v2919 = vadd.f32 %v2501, %v2863
        %v2920 = vadd.f32 %v2502, %v2868
        %v2921 = vadd.f32 %v2503, %v2871
        %v2922 = vadd.f32 %v2504, %v2876
        %v2923 = vadd.f32 %v2505, %v2879
        %v2924 = vadd.f32 %v2506, %v2884
        %v2925 = vadd.f32 %v2507, %v2887
        %v2926 = vadd.f32 %v2508, %v2892
        %v2927 = vadd.f32 %v2509, %v2895
        %v2928 = vadd.f32 %v2510, %v2900
        %v2929 = vadd.f32 %v2511, %v2903
        %v2930 = vld [vmem:[%s283 + $0x18] sm:$0xe]
        %s2931 = scalar_lea.vmem [#allocation4], 512
        %v2932 = vld [vmem:[%s2931] sm:$0xf]
        %v2933 = vld [vmem:[%s2931 + $0x4] sm:$0xf]
        %v2934 = vld [vmem:[%s2931 + $0x8] sm:$0xf]
        %v2935 = vld [vmem:[%s2931 + $0xc] sm:$0xf]
        %v2936 = vld [vmem:[%s2931 + $0x10] sm:$0xf]
        %v2937 = vld [vmem:[%s2931 + $0x14] sm:$0xf]
        %v2938 = vld [vmem:[%s2931 + $0x18] sm:$0xf]
        %v2939 = vld [vmem:[%s2931 + $0x1c] sm:$0xf]
        %v2940 = vld [vmem:[%s2931 + $0x20] sm:$0xf]
        %v2941 = vld [vmem:[%s2931 + $0x24] sm:$0xf]
        %v2942 = vld [vmem:[%s2931 + $0x28] sm:$0xf]
        %v2943 = vld [vmem:[%s2931 + $0x2c] sm:$0xf]
        %v2944 = vld [vmem:[%s2931 + $0x30] sm:$0xf]
        %v2945 = vld [vmem:[%s2931 + $0x34] sm:$0xf]
        %v2946 = vld [vmem:[%s2931 + $0x38] sm:$0xf]
        %v2947 = vld [vmem:[%s2931 + $0x3c] sm:$0xf]
        %v2949 = vunpack.c.l.b16 %v2930
        %v2950 = vpack.c.b16 %v2580, %v2949
        %v2951 = vrot.slane %v2950, 1
        %v2952 = vrot.slane %v2605, 1
        %v2953 = vsel %vm968, %v2951, %v2952
        %v2954 = vrot.slane %v2606, 1
        %v2955 = vsel %vm968, %v2952, %v2954
        %v2956 = vrot.slane %v2607, 1
        %v2957 = vsel %vm968, %v2954, %v2956
        %v2958 = vrot.slane %v2608, 1
        %v2959 = vsel %vm968, %v2956, %v2958
        %v2960 = vrot.slane %v2609, 1
        %v2961 = vsel %vm968, %v2958, %v2960
        %v2962 = vrot.slane %v2610, 1
        %v2963 = vsel %vm968, %v2960, %v2962
        %v2964 = vrot.slane %v2611, 1
        %v2965 = vsel %vm968, %v2962, %v2964
        %v2966 = vrot.slane %v2612, 1
        %v2967 = vsel %vm968, %v2964, %v2966
        %v2968 = vrot.slane %v2613, 1
        %v2969 = vsel %vm968, %v2966, %v2968
        %v2970 = vrot.slane %v2614, 1
        %v2971 = vsel %vm968, %v2968, %v2970
        %v2972 = vrot.slane %v2615, 1
        %v2973 = vsel %vm968, %v2970, %v2972
        %v2974 = vrot.slane %v2616, 1
        %v2975 = vsel %vm968, %v2972, %v2974
        %v3004 = vunpack.c.l.b16 %v2932
        %v3005 = vunpack.c.l.b16 %v2933
        %v3006 = vunpack.c.l.b16 %v2934
        %v3007 = vunpack.c.l.b16 %v2935
        %v3008 = vunpack.c.l.b16 %v2936
        %v3009 = vunpack.c.l.b16 %v2937
        %v3010 = vunpack.c.l.b16 %v2938
        %v3011 = vunpack.c.l.b16 %v2939
        %v3012 = vunpack.c.l.b16 %v2940
        %v3013 = vunpack.c.l.b16 %v2941
        %v3014 = vunpack.c.l.b16 %v2942
        %v3015 = vunpack.c.l.b16 %v2943
        %v3016 = vunpack.c.l.b16 %v2944
        %v3017 = vunpack.c.l.b16 %v2945
        %v3018 = vunpack.c.l.b16 %v2946
        %v3019 = vunpack.c.l.b16 %v2947
        %v3020 = vpack.c.b16 %v3005, %v3004
        %v3021 = vpack.c.b16 %v3007, %v3006
        %v3022 = vpack.c.b16 %v3009, %v3008
        %v3023 = vpack.c.b16 %v3011, %v3010
        %v3024 = vpack.c.b16 %v3013, %v3012
        %v3025 = vpack.c.b16 %v3015, %v3014
        %v3026 = vpack.c.b16 %v3017, %v3016
        %v3027 = vpack.c.b16 %v3019, %v3018
        %3036 = vmatprep.subr.bf16.mxu0 0
        %3037 = vmatpush1.bf16.msra.mxu0 %v3027
        %3038 = vmatprep.subr.bf16.mxu0 0
        %3039 = vmatpush1.bf16.msra.mxu0 %v3026
        %3040 = vmatprep.subr.bf16.mxu0 0
        %3041 = vmatpush1.bf16.msra.mxu0 %v3025
        %3042 = vmatprep.subr.bf16.mxu0 0
        %3043 = vmatpush1.bf16.msra.mxu0 %v3024
        %3044 = vmatprep.subr.bf16.mxu0 0
        %3045 = vmatpush1.bf16.msra.mxu0 %v3023
        %3046 = vmatprep.subr.bf16.mxu0 0
        %3047 = vmatpush1.bf16.msra.mxu0 %v3022
        %3048 = vmatprep.subr.bf16.mxu0 0
        %3049 = vmatpush1.bf16.msra.mxu0 %v3021
        %3050 = vmatprep.subr.bf16.mxu0 0
        %3051 = vmatpush1.bf16.msra.mxu0 %v3020
        %3052 = vmatprep.subr.bf16.mxu0 0
        %3053 = vmatpush2.bf16.msra.mxu0 0
        %3054 = vmatprep.subr.bf16.mxu0 0
        %3055 = vmatpush2.bf16.msra.mxu0 0
        %3056 = vmatprep.subr.bf16.mxu0 0
        %3057 = vmatpush2.bf16.msra.mxu0 0
        %3058 = vmatprep.subr.bf16.mxu0 0
        %3059 = vmatpush2.bf16.msra.mxu0 0
        %3060 = vmatprep.subr.bf16.mxu0 0
        %3061 = vmatpush2.bf16.msra.mxu0 0
        %3062 = vmatprep.subr.bf16.mxu0 0
        %3063 = vmatpush2.bf16.msra.mxu0 0
        %3064 = vmatprep.subr.bf16.mxu0 0
        %3065 = vmatpush2.bf16.msra.mxu0 0
        %3066 = vmatprep.subr.bf16.mxu0 0
        %3067 = vmatpush2.bf16.msra.mxu0 0
        %3068 = vmatprep.mubr.bf16.mxu0 0
        %3069 = vmatmul.mubr.bf16.gmra.mxu0 %v2953
        %v3070 = vpop.f32.mrf.mxu0
        %v3071 = vadd.f32 0.0, %v3070
        %v3072 = vpop.f32.mrf.mxu0
        %v3073 = vpop.f32.mrf.mxu0
        %v3074 = vadd.f32 0.0, %v3073
        %v3075 = vpop.f32.mrf.mxu0
        %3076 = vmatprep.mubr.bf16.mxu0 0
        %3077 = vmatmul.mubr.bf16.gmra.mxu0 %v2955
        %v3078 = vpop.f32.mrf.mxu0
        %v3079 = vadd.f32 0.0, %v3078
        %v3080 = vpop.f32.mrf.mxu0
        %v3081 = vpop.f32.mrf.mxu0
        %v3082 = vadd.f32 0.0, %v3081
        %v3083 = vpop.f32.mrf.mxu0
        %3084 = vmatprep.mubr.bf16.mxu0 0
        %3085 = vmatmul.mubr.bf16.gmra.mxu0 %v2957
        %v3086 = vpop.f32.mrf.mxu0
        %v3087 = vadd.f32 0.0, %v3086
        %v3088 = vpop.f32.mrf.mxu0
        %v3089 = vpop.f32.mrf.mxu0
        %v3090 = vadd.f32 0.0, %v3089
        %v3091 = vpop.f32.mrf.mxu0
        %3092 = vmatprep.mubr.bf16.mxu0 0
        %3093 = vmatmul.mubr.bf16.gmra.mxu0 %v2959
        %v3094 = vpop.f32.mrf.mxu0
        %v3095 = vadd.f32 0.0, %v3094
        %v3096 = vpop.f32.mrf.mxu0
        %v3097 = vpop.f32.mrf.mxu0
        %v3098 = vadd.f32 0.0, %v3097
        %v3099 = vpop.f32.mrf.mxu0
        %3100 = vmatprep.mubr.bf16.mxu0 0
        %3101 = vmatmul.mubr.bf16.gmra.mxu0 %v2961
        %v3102 = vpop.f32.mrf.mxu0
        %v3103 = vadd.f32 0.0, %v3102
        %v3104 = vpop.f32.mrf.mxu0
        %v3105 = vpop.f32.mrf.mxu0
        %v3106 = vadd.f32 0.0, %v3105
        %v3107 = vpop.f32.mrf.mxu0
        %3108 = vmatprep.mubr.bf16.mxu0 0
        %3109 = vmatmul.mubr.bf16.gmra.mxu0 %v2963
        %v3110 = vpop.f32.mrf.mxu0
        %v3111 = vadd.f32 0.0, %v3110
        %v3112 = vpop.f32.mrf.mxu0
        %v3113 = vpop.f32.mrf.mxu0
        %v3114 = vadd.f32 0.0, %v3113
        %v3115 = vpop.f32.mrf.mxu0
        %3116 = vmatprep.mubr.bf16.mxu0 0
        %3117 = vmatmul.mubr.bf16.gmra.mxu0 %v2965
        %v3118 = vpop.f32.mrf.mxu0
        %v3119 = vadd.f32 0.0, %v3118
        %v3120 = vpop.f32.mrf.mxu0
        %v3121 = vpop.f32.mrf.mxu0
        %v3122 = vadd.f32 0.0, %v3121
        %v3123 = vpop.f32.mrf.mxu0
        %3124 = vmatprep.mubr.bf16.mxu0 0
        %3125 = vmatmul.mubr.bf16.gmra.mxu0 %v2967
        %v3126 = vpop.f32.mrf.mxu0
        %v3127 = vadd.f32 0.0, %v3126
        %v3128 = vpop.f32.mrf.mxu0
        %v3129 = vpop.f32.mrf.mxu0
        %v3130 = vadd.f32 0.0, %v3129
        %v3131 = vpop.f32.mrf.mxu0
        %3132 = vmatprep.mubr.bf16.mxu0 0
        %3133 = vmatmul.mubr.bf16.gmra.mxu0 %v2969
        %v3134 = vpop.f32.mrf.mxu0
        %v3135 = vadd.f32 0.0, %v3134
        %v3136 = vpop.f32.mrf.mxu0
        %v3137 = vpop.f32.mrf.mxu0
        %v3138 = vadd.f32 0.0, %v3137
        %v3139 = vpop.f32.mrf.mxu0
        %3140 = vmatprep.mubr.bf16.mxu0 0
        %3141 = vmatmul.mubr.bf16.gmra.mxu0 %v2971
        %v3142 = vpop.f32.mrf.mxu0
        %v3143 = vadd.f32 0.0, %v3142
        %v3144 = vpop.f32.mrf.mxu0
        %v3145 = vpop.f32.mrf.mxu0
        %v3146 = vadd.f32 0.0, %v3145
        %v3147 = vpop.f32.mrf.mxu0
        %3148 = vmatprep.mubr.bf16.mxu0 0
        %3149 = vmatmul.mubr.bf16.gmra.mxu0 %v2973
        %v3150 = vpop.f32.mrf.mxu0
        %v3151 = vadd.f32 0.0, %v3150
        %v3152 = vpop.f32.mrf.mxu0
        %v3153 = vpop.f32.mrf.mxu0
        %v3154 = vadd.f32 0.0, %v3153
        %v3155 = vpop.f32.mrf.mxu0
        %3156 = vmatprep.mubr.bf16.mxu0 0
        %3157 = vmatmul.mubr.bf16.gmra.mxu0 %v2975
        %v3158 = vpop.f32.mrf.mxu0
        %v3159 = vadd.f32 0.0, %v3158
        %v3160 = vpop.f32.mrf.mxu0
        %v3161 = vpop.f32.mrf.mxu0
        %v3162 = vadd.f32 0.0, %v3161
        %v3163 = vpop.f32.mrf.mxu0
        %3164 = vdwg.mxu0
        %v3165 = vadd.f32 %v2906, %v3071
        %v3166 = vadd.f32 %v2907, %v3074
        %v3167 = vadd.f32 %v2908, %v3079
        %v3168 = vadd.f32 %v2909, %v3082
        %v3169 = vadd.f32 %v2910, %v3087
        %v3170 = vadd.f32 %v2911, %v3090
        %v3171 = vadd.f32 %v2912, %v3095
        %v3172 = vadd.f32 %v2913, %v3098
        %v3173 = vadd.f32 %v2914, %v3103
        %v3174 = vadd.f32 %v2915, %v3106
        %v3175 = vadd.f32 %v2916, %v3111
        %v3176 = vadd.f32 %v2917, %v3114
        %v3177 = vadd.f32 %v2918, %v3119
        %v3178 = vadd.f32 %v2919, %v3122
        %v3179 = vadd.f32 %v2920, %v3127
        %v3180 = vadd.f32 %v2921, %v3130
        %v3181 = vadd.f32 %v2922, %v3135
        %v3182 = vadd.f32 %v2923, %v3138
        %v3183 = vadd.f32 %v2924, %v3143
        %v3184 = vadd.f32 %v2925, %v3146
        %v3185 = vadd.f32 %v2926, %v3151
        %v3186 = vadd.f32 %v2927, %v3154
        %v3187 = vadd.f32 %v2928, %v3159
        %v3188 = vadd.f32 %v2929, %v3162
        %v3190 = vlaneseq
        %v3191 = vshrl.u32 %v3190, 7
        %v3192 = vsub.s32 0, %v3191
        %v3193 = vrot.slane %v322, %v3192
        %v3195 = vadd.f32 %v3165, %v3193
        %v3196 = vadd.f32 %v3166, %v3193
        %v3197 = vadd.f32 %v3167, %v3193
        %v3198 = vadd.f32 %v3168, %v3193
        %v3199 = vadd.f32 %v3169, %v3193
        %v3200 = vadd.f32 %v3170, %v3193
        %v3201 = vadd.f32 %v3171, %v3193
        %v3202 = vadd.f32 %v3172, %v3193
        %v3203 = vadd.f32 %v3173, %v3193
        %v3204 = vadd.f32 %v3174, %v3193
        %v3205 = vadd.f32 %v3175, %v3193
        %v3206 = vadd.f32 %v3176, %v3193
        %v3207 = vadd.f32 %v3177, %v3193
        %v3208 = vadd.f32 %v3178, %v3193
        %v3209 = vadd.f32 %v3179, %v3193
        %v3210 = vadd.f32 %v3180, %v3193
        %v3211 = vadd.f32 %v3181, %v3193
        %v3212 = vadd.f32 %v3182, %v3193
        %v3213 = vadd.f32 %v3183, %v3193
        %v3214 = vadd.f32 %v3184, %v3193
        %v3215 = vadd.f32 %v3185, %v3193
        %v3216 = vadd.f32 %v3186, %v3193
        %v3217 = vadd.f32 %v3187, %v3193
        %v3218 = vadd.f32 %v3188, %v3193
        %v3219 = vpack.c.bf16 %v3196, %v3195
        %v3220 = vpack.c.bf16 %v3198, %v3197
        %v3221 = vpack.c.bf16 %v3200, %v3199
        %v3222 = vpack.c.bf16 %v3202, %v3201
        %v3223 = vpack.c.bf16 %v3204, %v3203
        %v3224 = vpack.c.bf16 %v3206, %v3205
        %v3225 = vpack.c.bf16 %v3208, %v3207
        %v3226 = vpack.c.bf16 %v3210, %v3209
        %v3227 = vpack.c.bf16 %v3212, %v3211
        %v3228 = vpack.c.bf16 %v3214, %v3213
        %v3229 = vpack.c.bf16 %v3216, %v3215
        %v3230 = vpack.c.bf16 %v3218, %v3217
        %v3243 = vunpack.c.l.b16 %v3219
        %v3244 = vunpack.c.h.b16 %v3219
        %v3245 = vunpack.c.l.b16 %v3220
        %v3246 = vunpack.c.h.b16 %v3220
        %v3247 = vunpack.c.l.b16 %v3221
        %v3248 = vunpack.c.h.b16 %v3221
        %v3249 = vunpack.c.l.b16 %v3222
        %v3250 = vunpack.c.h.b16 %v3222
        %v3251 = vunpack.c.l.b16 %v3223
        %v3252 = vunpack.c.h.b16 %v3223
        %v3253 = vunpack.c.l.b16 %v3224
        %v3254 = vunpack.c.h.b16 %v3224
        %v3255 = vunpack.c.l.b16 %v3225
        %v3256 = vunpack.c.h.b16 %v3225
        %v3257 = vunpack.c.l.b16 %v3226
        %v3258 = vunpack.c.h.b16 %v3226
        %v3259 = vunpack.c.l.b16 %v3227
        %v3260 = vunpack.c.h.b16 %v3227
        %v3261 = vunpack.c.l.b16 %v3228
        %v3262 = vunpack.c.h.b16 %v3228
        %v3263 = vunpack.c.l.b16 %v3229
        %v3264 = vunpack.c.h.b16 %v3229
        %v3265 = vunpack.c.l.b16 %v3230
        %v3266 = vunpack.c.h.b16 %v3230
        %v3267 = vpack.c.b16 %v3243, %v3243
        %v3268 = vpack.c.b16 %v3244, %v3244
        %v3269 = vpack.c.b16 %v3245, %v3245
        %v3270 = vpack.c.b16 %v3246, %v3246
        %v3271 = vpack.c.b16 %v3247, %v3247
        %v3272 = vpack.c.b16 %v3248, %v3248
        %v3273 = vpack.c.b16 %v3249, %v3249
        %v3274 = vpack.c.b16 %v3250, %v3250
        %v3275 = vpack.c.b16 %v3251, %v3251
        %v3276 = vpack.c.b16 %v3252, %v3252
        %v3277 = vpack.c.b16 %v3253, %v3253
        %v3278 = vpack.c.b16 %v3254, %v3254
        %v3279 = vpack.c.b16 %v3255, %v3255
        %v3280 = vpack.c.b16 %v3256, %v3256
        %v3281 = vpack.c.b16 %v3257, %v3257
        %v3282 = vpack.c.b16 %v3258, %v3258
        %v3283 = vpack.c.b16 %v3259, %v3259
        %v3284 = vpack.c.b16 %v3260, %v3260
        %v3285 = vpack.c.b16 %v3261, %v3261
        %v3286 = vpack.c.b16 %v3262, %v3262
        %v3287 = vpack.c.b16 %v3263, %v3263
        %v3288 = vpack.c.b16 %v3264, %v3264
        %v3289 = vpack.c.b16 %v3265, %v3265
        %v3290 = vpack.c.b16 %v3266, %v3266
        %3315 = vst [vmem:[%s236] sm:$0xf] %v3267
        %3316 = vst [vmem:[%s236 + $0x4] sm:$0xf] %v3268
        %3317 = vst [vmem:[%s236 + $0x8] sm:$0xf] %v3269
        %3318 = vst [vmem:[%s236 + $0xc] sm:$0xf] %v3270
        %3319 = vst [vmem:[%s236 + $0x10] sm:$0xf] %v3271
        %3320 = vst [vmem:[%s236 + $0x14] sm:$0xf] %v3272
        %3321 = vst [vmem:[%s236 + $0x18] sm:$0xf] %v3273
        %3322 = vst [vmem:[%s236 + $0x1c] sm:$0xf] %v3274
        %3323 = vst [vmem:[%s236 + $0x20] sm:$0xf] %v3275
        %3324 = vst [vmem:[%s236 + $0x24] sm:$0xf] %v3276
        %3325 = vst [vmem:[%s236 + $0x28] sm:$0xf] %v3277
        %3326 = vst [vmem:[%s236 + $0x2c] sm:$0xf] %v3278
        %3327 = vst [vmem:[%s236 + $0x30] sm:$0xf] %v3279
        %3328 = vst [vmem:[%s236 + $0x34] sm:$0xf] %v3280
        %3329 = vst [vmem:[%s236 + $0x38] sm:$0xf] %v3281
        %3330 = vst [vmem:[%s236 + $0x3c] sm:$0xf] %v3282
        %3331 = vst [vmem:[%s236 + $0x40] sm:$0xf] %v3283
        %3332 = vst [vmem:[%s236 + $0x44] sm:$0xf] %v3284
        %3333 = vst [vmem:[%s236 + $0x48] sm:$0xf] %v3285
        %3334 = vst [vmem:[%s236 + $0x4c] sm:$0xf] %v3286
        %3335 = vst [vmem:[%s236 + $0x50] sm:$0xf] %v3287
        %3336 = vst [vmem:[%s236 + $0x54] sm:$0xf] %v3288
        %3337 = vst [vmem:[%s236 + $0x58] sm:$0xf] %v3289
        %3338 = vst [vmem:[%s236 + $0x5c] sm:$0xf] %v3290
        %3340 = vset.pattern.permute.xlu0 0
        %3341 = vperm.xlu0 %3340, %v323
        %v3342 = vpop.permute.xlu0 %3341
        %3345 = vset.pattern.permute.xlu0 0
        %3346 = vperm.xlu0 %3345, %v324
        %v3347 = vpop.permute.xlu0 %3346
        %3350 = vset.pattern.permute.xlu0 0
        %3351 = vperm.xlu0 %3350, %v325
        %v3352 = vpop.permute.xlu0 %3351
        %3355 = vset.pattern.permute.xlu0 0
        %3356 = vperm.xlu0 %3355, %v326
        %v3357 = vpop.permute.xlu0 %3356
        %3360 = vset.pattern.permute.xlu0 0
        %3361 = vperm.xlu0 %3360, %v327
        %v3362 = vpop.permute.xlu0 %3361
        %3365 = vset.pattern.permute.xlu0 0
        %3366 = vperm.xlu0 %3365, %v328
        %v3367 = vpop.permute.xlu0 %3366
        %3370 = vset.pattern.permute.xlu0 0
        %3371 = vperm.xlu0 %3370, %v329
        %v3372 = vpop.permute.xlu0 %3371
        %3375 = vset.pattern.permute.xlu0 0
        %3376 = vperm.xlu0 %3375, %v330
        %v3377 = vpop.permute.xlu0 %3376
        %3380 = vset.pattern.permute.xlu0 0
        %3381 = vperm.xlu0 %3380, %v331
        %v3382 = vpop.permute.xlu0 %3381
        %3385 = vset.pattern.permute.xlu0 0
        %3386 = vperm.xlu0 %3385, %v332
        %v3387 = vpop.permute.xlu0 %3386
        %3390 = vset.pattern.permute.xlu0 0
        %3391 = vperm.xlu0 %3390, %v333
        %v3392 = vpop.permute.xlu0 %3391
        %3395 = vset.pattern.permute.xlu0 0
        %3396 = vperm.xlu0 %3395, %v334
        %v3397 = vpop.permute.xlu0 %3396
        %3400 = vset.pattern.permute.xlu0 0
        %3401 = vperm.xlu0 %3400, %v335
        %v3402 = vpop.permute.xlu0 %3401
        %3405 = vset.pattern.permute.xlu0 0
        %3406 = vperm.xlu0 %3405, %v336
        %v3407 = vpop.permute.xlu0 %3406
        %3410 = vset.pattern.permute.xlu0 0
        %3411 = vperm.xlu0 %3410, %v337
        %v3412 = vpop.permute.xlu0 %3411
        %3415 = vset.pattern.permute.xlu0 0
        %3416 = vperm.xlu0 %3415, %v338
        %v3417 = vpop.permute.xlu0 %3416
        %3420 = vset.pattern.permute.xlu0 0
        %3421 = vperm.xlu0 %3420, %v339
        %v3422 = vpop.permute.xlu0 %3421
        %3425 = vset.pattern.permute.xlu0 0
        %3426 = vperm.xlu0 %3425, %v340
        %v3427 = vpop.permute.xlu0 %3426
        %3430 = vset.pattern.permute.xlu0 0
        %3431 = vperm.xlu0 %3430, %v341
        %v3432 = vpop.permute.xlu0 %3431
        %3435 = vset.pattern.permute.xlu0 0
        %3436 = vperm.xlu0 %3435, %v342
        %v3437 = vpop.permute.xlu0 %3436
        %3440 = vset.pattern.permute.xlu0 0
        %3441 = vperm.xlu0 %3440, %v343
        %v3442 = vpop.permute.xlu0 %3441
        %3445 = vset.pattern.permute.xlu0 0
        %3446 = vperm.xlu0 %3445, %v344
        %v3447 = vpop.permute.xlu0 %3446
        %3450 = vset.pattern.permute.xlu0 0
        %3451 = vperm.xlu0 %3450, %v345
        %v3452 = vpop.permute.xlu0 %3451
        %3455 = vset.pattern.permute.xlu0 0
        %3456 = vperm.xlu0 %3455, %v346
        %v3457 = vpop.permute.xlu0 %3456
        %v3459 = vmul.f32 %v3195, %v3342
        %v3460 = vmul.f32 %v3196, %v3347
        %v3461 = vmul.f32 %v3197, %v3352
        %v3462 = vmul.f32 %v3198, %v3357
        %v3463 = vmul.f32 %v3199, %v3362
        %v3464 = vmul.f32 %v3200, %v3367
        %v3465 = vmul.f32 %v3201, %v3372
        %v3466 = vmul.f32 %v3202, %v3377
        %v3467 = vmul.f32 %v3203, %v3382
        %v3468 = vmul.f32 %v3204, %v3387
        %v3469 = vmul.f32 %v3205, %v3392
        %v3470 = vmul.f32 %v3206, %v3397
        %v3471 = vmul.f32 %v3207, %v3402
        %v3472 = vmul.f32 %v3208, %v3407
        %v3473 = vmul.f32 %v3209, %v3412
        %v3474 = vmul.f32 %v3210, %v3417
        %v3475 = vmul.f32 %v3211, %v3422
        %v3476 = vmul.f32 %v3212, %v3427
        %v3477 = vmul.f32 %v3213, %v3432
        %v3478 = vmul.f32 %v3214, %v3437
        %v3479 = vmul.f32 %v3215, %v3442
        %v3480 = vmul.f32 %v3216, %v3447
        %v3481 = vmul.f32 %v3217, %v3452
        %v3482 = vmul.f32 %v3218, %v3457
        %v3483 = vadd.f32 %v3459, %v3460
        %v3484 = vadd.f32 %v3483, %v3461
        %v3485 = vadd.f32 %v3484, %v3462
        %v3486 = vadd.f32 %v3485, %v3463
        %v3487 = vadd.f32 %v3486, %v3464
        %v3488 = vadd.f32 %v3487, %v3465
        %v3489 = vadd.f32 %v3488, %v3466
        %v3490 = vadd.f32 %v3489, %v3467
        %v3491 = vadd.f32 %v3490, %v3468
        %v3492 = vadd.f32 %v3491, %v3469
        %v3493 = vadd.f32 %v3492, %v3470
        %v3494 = vadd.f32 %v3493, %v3471
        %v3495 = vadd.f32 %v3494, %v3472
        %v3496 = vadd.f32 %v3495, %v3473
        %v3497 = vadd.f32 %v3496, %v3474
        %v3498 = vadd.f32 %v3497, %v3475
        %v3499 = vadd.f32 %v3498, %v3476
        %v3500 = vadd.f32 %v3499, %v3477
        %v3501 = vadd.f32 %v3500, %v3478
        %v3502 = vadd.f32 %v3501, %v3479
        %v3503 = vadd.f32 %v3502, %v3480
        %v3504 = vadd.f32 %v3503, %v3481
        %v3505 = vadd.f32 %v3504, %v3482
        %v3506 = vrot.slane %v3505, 4
        %v3507 = vadd.f32 %v3505, %v3506
        %v3508 = vrot.slane %v3507, 2
        %v3509 = vadd.f32 %v3507, %v3508
        %v3510 = vrot.slane %v3509, 1
        %v3511 = vadd.f32 %v3509, %v3510
        %v3512 = vadd.f32 %v3511, 0.0
        %v3513 = vmul.f32 %v3195, %v3459
        %v3514 = vmul.f32 %v3196, %v3460
        %v3515 = vmul.f32 %v3197, %v3461
        %v3516 = vmul.f32 %v3198, %v3462
        %v3517 = vmul.f32 %v3199, %v3463
        %v3518 = vmul.f32 %v3200, %v3464
        %v3519 = vmul.f32 %v3201, %v3465
        %v3520 = vmul.f32 %v3202, %v3466
        %v3521 = vmul.f32 %v3203, %v3467
        %v3522 = vmul.f32 %v3204, %v3468
        %v3523 = vmul.f32 %v3205, %v3469
        %v3524 = vmul.f32 %v3206, %v3470
        %v3525 = vmul.f32 %v3207, %v3471
        %v3526 = vmul.f32 %v3208, %v3472
        %v3527 = vmul.f32 %v3209, %v3473
        %v3528 = vmul.f32 %v3210, %v3474
        %v3529 = vmul.f32 %v3211, %v3475
        %v3530 = vmul.f32 %v3212, %v3476
        %v3531 = vmul.f32 %v3213, %v3477
        %v3532 = vmul.f32 %v3214, %v3478
        %v3533 = vmul.f32 %v3215, %v3479
        %v3534 = vmul.f32 %v3216, %v3480
        %v3535 = vmul.f32 %v3217, %v3481
        %v3536 = vmul.f32 %v3218, %v3482
        %v3537 = vadd.f32 %v3513, %v3514
        %v3538 = vadd.f32 %v3537, %v3515
        %v3539 = vadd.f32 %v3538, %v3516
        %v3540 = vadd.f32 %v3539, %v3517
        %v3541 = vadd.f32 %v3540, %v3518
        %v3542 = vadd.f32 %v3541, %v3519
        %v3543 = vadd.f32 %v3542, %v3520
        %v3544 = vadd.f32 %v3543, %v3521
        %v3545 = vadd.f32 %v3544, %v3522
        %v3546 = vadd.f32 %v3545, %v3523
        %v3547 = vadd.f32 %v3546, %v3524
        %v3548 = vadd.f32 %v3547, %v3525
        %v3549 = vadd.f32 %v3548, %v3526
        %v3550 = vadd.f32 %v3549, %v3527
        %v3551 = vadd.f32 %v3550, %v3528
        %v3552 = vadd.f32 %v3551, %v3529
        %v3553 = vadd.f32 %v3552, %v3530
        %v3554 = vadd.f32 %v3553, %v3531
        %v3555 = vadd.f32 %v3554, %v3532
        %v3556 = vadd.f32 %v3555, %v3533
        %v3557 = vadd.f32 %v3556, %v3534
        %v3558 = vadd.f32 %v3557, %v3535
        %v3559 = vadd.f32 %v3558, %v3536
        %v3560 = vrot.slane %v3559, 4
        %v3561 = vadd.f32 %v3559, %v3560
        %v3562 = vrot.slane %v3561, 2
        %v3563 = vadd.f32 %v3561, %v3562
        %v3564 = vrot.slane %v3563, 1
        %v3565 = vadd.f32 %v3563, %v3564
        %v3566 = vadd.f32 %v3565, 0.0
        %v3567 = vld [vmem:[%s242] sm:$0x1]
        %v3568 = vadd.f32 %v3567, %v3512
        %3569 = vst [vmem:[%s242] sm:$0x1] %v3568
        %v3570 = vld [vmem:[%s248] sm:$0x1]
        %v3571 = vadd.f32 %v3570, %v3566
        %3572 = vst [vmem:[%s248] sm:$0x1] %v3571
        %s3573 = sand.u32 %s110, 1
        %s3574 = scalar_lea.sflag [#allocation6], %s3573
        %s3575 = sand.u32 %s110, 1
        %s3576 = smul.addr %s3575, 96
        %s3577 = scalar_lea.vmem [#allocation7], %s3576
        %s3578 = sand.u32 %s25, 1
        %s3579 = scalar_lea.sflag [#allocation9], %s3578
        %s3580 = sand.u32 %s136, 1
        %s3581 = scalar_lea.vmem [#allocation8], %s3580
        %s3582 = sand.u32 %s25, 1
        %s3583 = scalar_lea.sflag [#allocation9], %s3582
        %s3584 = sand.u32 %s162, 1
        %s3585 = scalar_lea.vmem [#allocation10], %s3584
        // Predicated region
        $region57: #{tpu_custom_call.1} parent=31 // pred_check
          %p3586 = pneg %p120
        $region58: #{tpu_custom_call.1} parent=31 // pred_check_branch
          %3588 = sbr.rel (%p3586) target = $region60
        $region59: #{tpu_custom_call.1} parent=31 // pred_region
          %s3589 = smul.u32 24, %s30
          %s3591 = ssub.s32 1536, 1536
          %3592 = vsyncadd %s3574, %s3591
          %s3593 = smul.addr %s29, 48
          %s3594 = sadd.s32 %s3589, %s3593
          %s3595 = smul.addr %s3594, 64
          %s3596 = scalar_lea.hbm %s4, %s3595
          %s3597 = sshll.u32 %s3577, 4
          %s3598 = int_to_ptr.vmem [resolvable:$true] %s3597
          %3603 = dma.vmem_to_hbm [thread:$0]  %s3598, 1536, %s3596, %s3574, 64, 64, 4
        $region60: #{tpu_custom_call.1} parent=31 // pred_fallthru
          _
        // Predicated region
        $region61: #{tpu_custom_call.1} parent=31 // pred_check
          %p3604 = pneg %p146
        $region62: #{tpu_custom_call.1} parent=31 // pred_check_branch
          %3606 = sbr.rel (%p3604) target = $region64
        $region63: #{tpu_custom_call.1} parent=31 // pred_region
          %s3608 = ssub.s32 16, 16
          %3609 = vsyncadd %s3579, %s3608
          %s3610 = smul.addr %s29, 16
          %s3611 = scalar_lea.hbm %s5, %s3610
          %s3613 = sshll.u32 %s3581, 4
          %s3614 = int_to_ptr.vmem [resolvable:$true] %s3613
          %3616 = dma.vmem_to_hbm [thread:$0]  %s3614, 16, %s3611, %s3579
        $region64: #{tpu_custom_call.1} parent=31 // pred_fallthru
          _
        // Predicated region
        $region65: #{tpu_custom_call.1} parent=31 // pred_check
          %p3617 = pneg %p172
        $region66: #{tpu_custom_call.1} parent=31 // pred_check_branch
          %3619 = sbr.rel (%p3617) target = $region68
        $region67: #{tpu_custom_call.1} parent=31 // pred_region
          %s3621 = ssub.s32 16, 16
          %3622 = vsyncadd %s3583, %s3621
          %s3623 = smul.addr %s29, 16
          %s3624 = scalar_lea.hbm %s6, %s3623
          %s3626 = sshll.u32 %s3585, 4
          %s3627 = int_to_ptr.vmem [resolvable:$true] %s3626
          %3629 = dma.vmem_to_hbm [thread:$0]  %s3627, 16, %s3624, %s3583
        $region68: #{tpu_custom_call.1} parent=31 // pred_fallthru
          _
      $region32: #{tpu_custom_call.1} parent=5 // pred_fallthru
        _
      %p3630 = scmp.le.s32.totalorder 2, %s20
      // Predicated region
      $region69: #{tpu_custom_call.1} parent=5 // pred_check
        %p3631 = pneg %p3630
      $region70: #{tpu_custom_call.1} parent=5 // pred_check_branch
        %3633 = sbr.rel (%p3631) target = $region72
      $region71: #{tpu_custom_call.1} parent=5 // pred_region
        %s3634 = ssub.s32 %s20, 2
        // Predicated region
        $region73: #{tpu_custom_call.1} parent=71 // pred_check
          %p3635 = pneg %p126
        $region74: #{tpu_custom_call.1} parent=71 // pred_check_branch
          %3637 = sbr.rel (%p3635) target = $region76
        $region75: #{tpu_custom_call.1} parent=71 // pred_region
          %s3638 = sand.u32 %s111, 1
          %s3639 = scalar_lea.sflag [#allocation6], %s3638
          %s3640 = sand.u32 %s111, 1
          %s3641 = smul.addr %s3640, 96
          %s3642 = scalar_lea.vmem [#allocation7], %s3641
          %3643 = dma.done %s3639, 1536
        $region76: #{tpu_custom_call.1} parent=71 // pred_fallthru
          _
        // Predicated region
        $region77: #{tpu_custom_call.1} parent=71 // pred_check
          %p3644 = pneg %p152
        $region78: #{tpu_custom_call.1} parent=71 // pred_check_branch
          %3646 = sbr.rel (%p3644) target = $region80
        $region79: #{tpu_custom_call.1} parent=71 // pred_region
          %s3647 = sand.u32 %s26, 1
          %s3648 = scalar_lea.sflag [#allocation9], %s3647
          %s3649 = sand.u32 %s137, 1
          %s3650 = scalar_lea.vmem [#allocation8], %s3649
          %3651 = dma.done %s3648, 16
        $region80: #{tpu_custom_call.1} parent=71 // pred_fallthru
          _
        // Predicated region
        $region81: #{tpu_custom_call.1} parent=71 // pred_check
          %p3652 = pneg %p178
        $region82: #{tpu_custom_call.1} parent=71 // pred_check_branch
          %3654 = sbr.rel (%p3652) target = $region84
        $region83: #{tpu_custom_call.1} parent=71 // pred_region
          %s3655 = sand.u32 %s26, 1
          %s3656 = scalar_lea.sflag [#allocation9], %s3655
          %s3657 = sand.u32 %s163, 1
          %s3658 = scalar_lea.vmem [#allocation10], %s3657
          %3659 = dma.done %s3656, 16
        $region84: #{tpu_custom_call.1} parent=71 // pred_fallthru
          _
      $region72: #{tpu_custom_call.1} parent=5 // pred_fallthru
        _
    $region6: #{tpu_custom_call.1} parent=1 // loop_footer
      %s24 = sadd.s32 1, %s20
    $region7: #{tpu_custom_call.1} parent=1 // loop_footer_branch
      %19 = sbr.rel target = $region3
    $region8: #{tpu_custom_call.1} parent=1 // loop_exit
      _
    %3660 = vsyncpa [#allocation5], 1
    %s3661 = scalar_lea.sflag [#allocation5], 1
    %3662 = vsyncpa %s3661, 1
    %3663 = vsyncpa [#allocation6], 1
    %s3664 = scalar_lea.sflag [#allocation6], 1
    %3665 = vsyncpa %s3664, 1
    %3666 = vsyncpa [#allocation9], 1
    %s3667 = scalar_lea.sflag [#allocation9], 1
    %3668 = vsyncpa %s3667, 1
  %3669 = vsyncmov [#allocation3]
  %s3670 = vpop.sfrf %3669
  %p3671 = scmp.eq.s32.totalorder %s3670, 0
  %p3672 = pneg %p3671
  %3674 = shalt.err (%p3672)
  %s3675 = scalar_lea.sflag [#allocation3], 1
  %3676 = vsyncmov %s3675
  %s3677 = vpop.sfrf %3676
  %p3678 = scmp.eq.s32.totalorder %s3677, 0
  %p3679 = pneg %p3678
  %3681 = shalt.err (%p3679)

</llo_original>
